<compile_context>
chip_gen: v5e
topology: v5e:2x2
jax: 0.10.0
libtpu: 0.0.40
codegen_flags: <defaults>
</compile_context>

<pallas_src>
import functools

import jax
import jax.numpy as jnp
import numpy as np
from jax.experimental import pallas as pl
from jax.experimental.pallas import tpu as pltpu


def _fused_kernel(x_ref, w_ref, b_ref, o_ref, buf_ref, *, H, W, C, N, PADL):
    """Three fused 3x3 'same' convolutions, batch folded into the lane axis.

    x_ref  : (C, L)         input, channels on sublanes, L = N*H*W flat spatial/batch on lanes
    w_ref  : (3, 9, C, C)   per-stage, per-tap (ky*3+kx) weight matrices W_t[co, ci]
    b_ref  : (3, C, 1)      per-stage bias (epilogue constants already folded in)
    o_ref  : (C, L)         output
    buf_ref: (C, L + 2*PADL) zero-padded line buffer used to realize halo shifts
    """
    HW = H * W
    L = N * HW

    # Zero the padded line buffer once; per-stage stores only overwrite the
    # center [PADL, PADL + L), so the halo columns stay zero for every stage.
    buf_ref[...] = jnp.zeros(buf_ref.shape, dtype=buf_ref.dtype)

    # Per-image flat position / column index along the lane axis.
    pos = jax.lax.broadcasted_iota(jnp.int32, (C, L), 1) % HW
    col = pos % W
    up_ok = pos >= W                  # y-1 >= 0    (oy == -1)
    down_ok = pos < (H - 1) * W       # y+1 <= H-1  (oy == +1)
    left_ok = col > 0                 # x-1 >= 0    (ox == -1)
    right_ok = col < (W - 1)          # x+1 <= W-1  (ox == +1)

    # (lane shift, validity mask) per 3x3 tap, in (ky, kx) raster order — must
    # stay in lockstep with the host-side (kh, kw, Cout, Cin) weight reshape.
    taps = []
    for oy in (-1, 0, 1):
        for ox in (-1, 0, 1):
            m = None
            if oy == -1:
                m = up_ok
            elif oy == 1:
                m = down_ok
            if ox == -1:
                m = left_ok if m is None else jnp.logical_and(m, left_ok)
            elif ox == 1:
                m = right_ok if m is None else jnp.logical_and(m, right_ok)
            taps.append((oy * W + ox, m))

    def conv_stage(img, stage):
        # Lane-aligned center store (offset 128, length multiple of 128).
        buf_ref[:, PADL:PADL + L] = img
        acc = jnp.zeros((C, L), jnp.float32)
        for t, (s, m) in enumerate(taps):
            # Static in-bounds window read realizes the (oy, ox) halo shift;
            # out-of-image positions read the zero halo or are masked below.
            win = buf_ref[:, PADL + s:PADL + s + L]
            if m is not None:
                win = jnp.where(m, win, 0.0)
            acc = acc + jax.lax.dot_general(
                w_ref[stage, t], win,
                dimension_numbers=(((1,), (0,)), ((), ())),
                preferred_element_type=jnp.float32)
        return acc + b_ref[stage]     # (C, 1) bias broadcasts over lanes

    x = x_ref[...].astype(jnp.float32)
    v1 = conv_stage(x, 0)
    v4 = jnp.maximum(conv_stage(v1, 1), 0.0)   # "- 5" folded into bias of stage 2
    v7 = jnp.maximum(conv_stage(v4, 2), 0.0)   # "- 4" folded into bias of stage 3
    o_ref[...] = v7.astype(o_ref.dtype)


@jax.jit
def model_forward(x_nchw, w1, b1, w2, b2, w3, b3):
    N, C, H, W = x_nchw.shape
    HW = H * W
    L = N * HW
    # Lane-aligned halo pad; must cover the largest shift |s| = W + 1.
    PADL = ((W + 1 + 127) // 128) * 128

    def prep_w(w_oihw):
        # (Cout, Cin, kh, kw) -> (kh, kw, Cout, Cin) -> (9, Cout, Cin)
        return jnp.transpose(w_oihw, (2, 3, 0, 1)).reshape(9, C, C)

    w_stack = jnp.stack([prep_w(w1), prep_w(w2), prep_w(w3)])          # (3, 9, C, C)
    b_stack = jnp.stack([b1, b2 - 5.0, b3 - 4.0]).reshape(3, C, 1)     # fold -5 / -4

    # Channels on sublanes, flattened (batch, y, x) on lanes.
    x_flat = jnp.transpose(x_nchw, (1, 0, 2, 3)).reshape(C, L)

    kernel = functools.partial(_fused_kernel, H=H, W=W, C=C, N=N, PADL=PADL)
    out_flat = pl.pallas_call(
        kernel,
        out_shape=jax.ShapeDtypeStruct((C, L), x_nchw.dtype),
        scratch_shapes=[pltpu.VMEM((C, L + 2 * PADL), jnp.float32)],
    )(x_flat, w_stack, b_stack)

    return jnp.transpose(out_flat.reshape(C, N, H, W), (1, 0, 2, 3))


def init_tinymodel_params(key, c):
    """Deterministic PyTorch-like Conv2d(c, c, 3) init; returns (OIHW weight, bias)."""
    kw, kb = jax.random.split(key)
    fan_in = c * 3 * 3
    bound = 1.0 / np.sqrt(fan_in)
    w = jax.random.uniform(kw, (c, c, 3, 3), jnp.float32, -bound, bound)  # OIHW
    b = jax.random.uniform(kb, (c,), jnp.float32, -bound, bound)
    return w, b


def _reference(x_nchw, w1, b1, w2, b2, w3, b3):
    """Pure-JAX reference (lax conv, NCHW/OIHW) for the correctness check."""
    def conv(x, w, b):
        y = jax.lax.conv_general_dilated(
            x, w, window_strides=(1, 1), padding="SAME",
            dimension_numbers=("NCHW", "OIHW", "NCHW"),
            precision=jax.lax.Precision.HIGHEST)
        return y + b[None, :, None, None]

    v1 = conv(x_nchw, w1, b1)
    v4 = jnp.maximum(conv(v1, w2, b2) - 5.0, 0.0)
    v7 = jnp.maximum(conv(v4, w3, b3) - 4.0, 0.0)
    return v7


if __name__ == "__main__":
    N, C, H, W = 2, 4, 16, 16
    root = jax.random.PRNGKey(0)
    kx, k1, k2, k3 = jax.random.split(root, 4)

    x = jax.random.normal(kx, (N, C, H, W), dtype=jnp.float32)
    w1, b1 = init_tinymodel_params(k1, C)
    w2, b2 = init_tinymodel_params(k2, C)
    w3, b3 = init_tinymodel_params(k3, C)

    out = model_forward(x, w1, b1, w2, b2, w3, b3)
    jax.block_until_ready(out)

    ref = _reference(x, w1, b1, w2, b2, w3, b3)
    np.testing.assert_allclose(np.asarray(out), np.asarray(ref),
                               rtol=1e-4, atol=1e-4)

    print("KERNEL_OK")
</pallas_src>

<mosaic_0001>
module attributes {stable_mosaic.version = 11 : i64} {
  func.func @_fused_kernel(%arg0: memref<4x512xf32, #tpu.memory_space<vmem>>, %arg1: memref<3x9x4x4xf32, #tpu.memory_space<vmem>>, %arg2: memref<3x4x1xf32, #tpu.memory_space<vmem>>, %arg3: memref<4x512xf32, #tpu.memory_space<vmem>>, %arg4: memref<4x768xf32, #tpu.memory_space<vmem>>) attributes {dimension_semantics = [], scalar_prefetch = 0 : i64, scratch_operands = 1 : i64, tpu.core_type = #tpu.core_type<tc>} {
    %cst = arith.constant 0.000000e+00 : f32
    %0 = vector.broadcast %cst : f32 to vector<4x768xf32>
    %c0 = arith.constant 0 : index
    %c0_0 = arith.constant 0 : index
    %1 = vector.load %arg4[%c0, %c0_0] : memref<4x768xf32, #tpu.memory_space<vmem>>, vector<4x768xf32>
    tpu.vector_store %arg4[%c0, %c0_0], %0 {strides = array<i32>} : memref<4x768xf32, #tpu.memory_space<vmem>>, vector<4x768xf32>,
    %2 = tpu.iota {dimensions = array<i32: 1>} : vector<4x512xi32>
    %c256_i32 = arith.constant 256 : i32
    %c0_i32 = arith.constant 0 : i32
    %3 = arith.cmpi eq, %c256_i32, %c0_i32 : i32
    %c1_i32 = arith.constant 1 : i32
    %4 = arith.select %3, %c1_i32, %c256_i32 : i32
    %5 = vector.broadcast %4 : i32 to vector<4x512xi32>
    %6 = arith.remsi %2, %5 : vector<4x512xi32>
    %c0_i32_1 = arith.constant 0 : i32
    %7 = vector.broadcast %c0_i32_1 : i32 to vector<4x512xi32>
    %8 = arith.cmpi ne, %6, %7 : vector<4x512xi32>
    %c0_i32_2 = arith.constant 0 : i32
    %9 = vector.broadcast %c0_i32_2 : i32 to vector<4x512xi32>
    %10 = arith.cmpi slt, %6, %9 : vector<4x512xi32>
    %c0_i32_3 = arith.constant 0 : i32
    %11 = arith.cmpi slt, %4, %c0_i32_3 : i32
    %12 = vector.broadcast %11 : i1 to vector<4x512xi1>
    %13 = vector.broadcast %12 : vector<4x512xi1> to vector<4x512xi1>
    %14 = arith.xori %10, %13 : vector<4x512xi1>
    %15 = arith.andi %14, %8 : vector<4x512xi1>
    %16 = vector.broadcast %4 : i32 to vector<4x512xi32>
    %17 = arith.addi %6, %16 : vector<4x512xi32>
    %18 = arith.select %15, %17, %6 : vector<4x512xi1>, vector<4x512xi32>
    %c16_i32 = arith.constant 16 : i32
    %c0_i32_4 = arith.constant 0 : i32
    %19 = arith.cmpi eq, %c16_i32, %c0_i32_4 : i32
    %c1_i32_5 = arith.constant 1 : i32
    %20 = arith.select %19, %c1_i32_5, %c16_i32 : i32
    %21 = vector.broadcast %20 : i32 to vector<4x512xi32>
    %22 = arith.remsi %18, %21 : vector<4x512xi32>
    %c0_i32_6 = arith.constant 0 : i32
    %23 = vector.broadcast %c0_i32_6 : i32 to vector<4x512xi32>
    %24 = arith.cmpi ne, %22, %23 : vector<4x512xi32>
    %c0_i32_7 = arith.constant 0 : i32
    %25 = vector.broadcast %c0_i32_7 : i32 to vector<4x512xi32>
    %26 = arith.cmpi slt, %22, %25 : vector<4x512xi32>
    %c0_i32_8 = arith.constant 0 : i32
    %27 = arith.cmpi slt, %20, %c0_i32_8 : i32
    %28 = vector.broadcast %27 : i1 to vector<4x512xi1>
    %29 = vector.broadcast %28 : vector<4x512xi1> to vector<4x512xi1>
    %30 = arith.xori %26, %29 : vector<4x512xi1>
    %31 = arith.andi %30, %24 : vector<4x512xi1>
    %32 = vector.broadcast %20 : i32 to vector<4x512xi32>
    %33 = arith.addi %22, %32 : vector<4x512xi32>
    %34 = arith.select %31, %33, %22 : vector<4x512xi1>, vector<4x512xi32>
    %c16_i32_9 = arith.constant 16 : i32
    %35 = vector.broadcast %c16_i32_9 : i32 to vector<4x512xi32>
    %36 = arith.cmpi sge, %18, %35 : vector<4x512xi32>
    %c240_i32 = arith.constant 240 : i32
    %37 = vector.broadcast %c240_i32 : i32 to vector<4x512xi32>
    %38 = arith.cmpi slt, %18, %37 : vector<4x512xi32>
    %c0_i32_10 = arith.constant 0 : i32
    %39 = vector.broadcast %c0_i32_10 : i32 to vector<4x512xi32>
    %40 = arith.cmpi sgt, %34, %39 : vector<4x512xi32>
    %c15_i32 = arith.constant 15 : i32
    %41 = vector.broadcast %c15_i32 : i32 to vector<4x512xi32>
    %42 = arith.cmpi slt, %34, %41 : vector<4x512xi32>
    %43 = arith.andi %36, %40 : vector<4x512xi1>
    %44 = arith.andi %36, %42 : vector<4x512xi1>
    %45 = arith.andi %38, %40 : vector<4x512xi1>
    %46 = arith.andi %38, %42 : vector<4x512xi1>
    %c0_11 = arith.constant 0 : index
    %c0_12 = arith.constant 0 : index
    %47 = vector.load %arg0[%c0_11, %c0_12] : memref<4x512xf32, #tpu.memory_space<vmem>>, vector<4x512xf32>
    %c0_13 = arith.constant 0 : index
    %c128 = arith.constant 128 : index
    %48 = vector.load %arg4[%c0_13, %c128] : memref<4x768xf32, #tpu.memory_space<vmem>>, vector<4x512xf32>
    tpu.vector_store %arg4[%c0_13, %c128], %47 {strides = array<i32>} : memref<4x768xf32, #tpu.memory_space<vmem>>, vector<4x512xf32>,
    %cst_14 = arith.constant 0.000000e+00 : f32
    %49 = vector.broadcast %cst_14 : f32 to vector<4x512xf32>
    %c0_15 = arith.constant 0 : index
    %c111 = arith.constant 111 : index
    %50 = vector.load %arg4[%c0_15, %c111] : memref<4x768xf32, #tpu.memory_space<vmem>>, vector<4x512xf32>
    %cst_16 = arith.constant 0.000000e+00 : f32
    %51 = vector.broadcast %cst_16 : f32 to vector<4x512xf32>
    %52 = arith.select %43, %50, %51 : vector<4x512xi1>, vector<4x512xf32>
    %c0_17 = arith.constant 0 : index
    %c0_18 = arith.constant 0 : index
    %c0_19 = arith.constant 0 : index
    %c0_20 = arith.constant 0 : index
    %53 = vector.load %arg1[%c0_17, %c0_18, %c0_19, %c0_20] : memref<3x9x4x4xf32, #tpu.memory_space<vmem>>, vector<1x1x4x4xf32>
    %54 = vector.shape_cast %53 : vector<1x1x4x4xf32> to vector<4x4xf32>
    %cst_21 = arith.constant dense<0.000000e+00> : vector<4x512xf32>
    %55 = tpu.matmul %54, %52, %cst_21 {dimension_numbers = #tpu.dot_dimension_numbers<[1], [0], [0], [1], [0, 0, 1, 1], [], []>} : vector<4x4xf32>, vector<4x512xf32>, vector<4x512xf32> -> vector<4x512xf32>
    %56 = arith.addf %49, %55 : vector<4x512xf32>
    %c0_22 = arith.constant 0 : index
    %c112 = arith.constant 112 : index
    %57 = vector.load %arg4[%c0_22, %c112] : memref<4x768xf32, #tpu.memory_space<vmem>>, vector<4x512xf32>
    %cst_23 = arith.constant 0.000000e+00 : f32
    %58 = vector.broadcast %cst_23 : f32 to vector<4x512xf32>
    %59 = arith.select %36, %57, %58 : vector<4x512xi1>, vector<4x512xf32>
    %c0_24 = arith.constant 0 : index
    %c1 = arith.constant 1 : index
    %c0_25 = arith.constant 0 : index
    %c0_26 = arith.constant 0 : index
    %60 = vector.load %arg1[%c0_24, %c1, %c0_25, %c0_26] : memref<3x9x4x4xf32, #tpu.memory_space<vmem>>, vector<1x1x4x4xf32>
    %61 = vector.shape_cast %60 : vector<1x1x4x4xf32> to vector<4x4xf32>
    %cst_27 = arith.constant dense<0.000000e+00> : vector<4x512xf32>
    %62 = tpu.matmul %61, %59, %cst_27 {dimension_numbers = #tpu.dot_dimension_numbers<[1], [0], [0], [1], [0, 0, 1, 1], [], []>} : vector<4x4xf32>, vector<4x512xf32>, vector<4x512xf32> -> vector<4x512xf32>
    %63 = arith.addf %56, %62 : vector<4x512xf32>
    %c0_28 = arith.constant 0 : index
    %c113 = arith.constant 113 : index
    %64 = vector.load %arg4[%c0_28, %c113] : memref<4x768xf32, #tpu.memory_space<vmem>>, vector<4x512xf32>
    %cst_29 = arith.constant 0.000000e+00 : f32
    %65 = vector.broadcast %cst_29 : f32 to vector<4x512xf32>
    %66 = arith.select %44, %64, %65 : vector<4x512xi1>, vector<4x512xf32>
    %c0_30 = arith.constant 0 : index
    %c2 = arith.constant 2 : index
    %c0_31 = arith.constant 0 : index
    %c0_32 = arith.constant 0 : index
    %67 = vector.load %arg1[%c0_30, %c2, %c0_31, %c0_32] : memref<3x9x4x4xf32, #tpu.memory_space<vmem>>, vector<1x1x4x4xf32>
    %68 = vector.shape_cast %67 : vector<1x1x4x4xf32> to vector<4x4xf32>
    %cst_33 = arith.constant dense<0.000000e+00> : vector<4x512xf32>
    %69 = tpu.matmul %68, %66, %cst_33 {dimension_numbers = #tpu.dot_dimension_numbers<[1], [0], [0], [1], [0, 0, 1, 1], [], []>} : vector<4x4xf32>, vector<4x512xf32>, vector<4x512xf32> -> vector<4x512xf32>
    %70 = arith.addf %63, %69 : vector<4x512xf32>
    %c0_34 = arith.constant 0 : index
    %c127 = arith.constant 127 : index
    %71 = vector.load %arg4[%c0_34, %c127] : memref<4x768xf32, #tpu.memory_space<vmem>>, vector<4x512xf32>
    %cst_35 = arith.constant 0.000000e+00 : f32
    %72 = vector.broadcast %cst_35 : f32 to vector<4x512xf32>
    %73 = arith.select %40, %71, %72 : vector<4x512xi1>, vector<4x512xf32>
    %c0_36 = arith.constant 0 : index
    %c3 = arith.constant 3 : index
    %c0_37 = arith.constant 0 : index
    %c0_38 = arith.constant 0 : index
    %74 = vector.load %arg1[%c0_36, %c3, %c0_37, %c0_38] : memref<3x9x4x4xf32, #tpu.memory_space<vmem>>, vector<1x1x4x4xf32>
    %75 = vector.shape_cast %74 : vector<1x1x4x4xf32> to vector<4x4xf32>
    %cst_39 = arith.constant dense<0.000000e+00> : vector<4x512xf32>
    %76 = tpu.matmul %75, %73, %cst_39 {dimension_numbers = #tpu.dot_dimension_numbers<[1], [0], [0], [1], [0, 0, 1, 1], [], []>} : vector<4x4xf32>, vector<4x512xf32>, vector<4x512xf32> -> vector<4x512xf32>
    %77 = arith.addf %70, %76 : vector<4x512xf32>
    %c0_40 = arith.constant 0 : index
    %c128_41 = arith.constant 128 : index
    %78 = vector.load %arg4[%c0_40, %c128_41] : memref<4x768xf32, #tpu.memory_space<vmem>>, vector<4x512xf32>
    %c0_42 = arith.constant 0 : index
    %c4 = arith.constant 4 : index
    %c0_43 = arith.constant 0 : index
    %c0_44 = arith.constant 0 : index
    %79 = vector.load %arg1[%c0_42, %c4, %c0_43, %c0_44] : memref<3x9x4x4xf32, #tpu.memory_space<vmem>>, vector<1x1x4x4xf32>
    %80 = vector.shape_cast %79 : vector<1x1x4x4xf32> to vector<4x4xf32>
    %cst_45 = arith.constant dense<0.000000e+00> : vector<4x512xf32>
    %81 = tpu.matmul %80, %78, %cst_45 {dimension_numbers = #tpu.dot_dimension_numbers<[1], [0], [0], [1], [0, 0, 1, 1], [], []>} : vector<4x4xf32>, vector<4x512xf32>, vector<4x512xf32> -> vector<4x512xf32>
    %82 = arith.addf %77, %81 : vector<4x512xf32>
    %c0_46 = arith.constant 0 : index
    %c129 = arith.constant 129 : index
    %83 = vector.load %arg4[%c0_46, %c129] : memref<4x768xf32, #tpu.memory_space<vmem>>, vector<4x512xf32>
    %cst_47 = arith.constant 0.000000e+00 : f32
    %84 = vector.broadcast %cst_47 : f32 to vector<4x512xf32>
    %85 = arith.select %42, %83, %84 : vector<4x512xi1>, vector<4x512xf32>
    %c0_48 = arith.constant 0 : index
    %c5 = arith.constant 5 : index
    %c0_49 = arith.constant 0 : index
    %c0_50 = arith.constant 0 : index
    %86 = vector.load %arg1[%c0_48, %c5, %c0_49, %c0_50] : memref<3x9x4x4xf32, #tpu.memory_space<vmem>>, vector<1x1x4x4xf32>
    %87 = vector.shape_cast %86 : vector<1x1x4x4xf32> to vector<4x4xf32>
    %cst_51 = arith.constant dense<0.000000e+00> : vector<4x512xf32>
    %88 = tpu.matmul %87, %85, %cst_51 {dimension_numbers = #tpu.dot_dimension_numbers<[1], [0], [0], [1], [0, 0, 1, 1], [], []>} : vector<4x4xf32>, vector<4x512xf32>, vector<4x512xf32> -> vector<4x512xf32>
    %89 = arith.addf %82, %88 : vector<4x512xf32>
    %c0_52 = arith.constant 0 : index
    %c143 = arith.constant 143 : index
    %90 = vector.load %arg4[%c0_52, %c143] : memref<4x768xf32, #tpu.memory_space<vmem>>, vector<4x512xf32>
    %cst_53 = arith.constant 0.000000e+00 : f32
    %91 = vector.broadcast %cst_53 : f32 to vector<4x512xf32>
    %92 = arith.select %45, %90, %91 : vector<4x512xi1>, vector<4x512xf32>
    %c0_54 = arith.constant 0 : index
    %c6 = arith.constant 6 : index
    %c0_55 = arith.constant 0 : index
    %c0_56 = arith.constant 0 : index
    %93 = vector.load %arg1[%c0_54, %c6, %c0_55, %c0_56] : memref<3x9x4x4xf32, #tpu.memory_space<vmem>>, vector<1x1x4x4xf32>
    %94 = vector.shape_cast %93 : vector<1x1x4x4xf32> to vector<4x4xf32>
    %cst_57 = arith.constant dense<0.000000e+00> : vector<4x512xf32>
    %95 = tpu.matmul %94, %92, %cst_57 {dimension_numbers = #tpu.dot_dimension_numbers<[1], [0], [0], [1], [0, 0, 1, 1], [], []>} : vector<4x4xf32>, vector<4x512xf32>, vector<4x512xf32> -> vector<4x512xf32>
    %96 = arith.addf %89, %95 : vector<4x512xf32>
    %c0_58 = arith.constant 0 : index
    %c144 = arith.constant 144 : index
    %97 = vector.load %arg4[%c0_58, %c144] : memref<4x768xf32, #tpu.memory_space<vmem>>, vector<4x512xf32>
    %cst_59 = arith.constant 0.000000e+00 : f32
    %98 = vector.broadcast %cst_59 : f32 to vector<4x512xf32>
    %99 = arith.select %38, %97, %98 : vector<4x512xi1>, vector<4x512xf32>
    %c0_60 = arith.constant 0 : index
    %c7 = arith.constant 7 : index
    %c0_61 = arith.constant 0 : index
    %c0_62 = arith.constant 0 : index
    %100 = vector.load %arg1[%c0_60, %c7, %c0_61, %c0_62] : memref<3x9x4x4xf32, #tpu.memory_space<vmem>>, vector<1x1x4x4xf32>
    %101 = vector.shape_cast %100 : vector<1x1x4x4xf32> to vector<4x4xf32>
    %cst_63 = arith.constant dense<0.000000e+00> : vector<4x512xf32>
    %102 = tpu.matmul %101, %99, %cst_63 {dimension_numbers = #tpu.dot_dimension_numbers<[1], [0], [0], [1], [0, 0, 1, 1], [], []>} : vector<4x4xf32>, vector<4x512xf32>, vector<4x512xf32> -> vector<4x512xf32>
    %103 = arith.addf %96, %102 : vector<4x512xf32>
    %c0_64 = arith.constant 0 : index
    %c145 = arith.constant 145 : index
    %104 = vector.load %arg4[%c0_64, %c145] : memref<4x768xf32, #tpu.memory_space<vmem>>, vector<4x512xf32>
    %cst_65 = arith.constant 0.000000e+00 : f32
    %105 = vector.broadcast %cst_65 : f32 to vector<4x512xf32>
    %106 = arith.select %46, %104, %105 : vector<4x512xi1>, vector<4x512xf32>
    %c0_66 = arith.constant 0 : index
    %c8 = arith.constant 8 : index
    %c0_67 = arith.constant 0 : index
    %c0_68 = arith.constant 0 : index
    %107 = vector.load %arg1[%c0_66, %c8, %c0_67, %c0_68] : memref<3x9x4x4xf32, #tpu.memory_space<vmem>>, vector<1x1x4x4xf32>
    %108 = vector.shape_cast %107 : vector<1x1x4x4xf32> to vector<4x4xf32>
    %cst_69 = arith.constant dense<0.000000e+00> : vector<4x512xf32>
    %109 = tpu.matmul %108, %106, %cst_69 {dimension_numbers = #tpu.dot_dimension_numbers<[1], [0], [0], [1], [0, 0, 1, 1], [], []>} : vector<4x4xf32>, vector<4x512xf32>, vector<4x512xf32> -> vector<4x512xf32>
    %110 = arith.addf %103, %109 : vector<4x512xf32>
    %c0_70 = arith.constant 0 : index
    %c0_71 = arith.constant 0 : index
    %c0_72 = arith.constant 0 : index
    %111 = vector.load %arg2[%c0_70, %c0_71, %c0_72] : memref<3x4x1xf32, #tpu.memory_space<vmem>>, vector<1x4x1xf32>
    %112 = vector.shape_cast %111 : vector<1x4x1xf32> to vector<4x1xf32>
    %113 = vector.broadcast %112 : vector<4x1xf32> to vector<4x512xf32>
    %114 = arith.addf %110, %113 : vector<4x512xf32>
    %c0_73 = arith.constant 0 : index
    %c128_74 = arith.constant 128 : index
    %115 = vector.load %arg4[%c0_73, %c128_74] : memref<4x768xf32, #tpu.memory_space<vmem>>, vector<4x512xf32>
    tpu.vector_store %arg4[%c0_73, %c128_74], %114 {strides = array<i32>} : memref<4x768xf32, #tpu.memory_space<vmem>>, vector<4x512xf32>,
    %cst_75 = arith.constant 0.000000e+00 : f32
    %116 = vector.broadcast %cst_75 : f32 to vector<4x512xf32>
    %c0_76 = arith.constant 0 : index
    %c111_77 = arith.constant 111 : index
    %117 = vector.load %arg4[%c0_76, %c111_77] : memref<4x768xf32, #tpu.memory_space<vmem>>, vector<4x512xf32>
    %cst_78 = arith.constant 0.000000e+00 : f32
    %118 = vector.broadcast %cst_78 : f32 to vector<4x512xf32>
    %119 = arith.select %43, %117, %118 : vector<4x512xi1>, vector<4x512xf32>
    %c1_79 = arith.constant 1 : index
    %c0_80 = arith.constant 0 : index
    %c0_81 = arith.constant 0 : index
    %c0_82 = arith.constant 0 : index
    %120 = vector.load %arg1[%c1_79, %c0_80, %c0_81, %c0_82] : memref<3x9x4x4xf32, #tpu.memory_space<vmem>>, vector<1x1x4x4xf32>
    %121 = vector.shape_cast %120 : vector<1x1x4x4xf32> to vector<4x4xf32>
    %cst_83 = arith.constant dense<0.000000e+00> : vector<4x512xf32>
    %122 = tpu.matmul %121, %119, %cst_83 {dimension_numbers = #tpu.dot_dimension_numbers<[1], [0], [0], [1], [0, 0, 1, 1], [], []>} : vector<4x4xf32>, vector<4x512xf32>, vector<4x512xf32> -> vector<4x512xf32>
    %123 = arith.addf %116, %122 : vector<4x512xf32>
    %c0_84 = arith.constant 0 : index
    %c112_85 = arith.constant 112 : index
    %124 = vector.load %arg4[%c0_84, %c112_85] : memref<4x768xf32, #tpu.memory_space<vmem>>, vector<4x512xf32>
    %cst_86 = arith.constant 0.000000e+00 : f32
    %125 = vector.broadcast %cst_86 : f32 to vector<4x512xf32>
    %126 = arith.select %36, %124, %125 : vector<4x512xi1>, vector<4x512xf32>
    %c1_87 = arith.constant 1 : index
    %c1_88 = arith.constant 1 : index
    %c0_89 = arith.constant 0 : index
    %c0_90 = arith.constant 0 : index
    %127 = vector.load %arg1[%c1_87, %c1_88, %c0_89, %c0_90] : memref<3x9x4x4xf32, #tpu.memory_space<vmem>>, vector<1x1x4x4xf32>
    %128 = vector.shape_cast %127 : vector<1x1x4x4xf32> to vector<4x4xf32>
    %cst_91 = arith.constant dense<0.000000e+00> : vector<4x512xf32>
    %129 = tpu.matmul %128, %126, %cst_91 {dimension_numbers = #tpu.dot_dimension_numbers<[1], [0], [0], [1], [0, 0, 1, 1], [], []>} : vector<4x4xf32>, vector<4x512xf32>, vector<4x512xf32> -> vector<4x512xf32>
    %130 = arith.addf %123, %129 : vector<4x512xf32>
    %c0_92 = arith.constant 0 : index
    %c113_93 = arith.constant 113 : index
    %131 = vector.load %arg4[%c0_92, %c113_93] : memref<4x768xf32, #tpu.memory_space<vmem>>, vector<4x512xf32>
    %cst_94 = arith.constant 0.000000e+00 : f32
    %132 = vector.broadcast %cst_94 : f32 to vector<4x512xf32>
    %133 = arith.select %44, %131, %132 : vector<4x512xi1>, vector<4x512xf32>
    %c1_95 = arith.constant 1 : index
    %c2_96 = arith.constant 2 : index
    %c0_97 = arith.constant 0 : index
    %c0_98 = arith.constant 0 : index
    %134 = vector.load %arg1[%c1_95, %c2_96, %c0_97, %c0_98] : memref<3x9x4x4xf32, #tpu.memory_space<vmem>>, vector<1x1x4x4xf32>
    %135 = vector.shape_cast %134 : vector<1x1x4x4xf32> to vector<4x4xf32>
    %cst_99 = arith.constant dense<0.000000e+00> : vector<4x512xf32>
    %136 = tpu.matmul %135, %133, %cst_99 {dimension_numbers = #tpu.dot_dimension_numbers<[1], [0], [0], [1], [0, 0, 1, 1], [], []>} : vector<4x4xf32>, vector<4x512xf32>, vector<4x512xf32> -> vector<4x512xf32>
    %137 = arith.addf %130, %136 : vector<4x512xf32>
    %c0_100 = arith.constant 0 : index
    %c127_101 = arith.constant 127 : index
    %138 = vector.load %arg4[%c0_100, %c127_101] : memref<4x768xf32, #tpu.memory_space<vmem>>, vector<4x512xf32>
    %cst_102 = arith.constant 0.000000e+00 : f32
    %139 = vector.broadcast %cst_102 : f32 to vector<4x512xf32>
    %140 = arith.select %40, %138, %139 : vector<4x512xi1>, vector<4x512xf32>
    %c1_103 = arith.constant 1 : index
    %c3_104 = arith.constant 3 : index
    %c0_105 = arith.constant 0 : index
    %c0_106 = arith.constant 0 : index
    %141 = vector.load %arg1[%c1_103, %c3_104, %c0_105, %c0_106] : memref<3x9x4x4xf32, #tpu.memory_space<vmem>>, vector<1x1x4x4xf32>
    %142 = vector.shape_cast %141 : vector<1x1x4x4xf32> to vector<4x4xf32>
    %cst_107 = arith.constant dense<0.000000e+00> : vector<4x512xf32>
    %143 = tpu.matmul %142, %140, %cst_107 {dimension_numbers = #tpu.dot_dimension_numbers<[1], [0], [0], [1], [0, 0, 1, 1], [], []>} : vector<4x4xf32>, vector<4x512xf32>, vector<4x512xf32> -> vector<4x512xf32>
    %144 = arith.addf %137, %143 : vector<4x512xf32>
    %c0_108 = arith.constant 0 : index
    %c128_109 = arith.constant 128 : index
    %145 = vector.load %arg4[%c0_108, %c128_109] : memref<4x768xf32, #tpu.memory_space<vmem>>, vector<4x512xf32>
    %c1_110 = arith.constant 1 : index
    %c4_111 = arith.constant 4 : index
    %c0_112 = arith.constant 0 : index
    %c0_113 = arith.constant 0 : index
    %146 = vector.load %arg1[%c1_110, %c4_111, %c0_112, %c0_113] : memref<3x9x4x4xf32, #tpu.memory_space<vmem>>, vector<1x1x4x4xf32>
    %147 = vector.shape_cast %146 : vector<1x1x4x4xf32> to vector<4x4xf32>
    %cst_114 = arith.constant dense<0.000000e+00> : vector<4x512xf32>
    %148 = tpu.matmul %147, %145, %cst_114 {dimension_numbers = #tpu.dot_dimension_numbers<[1], [0], [0], [1], [0, 0, 1, 1], [], []>} : vector<4x4xf32>, vector<4x512xf32>, vector<4x512xf32> -> vector<4x512xf32>
    %149 = arith.addf %144, %148 : vector<4x512xf32>
    %c0_115 = arith.constant 0 : index
    %c129_116 = arith.constant 129 : index
    %150 = vector.load %arg4[%c0_115, %c129_116] : memref<4x768xf32, #tpu.memory_space<vmem>>, vector<4x512xf32>
    %cst_117 = arith.constant 0.000000e+00 : f32
    %151 = vector.broadcast %cst_117 : f32 to vector<4x512xf32>
    %152 = arith.select %42, %150, %151 : vector<4x512xi1>, vector<4x512xf32>
    %c1_118 = arith.constant 1 : index
    %c5_119 = arith.constant 5 : index
    %c0_120 = arith.constant 0 : index
    %c0_121 = arith.constant 0 : index
    %153 = vector.load %arg1[%c1_118, %c5_119, %c0_120, %c0_121] : memref<3x9x4x4xf32, #tpu.memory_space<vmem>>, vector<1x1x4x4xf32>
    %154 = vector.shape_cast %153 : vector<1x1x4x4xf32> to vector<4x4xf32>
    %cst_122 = arith.constant dense<0.000000e+00> : vector<4x512xf32>
    %155 = tpu.matmul %154, %152, %cst_122 {dimension_numbers = #tpu.dot_dimension_numbers<[1], [0], [0], [1], [0, 0, 1, 1], [], []>} : vector<4x4xf32>, vector<4x512xf32>, vector<4x512xf32> -> vector<4x512xf32>
    %156 = arith.addf %149, %155 : vector<4x512xf32>
    %c0_123 = arith.constant 0 : index
    %c143_124 = arith.constant 143 : index
    %157 = vector.load %arg4[%c0_123, %c143_124] : memref<4x768xf32, #tpu.memory_space<vmem>>, vector<4x512xf32>
    %cst_125 = arith.constant 0.000000e+00 : f32
    %158 = vector.broadcast %cst_125 : f32 to vector<4x512xf32>
    %159 = arith.select %45, %157, %158 : vector<4x512xi1>, vector<4x512xf32>
    %c1_126 = arith.constant 1 : index
    %c6_127 = arith.constant 6 : index
    %c0_128 = arith.constant 0 : index
    %c0_129 = arith.constant 0 : index
    %160 = vector.load %arg1[%c1_126, %c6_127, %c0_128, %c0_129] : memref<3x9x4x4xf32, #tpu.memory_space<vmem>>, vector<1x1x4x4xf32>
    %161 = vector.shape_cast %160 : vector<1x1x4x4xf32> to vector<4x4xf32>
    %cst_130 = arith.constant dense<0.000000e+00> : vector<4x512xf32>
    %162 = tpu.matmul %161, %159, %cst_130 {dimension_numbers = #tpu.dot_dimension_numbers<[1], [0], [0], [1], [0, 0, 1, 1], [], []>} : vector<4x4xf32>, vector<4x512xf32>, vector<4x512xf32> -> vector<4x512xf32>
    %163 = arith.addf %156, %162 : vector<4x512xf32>
    %c0_131 = arith.constant 0 : index
    %c144_132 = arith.constant 144 : index
    %164 = vector.load %arg4[%c0_131, %c144_132] : memref<4x768xf32, #tpu.memory_space<vmem>>, vector<4x512xf32>
    %cst_133 = arith.constant 0.000000e+00 : f32
    %165 = vector.broadcast %cst_133 : f32 to vector<4x512xf32>
    %166 = arith.select %38, %164, %165 : vector<4x512xi1>, vector<4x512xf32>
    %c1_134 = arith.constant 1 : index
    %c7_135 = arith.constant 7 : index
    %c0_136 = arith.constant 0 : index
    %c0_137 = arith.constant 0 : index
    %167 = vector.load %arg1[%c1_134, %c7_135, %c0_136, %c0_137] : memref<3x9x4x4xf32, #tpu.memory_space<vmem>>, vector<1x1x4x4xf32>
    %168 = vector.shape_cast %167 : vector<1x1x4x4xf32> to vector<4x4xf32>
    %cst_138 = arith.constant dense<0.000000e+00> : vector<4x512xf32>
    %169 = tpu.matmul %168, %166, %cst_138 {dimension_numbers = #tpu.dot_dimension_numbers<[1], [0], [0], [1], [0, 0, 1, 1], [], []>} : vector<4x4xf32>, vector<4x512xf32>, vector<4x512xf32> -> vector<4x512xf32>
    %170 = arith.addf %163, %169 : vector<4x512xf32>
    %c0_139 = arith.constant 0 : index
    %c145_140 = arith.constant 145 : index
    %171 = vector.load %arg4[%c0_139, %c145_140] : memref<4x768xf32, #tpu.memory_space<vmem>>, vector<4x512xf32>
    %cst_141 = arith.constant 0.000000e+00 : f32
    %172 = vector.broadcast %cst_141 : f32 to vector<4x512xf32>
    %173 = arith.select %46, %171, %172 : vector<4x512xi1>, vector<4x512xf32>
    %c1_142 = arith.constant 1 : index
    %c8_143 = arith.constant 8 : index
    %c0_144 = arith.constant 0 : index
    %c0_145 = arith.constant 0 : index
    %174 = vector.load %arg1[%c1_142, %c8_143, %c0_144, %c0_145] : memref<3x9x4x4xf32, #tpu.memory_space<vmem>>, vector<1x1x4x4xf32>
    %175 = vector.shape_cast %174 : vector<1x1x4x4xf32> to vector<4x4xf32>
    %cst_146 = arith.constant dense<0.000000e+00> : vector<4x512xf32>
    %176 = tpu.matmul %175, %173, %cst_146 {dimension_numbers = #tpu.dot_dimension_numbers<[1], [0], [0], [1], [0, 0, 1, 1], [], []>} : vector<4x4xf32>, vector<4x512xf32>, vector<4x512xf32> -> vector<4x512xf32>
    %177 = arith.addf %170, %176 : vector<4x512xf32>
    %c1_147 = arith.constant 1 : index
    %c0_148 = arith.constant 0 : index
    %c0_149 = arith.constant 0 : index
    %178 = vector.load %arg2[%c1_147, %c0_148, %c0_149] : memref<3x4x1xf32, #tpu.memory_space<vmem>>, vector<1x4x1xf32>
    %179 = vector.shape_cast %178 : vector<1x4x1xf32> to vector<4x1xf32>
    %180 = vector.broadcast %179 : vector<4x1xf32> to vector<4x512xf32>
    %181 = arith.addf %177, %180 : vector<4x512xf32>
    %cst_150 = arith.constant 0.000000e+00 : f32
    %182 = vector.broadcast %cst_150 : f32 to vector<4x512xf32>
    %183 = arith.maximumf %181, %182 : vector<4x512xf32>
    %c0_151 = arith.constant 0 : index
    %c128_152 = arith.constant 128 : index
    %184 = vector.load %arg4[%c0_151, %c128_152] : memref<4x768xf32, #tpu.memory_space<vmem>>, vector<4x512xf32>
    tpu.vector_store %arg4[%c0_151, %c128_152], %183 {strides = array<i32>} : memref<4x768xf32, #tpu.memory_space<vmem>>, vector<4x512xf32>,
    %cst_153 = arith.constant 0.000000e+00 : f32
    %185 = vector.broadcast %cst_153 : f32 to vector<4x512xf32>
    %c0_154 = arith.constant 0 : index
    %c111_155 = arith.constant 111 : index
    %186 = vector.load %arg4[%c0_154, %c111_155] : memref<4x768xf32, #tpu.memory_space<vmem>>, vector<4x512xf32>
    %cst_156 = arith.constant 0.000000e+00 : f32
    %187 = vector.broadcast %cst_156 : f32 to vector<4x512xf32>
    %188 = arith.select %43, %186, %187 : vector<4x512xi1>, vector<4x512xf32>
    %c2_157 = arith.constant 2 : index
    %c0_158 = arith.constant 0 : index
    %c0_159 = arith.constant 0 : index
    %c0_160 = arith.constant 0 : index
    %189 = vector.load %arg1[%c2_157, %c0_158, %c0_159, %c0_160] : memref<3x9x4x4xf32, #tpu.memory_space<vmem>>, vector<1x1x4x4xf32>
    %190 = vector.shape_cast %189 : vector<1x1x4x4xf32> to vector<4x4xf32>
    %cst_161 = arith.constant dense<0.000000e+00> : vector<4x512xf32>
    %191 = tpu.matmul %190, %188, %cst_161 {dimension_numbers = #tpu.dot_dimension_numbers<[1], [0], [0], [1], [0, 0, 1, 1], [], []>} : vector<4x4xf32>, vector<4x512xf32>, vector<4x512xf32> -> vector<4x512xf32>
    %192 = arith.addf %185, %191 : vector<4x512xf32>
    %c0_162 = arith.constant 0 : index
    %c112_163 = arith.constant 112 : index
    %193 = vector.load %arg4[%c0_162, %c112_163] : memref<4x768xf32, #tpu.memory_space<vmem>>, vector<4x512xf32>
    %cst_164 = arith.constant 0.000000e+00 : f32
    %194 = vector.broadcast %cst_164 : f32 to vector<4x512xf32>
    %195 = arith.select %36, %193, %194 : vector<4x512xi1>, vector<4x512xf32>
    %c2_165 = arith.constant 2 : index
    %c1_166 = arith.constant 1 : index
    %c0_167 = arith.constant 0 : index
    %c0_168 = arith.constant 0 : index
    %196 = vector.load %arg1[%c2_165, %c1_166, %c0_167, %c0_168] : memref<3x9x4x4xf32, #tpu.memory_space<vmem>>, vector<1x1x4x4xf32>
    %197 = vector.shape_cast %196 : vector<1x1x4x4xf32> to vector<4x4xf32>
    %cst_169 = arith.constant dense<0.000000e+00> : vector<4x512xf32>
    %198 = tpu.matmul %197, %195, %cst_169 {dimension_numbers = #tpu.dot_dimension_numbers<[1], [0], [0], [1], [0, 0, 1, 1], [], []>} : vector<4x4xf32>, vector<4x512xf32>, vector<4x512xf32> -> vector<4x512xf32>
    %199 = arith.addf %192, %198 : vector<4x512xf32>
    %c0_170 = arith.constant 0 : index
    %c113_171 = arith.constant 113 : index
    %200 = vector.load %arg4[%c0_170, %c113_171] : memref<4x768xf32, #tpu.memory_space<vmem>>, vector<4x512xf32>
    %cst_172 = arith.constant 0.000000e+00 : f32
    %201 = vector.broadcast %cst_172 : f32 to vector<4x512xf32>
    %202 = arith.select %44, %200, %201 : vector<4x512xi1>, vector<4x512xf32>
    %c2_173 = arith.constant 2 : index
    %c2_174 = arith.constant 2 : index
    %c0_175 = arith.constant 0 : index
    %c0_176 = arith.constant 0 : index
    %203 = vector.load %arg1[%c2_173, %c2_174, %c0_175, %c0_176] : memref<3x9x4x4xf32, #tpu.memory_space<vmem>>, vector<1x1x4x4xf32>
    %204 = vector.shape_cast %203 : vector<1x1x4x4xf32> to vector<4x4xf32>
    %cst_177 = arith.constant dense<0.000000e+00> : vector<4x512xf32>
    %205 = tpu.matmul %204, %202, %cst_177 {dimension_numbers = #tpu.dot_dimension_numbers<[1], [0], [0], [1], [0, 0, 1, 1], [], []>} : vector<4x4xf32>, vector<4x512xf32>, vector<4x512xf32> -> vector<4x512xf32>
    %206 = arith.addf %199, %205 : vector<4x512xf32>
    %c0_178 = arith.constant 0 : index
    %c127_179 = arith.constant 127 : index
    %207 = vector.load %arg4[%c0_178, %c127_179] : memref<4x768xf32, #tpu.memory_space<vmem>>, vector<4x512xf32>
    %cst_180 = arith.constant 0.000000e+00 : f32
    %208 = vector.broadcast %cst_180 : f32 to vector<4x512xf32>
    %209 = arith.select %40, %207, %208 : vector<4x512xi1>, vector<4x512xf32>
    %c2_181 = arith.constant 2 : index
    %c3_182 = arith.constant 3 : index
    %c0_183 = arith.constant 0 : index
    %c0_184 = arith.constant 0 : index
    %210 = vector.load %arg1[%c2_181, %c3_182, %c0_183, %c0_184] : memref<3x9x4x4xf32, #tpu.memory_space<vmem>>, vector<1x1x4x4xf32>
    %211 = vector.shape_cast %210 : vector<1x1x4x4xf32> to vector<4x4xf32>
    %cst_185 = arith.constant dense<0.000000e+00> : vector<4x512xf32>
    %212 = tpu.matmul %211, %209, %cst_185 {dimension_numbers = #tpu.dot_dimension_numbers<[1], [0], [0], [1], [0, 0, 1, 1], [], []>} : vector<4x4xf32>, vector<4x512xf32>, vector<4x512xf32> -> vector<4x512xf32>
    %213 = arith.addf %206, %212 : vector<4x512xf32>
    %c0_186 = arith.constant 0 : index
    %c128_187 = arith.constant 128 : index
    %214 = vector.load %arg4[%c0_186, %c128_187] : memref<4x768xf32, #tpu.memory_space<vmem>>, vector<4x512xf32>
    %c2_188 = arith.constant 2 : index
    %c4_189 = arith.constant 4 : index
    %c0_190 = arith.constant 0 : index
    %c0_191 = arith.constant 0 : index
    %215 = vector.load %arg1[%c2_188, %c4_189, %c0_190, %c0_191] : memref<3x9x4x4xf32, #tpu.memory_space<vmem>>, vector<1x1x4x4xf32>
    %216 = vector.shape_cast %215 : vector<1x1x4x4xf32> to vector<4x4xf32>
    %cst_192 = arith.constant dense<0.000000e+00> : vector<4x512xf32>
    %217 = tpu.matmul %216, %214, %cst_192 {dimension_numbers = #tpu.dot_dimension_numbers<[1], [0], [0], [1], [0, 0, 1, 1], [], []>} : vector<4x4xf32>, vector<4x512xf32>, vector<4x512xf32> -> vector<4x512xf32>
    %218 = arith.addf %213, %217 : vector<4x512xf32>
    %c0_193 = arith.constant 0 : index
    %c129_194 = arith.constant 129 : index
    %219 = vector.load %arg4[%c0_193, %c129_194] : memref<4x768xf32, #tpu.memory_space<vmem>>, vector<4x512xf32>
    %cst_195 = arith.constant 0.000000e+00 : f32
    %220 = vector.broadcast %cst_195 : f32 to vector<4x512xf32>
    %221 = arith.select %42, %219, %220 : vector<4x512xi1>, vector<4x512xf32>
    %c2_196 = arith.constant 2 : index
    %c5_197 = arith.constant 5 : index
    %c0_198 = arith.constant 0 : index
    %c0_199 = arith.constant 0 : index
    %222 = vector.load %arg1[%c2_196, %c5_197, %c0_198, %c0_199] : memref<3x9x4x4xf32, #tpu.memory_space<vmem>>, vector<1x1x4x4xf32>
    %223 = vector.shape_cast %222 : vector<1x1x4x4xf32> to vector<4x4xf32>
    %cst_200 = arith.constant dense<0.000000e+00> : vector<4x512xf32>
    %224 = tpu.matmul %223, %221, %cst_200 {dimension_numbers = #tpu.dot_dimension_numbers<[1], [0], [0], [1], [0, 0, 1, 1], [], []>} : vector<4x4xf32>, vector<4x512xf32>, vector<4x512xf32> -> vector<4x512xf32>
    %225 = arith.addf %218, %224 : vector<4x512xf32>
    %c0_201 = arith.constant 0 : index
    %c143_202 = arith.constant 143 : index
    %226 = vector.load %arg4[%c0_201, %c143_202] : memref<4x768xf32, #tpu.memory_space<vmem>>, vector<4x512xf32>
    %cst_203 = arith.constant 0.000000e+00 : f32
    %227 = vector.broadcast %cst_203 : f32 to vector<4x512xf32>
    %228 = arith.select %45, %226, %227 : vector<4x512xi1>, vector<4x512xf32>
    %c2_204 = arith.constant 2 : index
    %c6_205 = arith.constant 6 : index
    %c0_206 = arith.constant 0 : index
    %c0_207 = arith.constant 0 : index
    %229 = vector.load %arg1[%c2_204, %c6_205, %c0_206, %c0_207] : memref<3x9x4x4xf32, #tpu.memory_space<vmem>>, vector<1x1x4x4xf32>
    %230 = vector.shape_cast %229 : vector<1x1x4x4xf32> to vector<4x4xf32>
    %cst_208 = arith.constant dense<0.000000e+00> : vector<4x512xf32>
    %231 = tpu.matmul %230, %228, %cst_208 {dimension_numbers = #tpu.dot_dimension_numbers<[1], [0], [0], [1], [0, 0, 1, 1], [], []>} : vector<4x4xf32>, vector<4x512xf32>, vector<4x512xf32> -> vector<4x512xf32>
    %232 = arith.addf %225, %231 : vector<4x512xf32>
    %c0_209 = arith.constant 0 : index
    %c144_210 = arith.constant 144 : index
    %233 = vector.load %arg4[%c0_209, %c144_210] : memref<4x768xf32, #tpu.memory_space<vmem>>, vector<4x512xf32>
    %cst_211 = arith.constant 0.000000e+00 : f32
    %234 = vector.broadcast %cst_211 : f32 to vector<4x512xf32>
    %235 = arith.select %38, %233, %234 : vector<4x512xi1>, vector<4x512xf32>
    %c2_212 = arith.constant 2 : index
    %c7_213 = arith.constant 7 : index
    %c0_214 = arith.constant 0 : index
    %c0_215 = arith.constant 0 : index
    %236 = vector.load %arg1[%c2_212, %c7_213, %c0_214, %c0_215] : memref<3x9x4x4xf32, #tpu.memory_space<vmem>>, vector<1x1x4x4xf32>
    %237 = vector.shape_cast %236 : vector<1x1x4x4xf32> to vector<4x4xf32>
    %cst_216 = arith.constant dense<0.000000e+00> : vector<4x512xf32>
    %238 = tpu.matmul %237, %235, %cst_216 {dimension_numbers = #tpu.dot_dimension_numbers<[1], [0], [0], [1], [0, 0, 1, 1], [], []>} : vector<4x4xf32>, vector<4x512xf32>, vector<4x512xf32> -> vector<4x512xf32>
    %239 = arith.addf %232, %238 : vector<4x512xf32>
    %c0_217 = arith.constant 0 : index
    %c145_218 = arith.constant 145 : index
    %240 = vector.load %arg4[%c0_217, %c145_218] : memref<4x768xf32, #tpu.memory_space<vmem>>, vector<4x512xf32>
    %cst_219 = arith.constant 0.000000e+00 : f32
    %241 = vector.broadcast %cst_219 : f32 to vector<4x512xf32>
    %242 = arith.select %46, %240, %241 : vector<4x512xi1>, vector<4x512xf32>
    %c2_220 = arith.constant 2 : index
    %c8_221 = arith.constant 8 : index
    %c0_222 = arith.constant 0 : index
    %c0_223 = arith.constant 0 : index
    %243 = vector.load %arg1[%c2_220, %c8_221, %c0_222, %c0_223] : memref<3x9x4x4xf32, #tpu.memory_space<vmem>>, vector<1x1x4x4xf32>
    %244 = vector.shape_cast %243 : vector<1x1x4x4xf32> to vector<4x4xf32>
    %cst_224 = arith.constant dense<0.000000e+00> : vector<4x512xf32>
    %245 = tpu.matmul %244, %242, %cst_224 {dimension_numbers = #tpu.dot_dimension_numbers<[1], [0], [0], [1], [0, 0, 1, 1], [], []>} : vector<4x4xf32>, vector<4x512xf32>, vector<4x512xf32> -> vector<4x512xf32>
    %246 = arith.addf %239, %245 : vector<4x512xf32>
    %c2_225 = arith.constant 2 : index
    %c0_226 = arith.constant 0 : index
    %c0_227 = arith.constant 0 : index
    %247 = vector.load %arg2[%c2_225, %c0_226, %c0_227] : memref<3x4x1xf32, #tpu.memory_space<vmem>>, vector<1x4x1xf32>
    %248 = vector.shape_cast %247 : vector<1x4x1xf32> to vector<4x1xf32>
    %249 = vector.broadcast %248 : vector<4x1xf32> to vector<4x512xf32>
    %250 = arith.addf %246, %249 : vector<4x512xf32>
    %cst_228 = arith.constant 0.000000e+00 : f32
    %251 = vector.broadcast %cst_228 : f32 to vector<4x512xf32>
    %252 = arith.maximumf %250, %251 : vector<4x512xf32>
    %c0_229 = arith.constant 0 : index
    %c0_230 = arith.constant 0 : index
    %253 = vector.load %arg3[%c0_229, %c0_230] : memref<4x512xf32, #tpu.memory_space<vmem>>, vector<4x512xf32>
    tpu.vector_store %arg3[%c0_229, %c0_230], %252 {strides = array<i32>} : memref<4x512xf32, #tpu.memory_space<vmem>>, vector<4x512xf32>,
    return
  }
}

</mosaic_0001>

<llo_original>
// kernel: model_forward.1
$region0: #{model_forward.1}
  #allocation0 [shape = 'u32[]', space=smem, size = 0x4, offset = 0x4, fixed_abs, tag = 'smem constant byte address 0x4 - core index']
  #allocation1 [shape = 'u32[72,128]{1,0:T(1,128)}', space=vmem, size = 0x9000, scoped, tag = 'internal scratch']
  #allocation2 [shape = 'f32[4,768]{1,0:T(4,128)}', space=vmem, size = 0x3000, scoped, tag = 'scratch operand']
  %s0 = inlined_call_operand.vmem [shape: f32[4,512], index: 0, kind: input, shape index: {}]
  %s1 = inlined_call_operand.vmem [shape: f32[3,9,4,4], index: 1, kind: input, shape index: {}]
  %s2 = inlined_call_operand.vmem [shape: f32[3,4,1], index: 2, kind: input, shape index: {}]
  %s3 = inlined_call_operand.vmem [shape: f32[4,512], index: 3, kind: output, shape index: {}]
  %s4 = sld [smem:[#allocation0]]
  $region22: #{model_forward.1} parent=0
    _
  %s6 = ssub.s32 1, %s4
  %s7 = scalar_select 0, %s6, %s4
  // Predicated region
  $region2: #{model_forward.1} parent=0 // pred_check
    _
  $region3: #{model_forward.1} parent=0 // pred_check_branch
    %9 = sbr.rel (0) target = $region5
  $region4: #{model_forward.1} parent=0 // pred_region
    _
  $region5: #{model_forward.1} parent=0 // pred_fallthru
    _
  // Predicated region
  $region6: #{model_forward.1} parent=0 // pred_check
    _
  $region7: #{model_forward.1} parent=0 // pred_check_branch
    %11 = sbr.rel (0) target = $region9
  $region8: #{model_forward.1} parent=0 // pred_region
    _
  $region9: #{model_forward.1} parent=0 // pred_fallthru
    _
  // Predicated region
  $region10: #{model_forward.1} parent=0 // pred_check
    _
  $region11: #{model_forward.1} parent=0 // pred_check_branch
    %13 = sbr.rel (0) target = $region13
  $region12: #{model_forward.1} parent=0 // pred_region
    _
  $region13: #{model_forward.1} parent=0 // pred_fallthru
    _
  %14 = vst [vmem:[#allocation2] sm:$0xff] 0.0
  %15 = vst [vmem:[#allocation2 + $0x8] sm:$0xff] 0.0
  %16 = vst [vmem:[#allocation2 + $0x10] sm:$0xff] 0.0
  %v17 = vlaneseq
  %v18 = vand.u32 %v17, 127
  %v19 = vadd.s32 %v18, 128
  %v20 = vadd.s32 %v18, 256
  %v21 = vadd.s32 %v18, 384
  %vm22 = vcmp.lt.s32.totalorder %v18, 0
  %v23 = vsub.s32 0, %v18
  %v24 = vsel %vm22, %v23, %v18
  %v25 = vshrl.u32 %v24, 8
  %v26 = vand.u32 %v24, 255
  %v27 = vsub.s32 0, %v26
  %v28 = vsel %vm22, %v27, %v26
  %vm29 = vcmp.lt.s32.totalorder %v19, 0
  %v30 = vsub.s32 0, %v19
  %v31 = vsel %vm29, %v30, %v19
  %v32 = vshrl.u32 %v31, 8
  %v33 = vand.u32 %v31, 255
  %v34 = vsub.s32 0, %v33
  %v35 = vsel %vm29, %v34, %v33
  %vm36 = vcmp.lt.s32.totalorder %v20, 0
  %v37 = vsub.s32 0, %v20
  %v38 = vsel %vm36, %v37, %v20
  %v39 = vshrl.u32 %v38, 8
  %v40 = vand.u32 %v38, 255
  %v41 = vsub.s32 0, %v40
  %v42 = vsel %vm36, %v41, %v40
  %vm43 = vcmp.lt.s32.totalorder %v21, 0
  %v44 = vsub.s32 0, %v21
  %v45 = vsel %vm43, %v44, %v21
  %v46 = vshrl.u32 %v45, 8
  %v47 = vand.u32 %v45, 255
  %v48 = vsub.s32 0, %v47
  %v49 = vsel %vm43, %v48, %v47
  %vm50 = vcmp.ne.s32.totalorder %v28, 0
  %vm51 = vcmp.ne.s32.totalorder %v35, 0
  %vm52 = vcmp.ne.s32.totalorder %v42, 0
  %vm53 = vcmp.ne.s32.totalorder %v49, 0
  %vm54 = vcmp.lt.s32.totalorder %v28, 0
  %vm55 = vcmp.lt.s32.totalorder %v35, 0
  %vm56 = vcmp.lt.s32.totalorder %v42, 0
  %vm57 = vcmp.lt.s32.totalorder %v49, 0
  %vm58 = vmand %vm54, %vm50
  %vm59 = vmand %vm55, %vm51
  %vm60 = vmand %vm56, %vm52
  %vm61 = vmand %vm57, %vm53
  %v62 = vadd.s32 %v28, 256
  %v63 = vadd.s32 %v35, 256
  %v64 = vadd.s32 %v42, 256
  %v65 = vadd.s32 %v49, 256
  %v66 = vsel %vm58, %v62, %v28
  %v67 = vsel %vm59, %v63, %v35
  %v68 = vsel %vm60, %v64, %v42
  %v69 = vsel %vm61, %v65, %v49
  %vm70 = vcmp.lt.s32.totalorder %v66, 0
  %v71 = vsub.s32 0, %v66
  %v72 = vsel %vm70, %v71, %v66
  %v73 = vshrl.u32 %v72, 4
  %v74 = vand.u32 %v72, 15
  %v75 = vsub.s32 0, %v74
  %v76 = vsel %vm70, %v75, %v74
  %vm77 = vcmp.lt.s32.totalorder %v67, 0
  %v78 = vsub.s32 0, %v67
  %v79 = vsel %vm77, %v78, %v67
  %v80 = vshrl.u32 %v79, 4
  %v81 = vand.u32 %v79, 15
  %v82 = vsub.s32 0, %v81
  %v83 = vsel %vm77, %v82, %v81
  %vm84 = vcmp.lt.s32.totalorder %v68, 0
  %v85 = vsub.s32 0, %v68
  %v86 = vsel %vm84, %v85, %v68
  %v87 = vshrl.u32 %v86, 4
  %v88 = vand.u32 %v86, 15
  %v89 = vsub.s32 0, %v88
  %v90 = vsel %vm84, %v89, %v88
  %vm91 = vcmp.lt.s32.totalorder %v69, 0
  %v92 = vsub.s32 0, %v69
  %v93 = vsel %vm91, %v92, %v69
  %v94 = vshrl.u32 %v93, 4
  %v95 = vand.u32 %v93, 15
  %v96 = vsub.s32 0, %v95
  %v97 = vsel %vm91, %v96, %v95
  %vm98 = vcmp.ne.s32.totalorder %v76, 0
  %vm99 = vcmp.ne.s32.totalorder %v83, 0
  %vm100 = vcmp.ne.s32.totalorder %v90, 0
  %vm101 = vcmp.ne.s32.totalorder %v97, 0
  %vm102 = vcmp.lt.s32.totalorder %v76, 0
  %vm103 = vcmp.lt.s32.totalorder %v83, 0
  %vm104 = vcmp.lt.s32.totalorder %v90, 0
  %vm105 = vcmp.lt.s32.totalorder %v97, 0
  %vm106 = vmand %vm102, %vm98
  %vm107 = vmand %vm103, %vm99
  %vm108 = vmand %vm104, %vm100
  %vm109 = vmand %vm105, %vm101
  %v110 = vadd.s32 %v76, 16
  %v111 = vadd.s32 %v83, 16
  %v112 = vadd.s32 %v90, 16
  %v113 = vadd.s32 %v97, 16
  %v114 = vsel %vm106, %v110, %v76
  %v115 = vsel %vm107, %v111, %v83
  %v116 = vsel %vm108, %v112, %v90
  %v117 = vsel %vm109, %v113, %v97
  %vm118 = vcmp.ge.s32.totalorder %v66, 16
  %vm119 = vcmp.ge.s32.totalorder %v67, 16
  %vm120 = vcmp.ge.s32.totalorder %v68, 16
  %vm121 = vcmp.ge.s32.totalorder %v69, 16
  %vm122 = vcmp.lt.s32.totalorder %v66, 240
  %vm123 = vcmp.lt.s32.totalorder %v67, 240
  %vm124 = vcmp.lt.s32.totalorder %v68, 240
  %vm125 = vcmp.lt.s32.totalorder %v69, 240
  %vm126 = vcmp.gt.s32.totalorder %v114, 0
  %vm127 = vcmp.gt.s32.totalorder %v115, 0
  %vm128 = vcmp.gt.s32.totalorder %v116, 0
  %vm129 = vcmp.gt.s32.totalorder %v117, 0
  %vm130 = vcmp.lt.s32.totalorder %v114, 15
  %vm131 = vcmp.lt.s32.totalorder %v115, 15
  %vm132 = vcmp.lt.s32.totalorder %v116, 15
  %vm133 = vcmp.lt.s32.totalorder %v117, 15
  %vm134 = vmand %vm118, %vm126
  %vm135 = vmand %vm119, %vm127
  %vm136 = vmand %vm120, %vm128
  %vm137 = vmand %vm121, %vm129
  %vm138 = vmand %vm118, %vm130
  %vm139 = vmand %vm119, %vm131
  %vm140 = vmand %vm120, %vm132
  %vm141 = vmand %vm121, %vm133
  %vm142 = vmand %vm122, %vm126
  %vm143 = vmand %vm123, %vm127
  %vm144 = vmand %vm124, %vm128
  %vm145 = vmand %vm125, %vm129
  %vm146 = vmand %vm122, %vm130
  %vm147 = vmand %vm123, %vm131
  %vm148 = vmand %vm124, %vm132
  %vm149 = vmand %vm125, %vm133
  %v150 = vld [vmem:[%s0] sm:$0xff]
  %v151 = vld [vmem:[%s0 + $0x8] sm:$0xff]
  %152 = vst [vmem:[#allocation2 + $0x4] sm:$0xff] %v150
  %153 = vst [vmem:[#allocation2 + $0xc] sm:$0xff] %v151
  %v154 = vld [vmem:[#allocation2] sm:$0xff]
  %v155 = vld [vmem:[#allocation2 + $0x8] sm:$0xff]
  %v156 = vld [vmem:[#allocation2 + $0x10] sm:$0xf]
  %160 = vst [vmem:[#allocation1] ss:$2 sm:$0xff] %v154
  %s161 = scalar_lea.vmem [#allocation1], 16
  %162 = vst [vmem:[%s161] ss:$2 sm:$0xff] %v155
  %s163 = scalar_lea.vmem [#allocation1], 32
  %164 = vst [vmem:[%s163] ss:$2 sm:$0xff] %v156
  %v165 = vld.sshfl [vmem:[#allocation1] sm:$0xff pattern:$0x75316420]
  %v166 = vld.sshfl [vmem:[#allocation1 + $0x8] sm:$0xff pattern:$0x75316420]
  %v167 = vld.sshfl [vmem:[#allocation1 + $0x10] sm:$0xff pattern:$0x75316420]
  %v168 = vld.sshfl [vmem:[#allocation1 + $0x18] sm:$0xff pattern:$0x75316420]
  %v169 = vld.sshfl [vmem:[#allocation1 + $0x20] sm:$0xff pattern:$0x75316420]
  %170 = vrot.lane.b32.xlu0 %v165, 17
  %v171 = vpop.permute.xlu0 %170
  %172 = vrot.lane.b32.xlu0 %v166, 17
  %v173 = vpop.permute.xlu0 %172
  %174 = vrot.lane.b32.xlu0 %v167, 17
  %v175 = vpop.permute.xlu0 %174
  %176 = vrot.lane.b32.xlu0 %v168, 17
  %v177 = vpop.permute.xlu0 %176
  %178 = vrot.lane.b32.xlu0 %v169, 17
  %v179 = vpop.permute.xlu0 %178
  %vm180 = vcmask 138240
  %v181 = vsel %vm180, %v171, %v173
  %v182 = vsel %vm180, %v173, %v175
  %v183 = vsel %vm180, %v175, %v177
  %v184 = vsel %vm180, %v177, %v179
  %v189 = vsel %vm134, %v181, 0.0
  %v190 = vsel %vm135, %v182, 0.0
  %v191 = vsel %vm136, %v183, 0.0
  %v192 = vsel %vm137, %v184, 0.0
  %v193 = vld [vmem:[%s1] sm:$0xf]
  %v194 = vld [vmem:[#allocation2] sm:$0xff]
  %v195 = vld [vmem:[#allocation2 + $0x8] sm:$0xff]
  %v196 = vld [vmem:[#allocation2 + $0x10] sm:$0xf]
  %200 = vst [vmem:[#allocation1] ss:$2 sm:$0xff] %v194
  %s201 = scalar_lea.vmem [#allocation1], 16
  %202 = vst [vmem:[%s201] ss:$2 sm:$0xff] %v195
  %s203 = scalar_lea.vmem [#allocation1], 32
  %204 = vst [vmem:[%s203] ss:$2 sm:$0xff] %v196
  %v205 = vld.sshfl [vmem:[#allocation1] sm:$0xff pattern:$0x75316420]
  %v206 = vld.sshfl [vmem:[#allocation1 + $0x8] sm:$0xff pattern:$0x75316420]
  %v207 = vld.sshfl [vmem:[#allocation1 + $0x10] sm:$0xff pattern:$0x75316420]
  %v208 = vld.sshfl [vmem:[#allocation1 + $0x18] sm:$0xff pattern:$0x75316420]
  %v209 = vld.sshfl [vmem:[#allocation1 + $0x20] sm:$0xff pattern:$0x75316420]
  %210 = vrot.lane.b32.xlu0 %v205, 16
  %v211 = vpop.permute.xlu0 %210
  %212 = vrot.lane.b32.xlu0 %v206, 16
  %v213 = vpop.permute.xlu0 %212
  %214 = vrot.lane.b32.xlu0 %v207, 16
  %v215 = vpop.permute.xlu0 %214
  %216 = vrot.lane.b32.xlu0 %v208, 16
  %v217 = vpop.permute.xlu0 %216
  %218 = vrot.lane.b32.xlu0 %v209, 16
  %v219 = vpop.permute.xlu0 %218
  %vm220 = vcmask 130048
  %v221 = vsel %vm220, %v211, %v213
  %v222 = vsel %vm220, %v213, %v215
  %v223 = vsel %vm220, %v215, %v217
  %v224 = vsel %vm220, %v217, %v219
  %v229 = vsel %vm118, %v221, 0.0
  %v230 = vsel %vm119, %v222, 0.0
  %v231 = vsel %vm120, %v223, 0.0
  %v232 = vsel %vm121, %v224, 0.0
  %s233 = scalar_lea.vmem %s1, 4
  %v234 = vld [vmem:[%s233] sm:$0xf]
  %vm235 = vcmask 31744
  %v237 = vsel %vm235, %v234, 0
  %vm239 = vcmask 1043456
  %v241 = vsel %vm239, %v229, 0
  %v244 = vsel %vm239, %v230, 0
  %v247 = vsel %vm239, %v231, 0
  %v250 = vsel %vm239, %v232, 0
  %252 = vmatpush.msra.mxu0 0.0
  %253 = vmatpush.msra.mxu0 0.0
  %254 = vmatpush.msra.mxu0 0.0
  %255 = vmatpush.msra.mxu0 0.0
  %256 = vmatpush.msra.mxu0 0.0
  %257 = vmatpush.msra.mxu0 0.0
  %258 = vmatpush.msra.mxu0 0.0
  %259 = vmatpush.msra.mxu0 0.0
  %260 = vmatpush.msra.mxu0 0.0
  %261 = vmatpush.msra.mxu0 0.0
  %262 = vmatpush.msra.mxu0 0.0
  %263 = vmatpush.msra.mxu0 0.0
  %264 = vmatpush.msra.mxu0 0.0
  %265 = vmatpush.msra.mxu0 0.0
  %266 = vmatpush.msra.mxu0 0.0
  %267 = vmatpush.msra.mxu0 %v241
  %268 = vmatmul.f32.gmra.mxu0 %v237
  %v269 = vpop.f32.mrf.mxu0
  %v270 = vadd.f32 0.0, %v269
  %271 = vdwg.mxu0
  %272 = vmatpush.msra.mxu0 0.0
  %273 = vmatpush.msra.mxu0 0.0
  %274 = vmatpush.msra.mxu0 0.0
  %275 = vmatpush.msra.mxu0 0.0
  %276 = vmatpush.msra.mxu0 0.0
  %277 = vmatpush.msra.mxu0 0.0
  %278 = vmatpush.msra.mxu0 0.0
  %279 = vmatpush.msra.mxu0 0.0
  %280 = vmatpush.msra.mxu0 0.0
  %281 = vmatpush.msra.mxu0 0.0
  %282 = vmatpush.msra.mxu0 0.0
  %283 = vmatpush.msra.mxu0 0.0
  %284 = vmatpush.msra.mxu0 0.0
  %285 = vmatpush.msra.mxu0 0.0
  %286 = vmatpush.msra.mxu0 0.0
  %287 = vmatpush.msra.mxu0 %v244
  %288 = vmatmul.f32.gmra.mxu0 %v237
  %v289 = vpop.f32.mrf.mxu0
  %v290 = vadd.f32 0.0, %v289
  %291 = vdwg.mxu0
  %292 = vmatpush.msra.mxu0 0.0
  %293 = vmatpush.msra.mxu0 0.0
  %294 = vmatpush.msra.mxu0 0.0
  %295 = vmatpush.msra.mxu0 0.0
  %296 = vmatpush.msra.mxu0 0.0
  %297 = vmatpush.msra.mxu0 0.0
  %298 = vmatpush.msra.mxu0 0.0
  %299 = vmatpush.msra.mxu0 0.0
  %300 = vmatpush.msra.mxu0 0.0
  %301 = vmatpush.msra.mxu0 0.0
  %302 = vmatpush.msra.mxu0 0.0
  %303 = vmatpush.msra.mxu0 0.0
  %304 = vmatpush.msra.mxu0 0.0
  %305 = vmatpush.msra.mxu0 0.0
  %306 = vmatpush.msra.mxu0 0.0
  %307 = vmatpush.msra.mxu0 %v247
  %308 = vmatmul.f32.gmra.mxu0 %v237
  %v309 = vpop.f32.mrf.mxu0
  %v310 = vadd.f32 0.0, %v309
  %311 = vdwg.mxu0
  %312 = vmatpush.msra.mxu0 0.0
  %313 = vmatpush.msra.mxu0 0.0
  %314 = vmatpush.msra.mxu0 0.0
  %315 = vmatpush.msra.mxu0 0.0
  %316 = vmatpush.msra.mxu0 0.0
  %317 = vmatpush.msra.mxu0 0.0
  %318 = vmatpush.msra.mxu0 0.0
  %319 = vmatpush.msra.mxu0 0.0
  %320 = vmatpush.msra.mxu0 0.0
  %321 = vmatpush.msra.mxu0 0.0
  %322 = vmatpush.msra.mxu0 0.0
  %323 = vmatpush.msra.mxu0 0.0
  %324 = vmatpush.msra.mxu0 0.0
  %325 = vmatpush.msra.mxu0 0.0
  %326 = vmatpush.msra.mxu0 0.0
  %327 = vmatpush.msra.mxu0 %v250
  %328 = vmatmul.f32.gmra.mxu0 %v237
  %v329 = vpop.f32.mrf.mxu0
  %v330 = vadd.f32 0.0, %v329
  %331 = vdwg.mxu0
  %v333 = vsel %vm235, %v193, 0
  %v336 = vsel %vm239, %v189, 0
  %v339 = vsel %vm239, %v190, 0
  %v342 = vsel %vm239, %v191, 0
  %v345 = vsel %vm239, %v192, 0
  %347 = vmatpush.msra.mxu0 0.0
  %348 = vmatpush.msra.mxu0 0.0
  %349 = vmatpush.msra.mxu0 0.0
  %350 = vmatpush.msra.mxu0 0.0
  %351 = vmatpush.msra.mxu0 0.0
  %352 = vmatpush.msra.mxu0 0.0
  %353 = vmatpush.msra.mxu0 0.0
  %354 = vmatpush.msra.mxu0 0.0
  %355 = vmatpush.msra.mxu0 0.0
  %356 = vmatpush.msra.mxu0 0.0
  %357 = vmatpush.msra.mxu0 0.0
  %358 = vmatpush.msra.mxu0 0.0
  %359 = vmatpush.msra.mxu0 0.0
  %360 = vmatpush.msra.mxu0 0.0
  %361 = vmatpush.msra.mxu0 0.0
  %362 = vmatpush.msra.mxu0 %v336
  %363 = vmatmul.f32.gmra.mxu0 %v333
  %v364 = vpop.f32.mrf.mxu0
  %v365 = vadd.f32 %v270, %v364
  %366 = vdwg.mxu0
  %367 = vmatpush.msra.mxu0 0.0
  %368 = vmatpush.msra.mxu0 0.0
  %369 = vmatpush.msra.mxu0 0.0
  %370 = vmatpush.msra.mxu0 0.0
  %371 = vmatpush.msra.mxu0 0.0
  %372 = vmatpush.msra.mxu0 0.0
  %373 = vmatpush.msra.mxu0 0.0
  %374 = vmatpush.msra.mxu0 0.0
  %375 = vmatpush.msra.mxu0 0.0
  %376 = vmatpush.msra.mxu0 0.0
  %377 = vmatpush.msra.mxu0 0.0
  %378 = vmatpush.msra.mxu0 0.0
  %379 = vmatpush.msra.mxu0 0.0
  %380 = vmatpush.msra.mxu0 0.0
  %381 = vmatpush.msra.mxu0 0.0
  %382 = vmatpush.msra.mxu0 %v339
  %383 = vmatmul.f32.gmra.mxu0 %v333
  %v384 = vpop.f32.mrf.mxu0
  %v385 = vadd.f32 %v290, %v384
  %386 = vdwg.mxu0
  %387 = vmatpush.msra.mxu0 0.0
  %388 = vmatpush.msra.mxu0 0.0
  %389 = vmatpush.msra.mxu0 0.0
  %390 = vmatpush.msra.mxu0 0.0
  %391 = vmatpush.msra.mxu0 0.0
  %392 = vmatpush.msra.mxu0 0.0
  %393 = vmatpush.msra.mxu0 0.0
  %394 = vmatpush.msra.mxu0 0.0
  %395 = vmatpush.msra.mxu0 0.0
  %396 = vmatpush.msra.mxu0 0.0
  %397 = vmatpush.msra.mxu0 0.0
  %398 = vmatpush.msra.mxu0 0.0
  %399 = vmatpush.msra.mxu0 0.0
  %400 = vmatpush.msra.mxu0 0.0
  %401 = vmatpush.msra.mxu0 0.0
  %402 = vmatpush.msra.mxu0 %v342
  %403 = vmatmul.f32.gmra.mxu0 %v333
  %v404 = vpop.f32.mrf.mxu0
  %v405 = vadd.f32 %v310, %v404
  %406 = vdwg.mxu0
  %407 = vmatpush.msra.mxu0 0.0
  %408 = vmatpush.msra.mxu0 0.0
  %409 = vmatpush.msra.mxu0 0.0
  %410 = vmatpush.msra.mxu0 0.0
  %411 = vmatpush.msra.mxu0 0.0
  %412 = vmatpush.msra.mxu0 0.0
  %413 = vmatpush.msra.mxu0 0.0
  %414 = vmatpush.msra.mxu0 0.0
  %415 = vmatpush.msra.mxu0 0.0
  %416 = vmatpush.msra.mxu0 0.0
  %417 = vmatpush.msra.mxu0 0.0
  %418 = vmatpush.msra.mxu0 0.0
  %419 = vmatpush.msra.mxu0 0.0
  %420 = vmatpush.msra.mxu0 0.0
  %421 = vmatpush.msra.mxu0 0.0
  %422 = vmatpush.msra.mxu0 %v345
  %423 = vmatmul.f32.gmra.mxu0 %v333
  %v424 = vpop.f32.mrf.mxu0
  %v425 = vadd.f32 %v330, %v424
  %426 = vdwg.mxu0
  %v427 = vld [vmem:[#allocation2] sm:$0xff]
  %v428 = vld [vmem:[#allocation2 + $0x8] sm:$0xff]
  %v429 = vld [vmem:[#allocation2 + $0x10] sm:$0xf]
  %433 = vst [vmem:[#allocation1] ss:$2 sm:$0xff] %v427
  %s434 = scalar_lea.vmem [#allocation1], 16
  %435 = vst [vmem:[%s434] ss:$2 sm:$0xff] %v428
  %s436 = scalar_lea.vmem [#allocation1], 32
  %437 = vst [vmem:[%s436] ss:$2 sm:$0xff] %v429
  %v438 = vld.sshfl [vmem:[#allocation1] sm:$0xff pattern:$0x75316420]
  %v439 = vld.sshfl [vmem:[#allocation1 + $0x8] sm:$0xff pattern:$0x75316420]
  %v440 = vld.sshfl [vmem:[#allocation1 + $0x10] sm:$0xff pattern:$0x75316420]
  %v441 = vld.sshfl [vmem:[#allocation1 + $0x18] sm:$0xff pattern:$0x75316420]
  %v442 = vld.sshfl [vmem:[#allocation1 + $0x20] sm:$0xff pattern:$0x75316420]
  %443 = vrot.lane.b32.xlu0 %v438, 15
  %v444 = vpop.permute.xlu0 %443
  %445 = vrot.lane.b32.xlu0 %v439, 15
  %v446 = vpop.permute.xlu0 %445
  %447 = vrot.lane.b32.xlu0 %v440, 15
  %v448 = vpop.permute.xlu0 %447
  %449 = vrot.lane.b32.xlu0 %v441, 15
  %v450 = vpop.permute.xlu0 %449
  %451 = vrot.lane.b32.xlu0 %v442, 15
  %v452 = vpop.permute.xlu0 %451
  %vm453 = vcmask 121856
  %v454 = vsel %vm453, %v444, %v446
  %v455 = vsel %vm453, %v446, %v448
  %v456 = vsel %vm453, %v448, %v450
  %v457 = vsel %vm453, %v450, %v452
  %v462 = vsel %vm138, %v454, 0.0
  %v463 = vsel %vm139, %v455, 0.0
  %v464 = vsel %vm140, %v456, 0.0
  %v465 = vsel %vm141, %v457, 0.0
  %s466 = scalar_lea.vmem %s1, 8
  %v467 = vld [vmem:[%s466] sm:$0xf]
  %v469 = vsel %vm235, %v467, 0
  %v472 = vsel %vm239, %v462, 0
  %v475 = vsel %vm239, %v463, 0
  %v478 = vsel %vm239, %v464, 0
  %v481 = vsel %vm239, %v465, 0
  %483 = vmatpush.msra.mxu0 0.0
  %484 = vmatpush.msra.mxu0 0.0
  %485 = vmatpush.msra.mxu0 0.0
  %486 = vmatpush.msra.mxu0 0.0
  %487 = vmatpush.msra.mxu0 0.0
  %488 = vmatpush.msra.mxu0 0.0
  %489 = vmatpush.msra.mxu0 0.0
  %490 = vmatpush.msra.mxu0 0.0
  %491 = vmatpush.msra.mxu0 0.0
  %492 = vmatpush.msra.mxu0 0.0
  %493 = vmatpush.msra.mxu0 0.0
  %494 = vmatpush.msra.mxu0 0.0
  %495 = vmatpush.msra.mxu0 0.0
  %496 = vmatpush.msra.mxu0 0.0
  %497 = vmatpush.msra.mxu0 0.0
  %498 = vmatpush.msra.mxu0 %v472
  %499 = vmatmul.f32.gmra.mxu0 %v469
  %v500 = vpop.f32.mrf.mxu0
  %v501 = vadd.f32 0.0, %v500
  %502 = vdwg.mxu0
  %503 = vmatpush.msra.mxu0 0.0
  %504 = vmatpush.msra.mxu0 0.0
  %505 = vmatpush.msra.mxu0 0.0
  %506 = vmatpush.msra.mxu0 0.0
  %507 = vmatpush.msra.mxu0 0.0
  %508 = vmatpush.msra.mxu0 0.0
  %509 = vmatpush.msra.mxu0 0.0
  %510 = vmatpush.msra.mxu0 0.0
  %511 = vmatpush.msra.mxu0 0.0
  %512 = vmatpush.msra.mxu0 0.0
  %513 = vmatpush.msra.mxu0 0.0
  %514 = vmatpush.msra.mxu0 0.0
  %515 = vmatpush.msra.mxu0 0.0
  %516 = vmatpush.msra.mxu0 0.0
  %517 = vmatpush.msra.mxu0 0.0
  %518 = vmatpush.msra.mxu0 %v475
  %519 = vmatmul.f32.gmra.mxu0 %v469
  %v520 = vpop.f32.mrf.mxu0
  %v521 = vadd.f32 0.0, %v520
  %522 = vdwg.mxu0
  %523 = vmatpush.msra.mxu0 0.0
  %524 = vmatpush.msra.mxu0 0.0
  %525 = vmatpush.msra.mxu0 0.0
  %526 = vmatpush.msra.mxu0 0.0
  %527 = vmatpush.msra.mxu0 0.0
  %528 = vmatpush.msra.mxu0 0.0
  %529 = vmatpush.msra.mxu0 0.0
  %530 = vmatpush.msra.mxu0 0.0
  %531 = vmatpush.msra.mxu0 0.0
  %532 = vmatpush.msra.mxu0 0.0
  %533 = vmatpush.msra.mxu0 0.0
  %534 = vmatpush.msra.mxu0 0.0
  %535 = vmatpush.msra.mxu0 0.0
  %536 = vmatpush.msra.mxu0 0.0
  %537 = vmatpush.msra.mxu0 0.0
  %538 = vmatpush.msra.mxu0 %v478
  %539 = vmatmul.f32.gmra.mxu0 %v469
  %v540 = vpop.f32.mrf.mxu0
  %v541 = vadd.f32 0.0, %v540
  %542 = vdwg.mxu0
  %543 = vmatpush.msra.mxu0 0.0
  %544 = vmatpush.msra.mxu0 0.0
  %545 = vmatpush.msra.mxu0 0.0
  %546 = vmatpush.msra.mxu0 0.0
  %547 = vmatpush.msra.mxu0 0.0
  %548 = vmatpush.msra.mxu0 0.0
  %549 = vmatpush.msra.mxu0 0.0
  %550 = vmatpush.msra.mxu0 0.0
  %551 = vmatpush.msra.mxu0 0.0
  %552 = vmatpush.msra.mxu0 0.0
  %553 = vmatpush.msra.mxu0 0.0
  %554 = vmatpush.msra.mxu0 0.0
  %555 = vmatpush.msra.mxu0 0.0
  %556 = vmatpush.msra.mxu0 0.0
  %557 = vmatpush.msra.mxu0 0.0
  %558 = vmatpush.msra.mxu0 %v481
  %559 = vmatmul.f32.gmra.mxu0 %v469
  %v560 = vpop.f32.mrf.mxu0
  %v561 = vadd.f32 0.0, %v560
  %562 = vdwg.mxu0
  %v563 = vadd.f32 %v365, %v501
  %v564 = vadd.f32 %v385, %v521
  %v565 = vadd.f32 %v405, %v541
  %v566 = vadd.f32 %v425, %v561
  %v567 = vld [vmem:[#allocation2] sm:$0xff]
  %v568 = vld [vmem:[#allocation2 + $0x8] sm:$0xff]
  %v569 = vld [vmem:[#allocation2 + $0x10] sm:$0xf]
  %573 = vst [vmem:[#allocation1] ss:$2 sm:$0xff] %v567
  %s574 = scalar_lea.vmem [#allocation1], 16
  %575 = vst [vmem:[%s574] ss:$2 sm:$0xff] %v568
  %s576 = scalar_lea.vmem [#allocation1], 32
  %577 = vst [vmem:[%s576] ss:$2 sm:$0xff] %v569
  %v578 = vld.sshfl [vmem:[#allocation1] sm:$0xff pattern:$0x75316420]
  %v579 = vld.sshfl [vmem:[#allocation1 + $0x8] sm:$0xff pattern:$0x75316420]
  %v580 = vld.sshfl [vmem:[#allocation1 + $0x10] sm:$0xff pattern:$0x75316420]
  %v581 = vld.sshfl [vmem:[#allocation1 + $0x18] sm:$0xff pattern:$0x75316420]
  %v582 = vld.sshfl [vmem:[#allocation1 + $0x20] sm:$0xff pattern:$0x75316420]
  %583 = vrot.lane.b32.xlu0 %v578, 1
  %v584 = vpop.permute.xlu0 %583
  %585 = vrot.lane.b32.xlu0 %v579, 1
  %v586 = vpop.permute.xlu0 %585
  %587 = vrot.lane.b32.xlu0 %v580, 1
  %v588 = vpop.permute.xlu0 %587
  %589 = vrot.lane.b32.xlu0 %v581, 1
  %v590 = vpop.permute.xlu0 %589
  %591 = vrot.lane.b32.xlu0 %v582, 1
  %v592 = vpop.permute.xlu0 %591
  %vm593 = vcmask 7168
  %v594 = vsel %vm593, %v584, %v586
  %v595 = vsel %vm593, %v586, %v588
  %v596 = vsel %vm593, %v588, %v590
  %v597 = vsel %vm593, %v590, %v592
  %v602 = vsel %vm126, %v594, 0.0
  %v603 = vsel %vm127, %v595, 0.0
  %v604 = vsel %vm128, %v596, 0.0
  %v605 = vsel %vm129, %v597, 0.0
  %s606 = scalar_lea.vmem %s1, 12
  %v607 = vld [vmem:[%s606] sm:$0xf]
  %v609 = vsel %vm235, %v607, 0
  %v612 = vsel %vm239, %v602, 0
  %v615 = vsel %vm239, %v603, 0
  %v618 = vsel %vm239, %v604, 0
  %v621 = vsel %vm239, %v605, 0
  %623 = vmatpush.msra.mxu0 0.0
  %624 = vmatpush.msra.mxu0 0.0
  %625 = vmatpush.msra.mxu0 0.0
  %626 = vmatpush.msra.mxu0 0.0
  %627 = vmatpush.msra.mxu0 0.0
  %628 = vmatpush.msra.mxu0 0.0
  %629 = vmatpush.msra.mxu0 0.0
  %630 = vmatpush.msra.mxu0 0.0
  %631 = vmatpush.msra.mxu0 0.0
  %632 = vmatpush.msra.mxu0 0.0
  %633 = vmatpush.msra.mxu0 0.0
  %634 = vmatpush.msra.mxu0 0.0
  %635 = vmatpush.msra.mxu0 0.0
  %636 = vmatpush.msra.mxu0 0.0
  %637 = vmatpush.msra.mxu0 0.0
  %638 = vmatpush.msra.mxu0 %v612
  %639 = vmatmul.f32.gmra.mxu0 %v609
  %v640 = vpop.f32.mrf.mxu0
  %v641 = vadd.f32 0.0, %v640
  %642 = vdwg.mxu0
  %643 = vmatpush.msra.mxu0 0.0
  %644 = vmatpush.msra.mxu0 0.0
  %645 = vmatpush.msra.mxu0 0.0
  %646 = vmatpush.msra.mxu0 0.0
  %647 = vmatpush.msra.mxu0 0.0
  %648 = vmatpush.msra.mxu0 0.0
  %649 = vmatpush.msra.mxu0 0.0
  %650 = vmatpush.msra.mxu0 0.0
  %651 = vmatpush.msra.mxu0 0.0
  %652 = vmatpush.msra.mxu0 0.0
  %653 = vmatpush.msra.mxu0 0.0
  %654 = vmatpush.msra.mxu0 0.0
  %655 = vmatpush.msra.mxu0 0.0
  %656 = vmatpush.msra.mxu0 0.0
  %657 = vmatpush.msra.mxu0 0.0
  %658 = vmatpush.msra.mxu0 %v615
  %659 = vmatmul.f32.gmra.mxu0 %v609
  %v660 = vpop.f32.mrf.mxu0
  %v661 = vadd.f32 0.0, %v660
  %662 = vdwg.mxu0
  %663 = vmatpush.msra.mxu0 0.0
  %664 = vmatpush.msra.mxu0 0.0
  %665 = vmatpush.msra.mxu0 0.0
  %666 = vmatpush.msra.mxu0 0.0
  %667 = vmatpush.msra.mxu0 0.0
  %668 = vmatpush.msra.mxu0 0.0
  %669 = vmatpush.msra.mxu0 0.0
  %670 = vmatpush.msra.mxu0 0.0
  %671 = vmatpush.msra.mxu0 0.0
  %672 = vmatpush.msra.mxu0 0.0
  %673 = vmatpush.msra.mxu0 0.0
  %674 = vmatpush.msra.mxu0 0.0
  %675 = vmatpush.msra.mxu0 0.0
  %676 = vmatpush.msra.mxu0 0.0
  %677 = vmatpush.msra.mxu0 0.0
  %678 = vmatpush.msra.mxu0 %v618
  %679 = vmatmul.f32.gmra.mxu0 %v609
  %v680 = vpop.f32.mrf.mxu0
  %v681 = vadd.f32 0.0, %v680
  %682 = vdwg.mxu0
  %683 = vmatpush.msra.mxu0 0.0
  %684 = vmatpush.msra.mxu0 0.0
  %685 = vmatpush.msra.mxu0 0.0
  %686 = vmatpush.msra.mxu0 0.0
  %687 = vmatpush.msra.mxu0 0.0
  %688 = vmatpush.msra.mxu0 0.0
  %689 = vmatpush.msra.mxu0 0.0
  %690 = vmatpush.msra.mxu0 0.0
  %691 = vmatpush.msra.mxu0 0.0
  %692 = vmatpush.msra.mxu0 0.0
  %693 = vmatpush.msra.mxu0 0.0
  %694 = vmatpush.msra.mxu0 0.0
  %695 = vmatpush.msra.mxu0 0.0
  %696 = vmatpush.msra.mxu0 0.0
  %697 = vmatpush.msra.mxu0 0.0
  %698 = vmatpush.msra.mxu0 %v621
  %699 = vmatmul.f32.gmra.mxu0 %v609
  %v700 = vpop.f32.mrf.mxu0
  %v701 = vadd.f32 0.0, %v700
  %702 = vdwg.mxu0
  %v703 = vadd.f32 %v563, %v641
  %v704 = vadd.f32 %v564, %v661
  %v705 = vadd.f32 %v565, %v681
  %v706 = vadd.f32 %v566, %v701
  %v707 = vld [vmem:[#allocation2 + $0x4] sm:$0xff]
  %v708 = vld [vmem:[#allocation2 + $0xc] sm:$0xff]
  %s709 = scalar_lea.vmem %s1, 16
  %v710 = vld [vmem:[%s709] sm:$0xf]
  %713 = vst [vmem:[#allocation1] ss:$2 sm:$0xff] %v707
  %s714 = scalar_lea.vmem [#allocation1], 16
  %715 = vst [vmem:[%s714] ss:$2 sm:$0xff] %v708
  %v716 = vld.sshfl [vmem:[#allocation1] sm:$0xff pattern:$0x75316420]
  %v717 = vld.sshfl [vmem:[#allocation1 + $0x8] sm:$0xff pattern:$0x75316420]
  %v718 = vld.sshfl [vmem:[#allocation1 + $0x10] sm:$0xff pattern:$0x75316420]
  %v719 = vld.sshfl [vmem:[#allocation1 + $0x18] sm:$0xff pattern:$0x75316420]
  %v721 = vsel %vm235, %v710, 0
  %v723 = vsel %vm239, %v716, 0
  %v725 = vsel %vm239, %v717, 0
  %v727 = vsel %vm239, %v718, 0
  %v729 = vsel %vm239, %v719, 0
  %731 = vmatpush.msra.mxu0 0.0
  %732 = vmatpush.msra.mxu0 0.0
  %733 = vmatpush.msra.mxu0 0.0
  %734 = vmatpush.msra.mxu0 0.0
  %735 = vmatpush.msra.mxu0 0.0
  %736 = vmatpush.msra.mxu0 0.0
  %737 = vmatpush.msra.mxu0 0.0
  %738 = vmatpush.msra.mxu0 0.0
  %739 = vmatpush.msra.mxu0 0.0
  %740 = vmatpush.msra.mxu0 0.0
  %741 = vmatpush.msra.mxu0 0.0
  %742 = vmatpush.msra.mxu0 0.0
  %743 = vmatpush.msra.mxu0 0.0
  %744 = vmatpush.msra.mxu0 0.0
  %745 = vmatpush.msra.mxu0 0.0
  %746 = vmatpush.msra.mxu0 %v723
  %747 = vmatmul.f32.gmra.mxu0 %v721
  %v748 = vpop.f32.mrf.mxu0
  %v749 = vadd.f32 0.0, %v748
  %750 = vdwg.mxu0
  %751 = vmatpush.msra.mxu0 0.0
  %752 = vmatpush.msra.mxu0 0.0
  %753 = vmatpush.msra.mxu0 0.0
  %754 = vmatpush.msra.mxu0 0.0
  %755 = vmatpush.msra.mxu0 0.0
  %756 = vmatpush.msra.mxu0 0.0
  %757 = vmatpush.msra.mxu0 0.0
  %758 = vmatpush.msra.mxu0 0.0
  %759 = vmatpush.msra.mxu0 0.0
  %760 = vmatpush.msra.mxu0 0.0
  %761 = vmatpush.msra.mxu0 0.0
  %762 = vmatpush.msra.mxu0 0.0
  %763 = vmatpush.msra.mxu0 0.0
  %764 = vmatpush.msra.mxu0 0.0
  %765 = vmatpush.msra.mxu0 0.0
  %766 = vmatpush.msra.mxu0 %v725
  %767 = vmatmul.f32.gmra.mxu0 %v721
  %v768 = vpop.f32.mrf.mxu0
  %v769 = vadd.f32 0.0, %v768
  %770 = vdwg.mxu0
  %771 = vmatpush.msra.mxu0 0.0
  %772 = vmatpush.msra.mxu0 0.0
  %773 = vmatpush.msra.mxu0 0.0
  %774 = vmatpush.msra.mxu0 0.0
  %775 = vmatpush.msra.mxu0 0.0
  %776 = vmatpush.msra.mxu0 0.0
  %777 = vmatpush.msra.mxu0 0.0
  %778 = vmatpush.msra.mxu0 0.0
  %779 = vmatpush.msra.mxu0 0.0
  %780 = vmatpush.msra.mxu0 0.0
  %781 = vmatpush.msra.mxu0 0.0
  %782 = vmatpush.msra.mxu0 0.0
  %783 = vmatpush.msra.mxu0 0.0
  %784 = vmatpush.msra.mxu0 0.0
  %785 = vmatpush.msra.mxu0 0.0
  %786 = vmatpush.msra.mxu0 %v727
  %787 = vmatmul.f32.gmra.mxu0 %v721
  %v788 = vpop.f32.mrf.mxu0
  %v789 = vadd.f32 0.0, %v788
  %790 = vdwg.mxu0
  %791 = vmatpush.msra.mxu0 0.0
  %792 = vmatpush.msra.mxu0 0.0
  %793 = vmatpush.msra.mxu0 0.0
  %794 = vmatpush.msra.mxu0 0.0
  %795 = vmatpush.msra.mxu0 0.0
  %796 = vmatpush.msra.mxu0 0.0
  %797 = vmatpush.msra.mxu0 0.0
  %798 = vmatpush.msra.mxu0 0.0
  %799 = vmatpush.msra.mxu0 0.0
  %800 = vmatpush.msra.mxu0 0.0
  %801 = vmatpush.msra.mxu0 0.0
  %802 = vmatpush.msra.mxu0 0.0
  %803 = vmatpush.msra.mxu0 0.0
  %804 = vmatpush.msra.mxu0 0.0
  %805 = vmatpush.msra.mxu0 0.0
  %806 = vmatpush.msra.mxu0 %v729
  %807 = vmatmul.f32.gmra.mxu0 %v721
  %v808 = vpop.f32.mrf.mxu0
  %v809 = vadd.f32 0.0, %v808
  %810 = vdwg.mxu0
  %v811 = vadd.f32 %v703, %v749
  %v812 = vadd.f32 %v704, %v769
  %v813 = vadd.f32 %v705, %v789
  %v814 = vadd.f32 %v706, %v809
  %v815 = vld [vmem:[#allocation2 + $0x4] sm:$0xff]
  %v816 = vld [vmem:[#allocation2 + $0xc] sm:$0xff]
  %v817 = vld [vmem:[#allocation2 + $0x14] sm:$0xf]
  %821 = vst [vmem:[#allocation1] ss:$2 sm:$0xff] %v815
  %s822 = scalar_lea.vmem [#allocation1], 16
  %823 = vst [vmem:[%s822] ss:$2 sm:$0xff] %v816
  %s824 = scalar_lea.vmem [#allocation1], 32
  %825 = vst [vmem:[%s824] ss:$2 sm:$0xff] %v817
  %v826 = vld.sshfl [vmem:[#allocation1] sm:$0xff pattern:$0x75316420]
  %v827 = vld.sshfl [vmem:[#allocation1 + $0x8] sm:$0xff pattern:$0x75316420]
  %v828 = vld.sshfl [vmem:[#allocation1 + $0x10] sm:$0xff pattern:$0x75316420]
  %v829 = vld.sshfl [vmem:[#allocation1 + $0x18] sm:$0xff pattern:$0x75316420]
  %v830 = vld.sshfl [vmem:[#allocation1 + $0x20] sm:$0xff pattern:$0x75316420]
  %831 = vrot.lane.b32.xlu0 %v826, 127
  %v832 = vpop.permute.xlu0 %831
  %833 = vrot.lane.b32.xlu0 %v827, 127
  %v834 = vpop.permute.xlu0 %833
  %835 = vrot.lane.b32.xlu0 %v828, 127
  %v836 = vpop.permute.xlu0 %835
  %837 = vrot.lane.b32.xlu0 %v829, 127
  %v838 = vpop.permute.xlu0 %837
  %839 = vrot.lane.b32.xlu0 %v830, 127
  %v840 = vpop.permute.xlu0 %839
  %vm841 = vcmask 1039360
  %v842 = vsel %vm841, %v832, %v834
  %v843 = vsel %vm841, %v834, %v836
  %v844 = vsel %vm841, %v836, %v838
  %v845 = vsel %vm841, %v838, %v840
  %v850 = vsel %vm130, %v842, 0.0
  %v851 = vsel %vm131, %v843, 0.0
  %v852 = vsel %vm132, %v844, 0.0
  %v853 = vsel %vm133, %v845, 0.0
  %s854 = scalar_lea.vmem %s1, 20
  %v855 = vld [vmem:[%s854] sm:$0xf]
  %v857 = vsel %vm235, %v855, 0
  %v860 = vsel %vm239, %v850, 0
  %v863 = vsel %vm239, %v851, 0
  %v866 = vsel %vm239, %v852, 0
  %v869 = vsel %vm239, %v853, 0
  %871 = vmatpush.msra.mxu0 0.0
  %872 = vmatpush.msra.mxu0 0.0
  %873 = vmatpush.msra.mxu0 0.0
  %874 = vmatpush.msra.mxu0 0.0
  %875 = vmatpush.msra.mxu0 0.0
  %876 = vmatpush.msra.mxu0 0.0
  %877 = vmatpush.msra.mxu0 0.0
  %878 = vmatpush.msra.mxu0 0.0
  %879 = vmatpush.msra.mxu0 0.0
  %880 = vmatpush.msra.mxu0 0.0
  %881 = vmatpush.msra.mxu0 0.0
  %882 = vmatpush.msra.mxu0 0.0
  %883 = vmatpush.msra.mxu0 0.0
  %884 = vmatpush.msra.mxu0 0.0
  %885 = vmatpush.msra.mxu0 0.0
  %886 = vmatpush.msra.mxu0 %v860
  %887 = vmatmul.f32.gmra.mxu0 %v857
  %v888 = vpop.f32.mrf.mxu0
  %v889 = vadd.f32 0.0, %v888
  %890 = vdwg.mxu0
  %891 = vmatpush.msra.mxu0 0.0
  %892 = vmatpush.msra.mxu0 0.0
  %893 = vmatpush.msra.mxu0 0.0
  %894 = vmatpush.msra.mxu0 0.0
  %895 = vmatpush.msra.mxu0 0.0
  %896 = vmatpush.msra.mxu0 0.0
  %897 = vmatpush.msra.mxu0 0.0
  %898 = vmatpush.msra.mxu0 0.0
  %899 = vmatpush.msra.mxu0 0.0
  %900 = vmatpush.msra.mxu0 0.0
  %901 = vmatpush.msra.mxu0 0.0
  %902 = vmatpush.msra.mxu0 0.0
  %903 = vmatpush.msra.mxu0 0.0
  %904 = vmatpush.msra.mxu0 0.0
  %905 = vmatpush.msra.mxu0 0.0
  %906 = vmatpush.msra.mxu0 %v863
  %907 = vmatmul.f32.gmra.mxu0 %v857
  %v908 = vpop.f32.mrf.mxu0
  %v909 = vadd.f32 0.0, %v908
  %910 = vdwg.mxu0
  %911 = vmatpush.msra.mxu0 0.0
  %912 = vmatpush.msra.mxu0 0.0
  %913 = vmatpush.msra.mxu0 0.0
  %914 = vmatpush.msra.mxu0 0.0
  %915 = vmatpush.msra.mxu0 0.0
  %916 = vmatpush.msra.mxu0 0.0
  %917 = vmatpush.msra.mxu0 0.0
  %918 = vmatpush.msra.mxu0 0.0
  %919 = vmatpush.msra.mxu0 0.0
  %920 = vmatpush.msra.mxu0 0.0
  %921 = vmatpush.msra.mxu0 0.0
  %922 = vmatpush.msra.mxu0 0.0
  %923 = vmatpush.msra.mxu0 0.0
  %924 = vmatpush.msra.mxu0 0.0
  %925 = vmatpush.msra.mxu0 0.0
  %926 = vmatpush.msra.mxu0 %v866
  %927 = vmatmul.f32.gmra.mxu0 %v857
  %v928 = vpop.f32.mrf.mxu0
  %v929 = vadd.f32 0.0, %v928
  %930 = vdwg.mxu0
  %931 = vmatpush.msra.mxu0 0.0
  %932 = vmatpush.msra.mxu0 0.0
  %933 = vmatpush.msra.mxu0 0.0
  %934 = vmatpush.msra.mxu0 0.0
  %935 = vmatpush.msra.mxu0 0.0
  %936 = vmatpush.msra.mxu0 0.0
  %937 = vmatpush.msra.mxu0 0.0
  %938 = vmatpush.msra.mxu0 0.0
  %939 = vmatpush.msra.mxu0 0.0
  %940 = vmatpush.msra.mxu0 0.0
  %941 = vmatpush.msra.mxu0 0.0
  %942 = vmatpush.msra.mxu0 0.0
  %943 = vmatpush.msra.mxu0 0.0
  %944 = vmatpush.msra.mxu0 0.0
  %945 = vmatpush.msra.mxu0 0.0
  %946 = vmatpush.msra.mxu0 %v869
  %947 = vmatmul.f32.gmra.mxu0 %v857
  %v948 = vpop.f32.mrf.mxu0
  %v949 = vadd.f32 0.0, %v948
  %950 = vdwg.mxu0
  %v951 = vadd.f32 %v811, %v889
  %v952 = vadd.f32 %v812, %v909
  %v953 = vadd.f32 %v813, %v929
  %v954 = vadd.f32 %v814, %v949
  %v955 = vld [vmem:[#allocation2 + $0x4] sm:$0xff]
  %v956 = vld [vmem:[#allocation2 + $0xc] sm:$0xff]
  %v957 = vld [vmem:[#allocation2 + $0x14] sm:$0xf]
  %961 = vst [vmem:[#allocation1] ss:$2 sm:$0xff] %v955
  %s962 = scalar_lea.vmem [#allocation1], 16
  %963 = vst [vmem:[%s962] ss:$2 sm:$0xff] %v956
  %s964 = scalar_lea.vmem [#allocation1], 32
  %965 = vst [vmem:[%s964] ss:$2 sm:$0xff] %v957
  %v966 = vld.sshfl [vmem:[#allocation1] sm:$0xff pattern:$0x75316420]
  %v967 = vld.sshfl [vmem:[#allocation1 + $0x8] sm:$0xff pattern:$0x75316420]
  %v968 = vld.sshfl [vmem:[#allocation1 + $0x10] sm:$0xff pattern:$0x75316420]
  %v969 = vld.sshfl [vmem:[#allocation1 + $0x18] sm:$0xff pattern:$0x75316420]
  %v970 = vld.sshfl [vmem:[#allocation1 + $0x20] sm:$0xff pattern:$0x75316420]
  %971 = vrot.lane.b32.xlu0 %v966, 113
  %v972 = vpop.permute.xlu0 %971
  %973 = vrot.lane.b32.xlu0 %v967, 113
  %v974 = vpop.permute.xlu0 %973
  %975 = vrot.lane.b32.xlu0 %v968, 113
  %v976 = vpop.permute.xlu0 %975
  %977 = vrot.lane.b32.xlu0 %v969, 113
  %v978 = vpop.permute.xlu0 %977
  %979 = vrot.lane.b32.xlu0 %v970, 113
  %v980 = vpop.permute.xlu0 %979
  %vm981 = vcmask 924672
  %v982 = vsel %vm981, %v972, %v974
  %v983 = vsel %vm981, %v974, %v976
  %v984 = vsel %vm981, %v976, %v978
  %v985 = vsel %vm981, %v978, %v980
  %v990 = vsel %vm142, %v982, 0.0
  %v991 = vsel %vm143, %v983, 0.0
  %v992 = vsel %vm144, %v984, 0.0
  %v993 = vsel %vm145, %v985, 0.0
  %s994 = scalar_lea.vmem %s1, 24
  %v995 = vld [vmem:[%s994] sm:$0xf]
  %v997 = vsel %vm235, %v995, 0
  %v1000 = vsel %vm239, %v990, 0
  %v1003 = vsel %vm239, %v991, 0
  %v1006 = vsel %vm239, %v992, 0
  %v1009 = vsel %vm239, %v993, 0
  %1011 = vmatpush.msra.mxu0 0.0
  %1012 = vmatpush.msra.mxu0 0.0
  %1013 = vmatpush.msra.mxu0 0.0
  %1014 = vmatpush.msra.mxu0 0.0
  %1015 = vmatpush.msra.mxu0 0.0
  %1016 = vmatpush.msra.mxu0 0.0
  %1017 = vmatpush.msra.mxu0 0.0
  %1018 = vmatpush.msra.mxu0 0.0
  %1019 = vmatpush.msra.mxu0 0.0
  %1020 = vmatpush.msra.mxu0 0.0
  %1021 = vmatpush.msra.mxu0 0.0
  %1022 = vmatpush.msra.mxu0 0.0
  %1023 = vmatpush.msra.mxu0 0.0
  %1024 = vmatpush.msra.mxu0 0.0
  %1025 = vmatpush.msra.mxu0 0.0
  %1026 = vmatpush.msra.mxu0 %v1000
  %1027 = vmatmul.f32.gmra.mxu0 %v997
  %v1028 = vpop.f32.mrf.mxu0
  %v1029 = vadd.f32 0.0, %v1028
  %1030 = vdwg.mxu0
  %1031 = vmatpush.msra.mxu0 0.0
  %1032 = vmatpush.msra.mxu0 0.0
  %1033 = vmatpush.msra.mxu0 0.0
  %1034 = vmatpush.msra.mxu0 0.0
  %1035 = vmatpush.msra.mxu0 0.0
  %1036 = vmatpush.msra.mxu0 0.0
  %1037 = vmatpush.msra.mxu0 0.0
  %1038 = vmatpush.msra.mxu0 0.0
  %1039 = vmatpush.msra.mxu0 0.0
  %1040 = vmatpush.msra.mxu0 0.0
  %1041 = vmatpush.msra.mxu0 0.0
  %1042 = vmatpush.msra.mxu0 0.0
  %1043 = vmatpush.msra.mxu0 0.0
  %1044 = vmatpush.msra.mxu0 0.0
  %1045 = vmatpush.msra.mxu0 0.0
  %1046 = vmatpush.msra.mxu0 %v1003
  %1047 = vmatmul.f32.gmra.mxu0 %v997
  %v1048 = vpop.f32.mrf.mxu0
  %v1049 = vadd.f32 0.0, %v1048
  %1050 = vdwg.mxu0
  %1051 = vmatpush.msra.mxu0 0.0
  %1052 = vmatpush.msra.mxu0 0.0
  %1053 = vmatpush.msra.mxu0 0.0
  %1054 = vmatpush.msra.mxu0 0.0
  %1055 = vmatpush.msra.mxu0 0.0
  %1056 = vmatpush.msra.mxu0 0.0
  %1057 = vmatpush.msra.mxu0 0.0
  %1058 = vmatpush.msra.mxu0 0.0
  %1059 = vmatpush.msra.mxu0 0.0
  %1060 = vmatpush.msra.mxu0 0.0
  %1061 = vmatpush.msra.mxu0 0.0
  %1062 = vmatpush.msra.mxu0 0.0
  %1063 = vmatpush.msra.mxu0 0.0
  %1064 = vmatpush.msra.mxu0 0.0
  %1065 = vmatpush.msra.mxu0 0.0
  %1066 = vmatpush.msra.mxu0 %v1006
  %1067 = vmatmul.f32.gmra.mxu0 %v997
  %v1068 = vpop.f32.mrf.mxu0
  %v1069 = vadd.f32 0.0, %v1068
  %1070 = vdwg.mxu0
  %1071 = vmatpush.msra.mxu0 0.0
  %1072 = vmatpush.msra.mxu0 0.0
  %1073 = vmatpush.msra.mxu0 0.0
  %1074 = vmatpush.msra.mxu0 0.0
  %1075 = vmatpush.msra.mxu0 0.0
  %1076 = vmatpush.msra.mxu0 0.0
  %1077 = vmatpush.msra.mxu0 0.0
  %1078 = vmatpush.msra.mxu0 0.0
  %1079 = vmatpush.msra.mxu0 0.0
  %1080 = vmatpush.msra.mxu0 0.0
  %1081 = vmatpush.msra.mxu0 0.0
  %1082 = vmatpush.msra.mxu0 0.0
  %1083 = vmatpush.msra.mxu0 0.0
  %1084 = vmatpush.msra.mxu0 0.0
  %1085 = vmatpush.msra.mxu0 0.0
  %1086 = vmatpush.msra.mxu0 %v1009
  %1087 = vmatmul.f32.gmra.mxu0 %v997
  %v1088 = vpop.f32.mrf.mxu0
  %v1089 = vadd.f32 0.0, %v1088
  %1090 = vdwg.mxu0
  %v1091 = vadd.f32 %v951, %v1029
  %v1092 = vadd.f32 %v952, %v1049
  %v1093 = vadd.f32 %v953, %v1069
  %v1094 = vadd.f32 %v954, %v1089
  %v1095 = vld [vmem:[#allocation2 + $0x4] sm:$0xff]
  %v1096 = vld [vmem:[#allocation2 + $0xc] sm:$0xff]
  %v1097 = vld [vmem:[#allocation2 + $0x14] sm:$0xf]
  %1101 = vst [vmem:[#allocation1] ss:$2 sm:$0xff] %v1095
  %s1102 = scalar_lea.vmem [#allocation1], 16
  %1103 = vst [vmem:[%s1102] ss:$2 sm:$0xff] %v1096
  %s1104 = scalar_lea.vmem [#allocation1], 32
  %1105 = vst [vmem:[%s1104] ss:$2 sm:$0xff] %v1097
  %v1106 = vld.sshfl [vmem:[#allocation1] sm:$0xff pattern:$0x75316420]
  %v1107 = vld.sshfl [vmem:[#allocation1 + $0x8] sm:$0xff pattern:$0x75316420]
  %v1108 = vld.sshfl [vmem:[#allocation1 + $0x10] sm:$0xff pattern:$0x75316420]
  %v1109 = vld.sshfl [vmem:[#allocation1 + $0x18] sm:$0xff pattern:$0x75316420]
  %v1110 = vld.sshfl [vmem:[#allocation1 + $0x20] sm:$0xff pattern:$0x75316420]
  %1111 = vrot.lane.b32.xlu0 %v1106, 112
  %v1112 = vpop.permute.xlu0 %1111
  %1113 = vrot.lane.b32.xlu0 %v1107, 112
  %v1114 = vpop.permute.xlu0 %1113
  %1115 = vrot.lane.b32.xlu0 %v1108, 112
  %v1116 = vpop.permute.xlu0 %1115
  %1117 = vrot.lane.b32.xlu0 %v1109, 112
  %v1118 = vpop.permute.xlu0 %1117
  %1119 = vrot.lane.b32.xlu0 %v1110, 112
  %v1120 = vpop.permute.xlu0 %1119
  %vm1121 = vcmask 916480
  %v1122 = vsel %vm1121, %v1112, %v1114
  %v1123 = vsel %vm1121, %v1114, %v1116
  %v1124 = vsel %vm1121, %v1116, %v1118
  %v1125 = vsel %vm1121, %v1118, %v1120
  %v1130 = vsel %vm122, %v1122, 0.0
  %v1131 = vsel %vm123, %v1123, 0.0
  %v1132 = vsel %vm124, %v1124, 0.0
  %v1133 = vsel %vm125, %v1125, 0.0
  %s1134 = scalar_lea.vmem %s1, 28
  %v1135 = vld [vmem:[%s1134] sm:$0xf]
  %v1137 = vsel %vm235, %v1135, 0
  %v1140 = vsel %vm239, %v1130, 0
  %v1143 = vsel %vm239, %v1131, 0
  %v1146 = vsel %vm239, %v1132, 0
  %v1149 = vsel %vm239, %v1133, 0
  %1151 = vmatpush.msra.mxu0 0.0
  %1152 = vmatpush.msra.mxu0 0.0
  %1153 = vmatpush.msra.mxu0 0.0
  %1154 = vmatpush.msra.mxu0 0.0
  %1155 = vmatpush.msra.mxu0 0.0
  %1156 = vmatpush.msra.mxu0 0.0
  %1157 = vmatpush.msra.mxu0 0.0
  %1158 = vmatpush.msra.mxu0 0.0
  %1159 = vmatpush.msra.mxu0 0.0
  %1160 = vmatpush.msra.mxu0 0.0
  %1161 = vmatpush.msra.mxu0 0.0
  %1162 = vmatpush.msra.mxu0 0.0
  %1163 = vmatpush.msra.mxu0 0.0
  %1164 = vmatpush.msra.mxu0 0.0
  %1165 = vmatpush.msra.mxu0 0.0
  %1166 = vmatpush.msra.mxu0 %v1140
  %1167 = vmatmul.f32.gmra.mxu0 %v1137
  %v1168 = vpop.f32.mrf.mxu0
  %v1169 = vadd.f32 0.0, %v1168
  %1170 = vdwg.mxu0
  %1171 = vmatpush.msra.mxu0 0.0
  %1172 = vmatpush.msra.mxu0 0.0
  %1173 = vmatpush.msra.mxu0 0.0
  %1174 = vmatpush.msra.mxu0 0.0
  %1175 = vmatpush.msra.mxu0 0.0
  %1176 = vmatpush.msra.mxu0 0.0
  %1177 = vmatpush.msra.mxu0 0.0
  %1178 = vmatpush.msra.mxu0 0.0
  %1179 = vmatpush.msra.mxu0 0.0
  %1180 = vmatpush.msra.mxu0 0.0
  %1181 = vmatpush.msra.mxu0 0.0
  %1182 = vmatpush.msra.mxu0 0.0
  %1183 = vmatpush.msra.mxu0 0.0
  %1184 = vmatpush.msra.mxu0 0.0
  %1185 = vmatpush.msra.mxu0 0.0
  %1186 = vmatpush.msra.mxu0 %v1143
  %1187 = vmatmul.f32.gmra.mxu0 %v1137
  %v1188 = vpop.f32.mrf.mxu0
  %v1189 = vadd.f32 0.0, %v1188
  %1190 = vdwg.mxu0
  %1191 = vmatpush.msra.mxu0 0.0
  %1192 = vmatpush.msra.mxu0 0.0
  %1193 = vmatpush.msra.mxu0 0.0
  %1194 = vmatpush.msra.mxu0 0.0
  %1195 = vmatpush.msra.mxu0 0.0
  %1196 = vmatpush.msra.mxu0 0.0
  %1197 = vmatpush.msra.mxu0 0.0
  %1198 = vmatpush.msra.mxu0 0.0
  %1199 = vmatpush.msra.mxu0 0.0
  %1200 = vmatpush.msra.mxu0 0.0
  %1201 = vmatpush.msra.mxu0 0.0
  %1202 = vmatpush.msra.mxu0 0.0
  %1203 = vmatpush.msra.mxu0 0.0
  %1204 = vmatpush.msra.mxu0 0.0
  %1205 = vmatpush.msra.mxu0 0.0
  %1206 = vmatpush.msra.mxu0 %v1146
  %1207 = vmatmul.f32.gmra.mxu0 %v1137
  %v1208 = vpop.f32.mrf.mxu0
  %v1209 = vadd.f32 0.0, %v1208
  %1210 = vdwg.mxu0
  %1211 = vmatpush.msra.mxu0 0.0
  %1212 = vmatpush.msra.mxu0 0.0
  %1213 = vmatpush.msra.mxu0 0.0
  %1214 = vmatpush.msra.mxu0 0.0
  %1215 = vmatpush.msra.mxu0 0.0
  %1216 = vmatpush.msra.mxu0 0.0
  %1217 = vmatpush.msra.mxu0 0.0
  %1218 = vmatpush.msra.mxu0 0.0
  %1219 = vmatpush.msra.mxu0 0.0
  %1220 = vmatpush.msra.mxu0 0.0
  %1221 = vmatpush.msra.mxu0 0.0
  %1222 = vmatpush.msra.mxu0 0.0
  %1223 = vmatpush.msra.mxu0 0.0
  %1224 = vmatpush.msra.mxu0 0.0
  %1225 = vmatpush.msra.mxu0 0.0
  %1226 = vmatpush.msra.mxu0 %v1149
  %1227 = vmatmul.f32.gmra.mxu0 %v1137
  %v1228 = vpop.f32.mrf.mxu0
  %v1229 = vadd.f32 0.0, %v1228
  %1230 = vdwg.mxu0
  %v1231 = vadd.f32 %v1091, %v1169
  %v1232 = vadd.f32 %v1092, %v1189
  %v1233 = vadd.f32 %v1093, %v1209
  %v1234 = vadd.f32 %v1094, %v1229
  %v1235 = vld [vmem:[#allocation2 + $0x4] sm:$0xff]
  %v1236 = vld [vmem:[#allocation2 + $0xc] sm:$0xff]
  %v1237 = vld [vmem:[#allocation2 + $0x14] sm:$0xf]
  %1241 = vst [vmem:[#allocation1] ss:$2 sm:$0xff] %v1235
  %s1242 = scalar_lea.vmem [#allocation1], 16
  %1243 = vst [vmem:[%s1242] ss:$2 sm:$0xff] %v1236
  %s1244 = scalar_lea.vmem [#allocation1], 32
  %1245 = vst [vmem:[%s1244] ss:$2 sm:$0xff] %v1237
  %v1246 = vld.sshfl [vmem:[#allocation1] sm:$0xff pattern:$0x75316420]
  %v1247 = vld.sshfl [vmem:[#allocation1 + $0x8] sm:$0xff pattern:$0x75316420]
  %v1248 = vld.sshfl [vmem:[#allocation1 + $0x10] sm:$0xff pattern:$0x75316420]
  %v1249 = vld.sshfl [vmem:[#allocation1 + $0x18] sm:$0xff pattern:$0x75316420]
  %v1250 = vld.sshfl [vmem:[#allocation1 + $0x20] sm:$0xff pattern:$0x75316420]
  %1251 = vrot.lane.b32.xlu0 %v1246, 111
  %v1252 = vpop.permute.xlu0 %1251
  %1253 = vrot.lane.b32.xlu0 %v1247, 111
  %v1254 = vpop.permute.xlu0 %1253
  %1255 = vrot.lane.b32.xlu0 %v1248, 111
  %v1256 = vpop.permute.xlu0 %1255
  %1257 = vrot.lane.b32.xlu0 %v1249, 111
  %v1258 = vpop.permute.xlu0 %1257
  %1259 = vrot.lane.b32.xlu0 %v1250, 111
  %v1260 = vpop.permute.xlu0 %1259
  %vm1261 = vcmask 908288
  %v1262 = vsel %vm1261, %v1252, %v1254
  %v1263 = vsel %vm1261, %v1254, %v1256
  %v1264 = vsel %vm1261, %v1256, %v1258
  %v1265 = vsel %vm1261, %v1258, %v1260
  %v1270 = vsel %vm146, %v1262, 0.0
  %v1271 = vsel %vm147, %v1263, 0.0
  %v1272 = vsel %vm148, %v1264, 0.0
  %v1273 = vsel %vm149, %v1265, 0.0
  %s1274 = scalar_lea.vmem %s1, 32
  %v1275 = vld [vmem:[%s1274] sm:$0xf]
  %v1277 = vsel %vm235, %v1275, 0
  %v1280 = vsel %vm239, %v1270, 0
  %v1283 = vsel %vm239, %v1271, 0
  %v1286 = vsel %vm239, %v1272, 0
  %v1289 = vsel %vm239, %v1273, 0
  %1291 = vmatpush.msra.mxu0 0.0
  %1292 = vmatpush.msra.mxu0 0.0
  %1293 = vmatpush.msra.mxu0 0.0
  %1294 = vmatpush.msra.mxu0 0.0
  %1295 = vmatpush.msra.mxu0 0.0
  %1296 = vmatpush.msra.mxu0 0.0
  %1297 = vmatpush.msra.mxu0 0.0
  %1298 = vmatpush.msra.mxu0 0.0
  %1299 = vmatpush.msra.mxu0 0.0
  %1300 = vmatpush.msra.mxu0 0.0
  %1301 = vmatpush.msra.mxu0 0.0
  %1302 = vmatpush.msra.mxu0 0.0
  %1303 = vmatpush.msra.mxu0 0.0
  %1304 = vmatpush.msra.mxu0 0.0
  %1305 = vmatpush.msra.mxu0 0.0
  %1306 = vmatpush.msra.mxu0 %v1280
  %1307 = vmatmul.f32.gmra.mxu0 %v1277
  %v1308 = vpop.f32.mrf.mxu0
  %v1309 = vadd.f32 0.0, %v1308
  %1310 = vdwg.mxu0
  %1311 = vmatpush.msra.mxu0 0.0
  %1312 = vmatpush.msra.mxu0 0.0
  %1313 = vmatpush.msra.mxu0 0.0
  %1314 = vmatpush.msra.mxu0 0.0
  %1315 = vmatpush.msra.mxu0 0.0
  %1316 = vmatpush.msra.mxu0 0.0
  %1317 = vmatpush.msra.mxu0 0.0
  %1318 = vmatpush.msra.mxu0 0.0
  %1319 = vmatpush.msra.mxu0 0.0
  %1320 = vmatpush.msra.mxu0 0.0
  %1321 = vmatpush.msra.mxu0 0.0
  %1322 = vmatpush.msra.mxu0 0.0
  %1323 = vmatpush.msra.mxu0 0.0
  %1324 = vmatpush.msra.mxu0 0.0
  %1325 = vmatpush.msra.mxu0 0.0
  %1326 = vmatpush.msra.mxu0 %v1283
  %1327 = vmatmul.f32.gmra.mxu0 %v1277
  %v1328 = vpop.f32.mrf.mxu0
  %v1329 = vadd.f32 0.0, %v1328
  %1330 = vdwg.mxu0
  %1331 = vmatpush.msra.mxu0 0.0
  %1332 = vmatpush.msra.mxu0 0.0
  %1333 = vmatpush.msra.mxu0 0.0
  %1334 = vmatpush.msra.mxu0 0.0
  %1335 = vmatpush.msra.mxu0 0.0
  %1336 = vmatpush.msra.mxu0 0.0
  %1337 = vmatpush.msra.mxu0 0.0
  %1338 = vmatpush.msra.mxu0 0.0
  %1339 = vmatpush.msra.mxu0 0.0
  %1340 = vmatpush.msra.mxu0 0.0
  %1341 = vmatpush.msra.mxu0 0.0
  %1342 = vmatpush.msra.mxu0 0.0
  %1343 = vmatpush.msra.mxu0 0.0
  %1344 = vmatpush.msra.mxu0 0.0
  %1345 = vmatpush.msra.mxu0 0.0
  %1346 = vmatpush.msra.mxu0 %v1286
  %1347 = vmatmul.f32.gmra.mxu0 %v1277
  %v1348 = vpop.f32.mrf.mxu0
  %v1349 = vadd.f32 0.0, %v1348
  %1350 = vdwg.mxu0
  %1351 = vmatpush.msra.mxu0 0.0
  %1352 = vmatpush.msra.mxu0 0.0
  %1353 = vmatpush.msra.mxu0 0.0
  %1354 = vmatpush.msra.mxu0 0.0
  %1355 = vmatpush.msra.mxu0 0.0
  %1356 = vmatpush.msra.mxu0 0.0
  %1357 = vmatpush.msra.mxu0 0.0
  %1358 = vmatpush.msra.mxu0 0.0
  %1359 = vmatpush.msra.mxu0 0.0
  %1360 = vmatpush.msra.mxu0 0.0
  %1361 = vmatpush.msra.mxu0 0.0
  %1362 = vmatpush.msra.mxu0 0.0
  %1363 = vmatpush.msra.mxu0 0.0
  %1364 = vmatpush.msra.mxu0 0.0
  %1365 = vmatpush.msra.mxu0 0.0
  %1366 = vmatpush.msra.mxu0 %v1289
  %1367 = vmatmul.f32.gmra.mxu0 %v1277
  %v1368 = vpop.f32.mrf.mxu0
  %v1369 = vadd.f32 0.0, %v1368
  %1370 = vdwg.mxu0
  %v1371 = vadd.f32 %v1231, %v1309
  %v1372 = vadd.f32 %v1232, %v1329
  %v1373 = vadd.f32 %v1233, %v1349
  %v1374 = vadd.f32 %v1234, %v1369
  %v1375 = vld [vmem:[%s2] sm:$0xf]
  %1377 = vset.pattern.permute.xlu0 0
  %1378 = vperm.xlu0 %1377, %v1375
  %v1379 = vpop.permute.xlu0 %1378
  %v1381 = vadd.f32 %v1371, %v1379
  %v1382 = vadd.f32 %v1372, %v1379
  %v1383 = vadd.f32 %v1373, %v1379
  %v1384 = vadd.f32 %v1374, %v1379
  %v1389 = vrot.slane %v1382, 4
  %v1390 = vrot.slane %v1384, 4
  %v1391 = vsel %vm239, %v1381, %v1389
  %v1392 = vsel %vm239, %v1383, %v1390
  %1395 = vst [vmem:[#allocation2 + $0x4] sm:$0xff] %v1391
  %1396 = vst [vmem:[#allocation2 + $0xc] sm:$0xff] %v1392
  %v1397 = vld [vmem:[#allocation2] sm:$0xff]
  %v1398 = vld [vmem:[#allocation2 + $0x8] sm:$0xff]
  %v1399 = vld [vmem:[#allocation2 + $0x10] sm:$0xf]
  %1403 = vst [vmem:[#allocation1] ss:$2 sm:$0xff] %v1397
  %s1404 = scalar_lea.vmem [#allocation1], 16
  %1405 = vst [vmem:[%s1404] ss:$2 sm:$0xff] %v1398
  %s1406 = scalar_lea.vmem [#allocation1], 32
  %1407 = vst [vmem:[%s1406] ss:$2 sm:$0xff] %v1399
  %v1408 = vld.sshfl [vmem:[#allocation1] sm:$0xff pattern:$0x75316420]
  %v1409 = vld.sshfl [vmem:[#allocation1 + $0x8] sm:$0xff pattern:$0x75316420]
  %v1410 = vld.sshfl [vmem:[#allocation1 + $0x10] sm:$0xff pattern:$0x75316420]
  %v1411 = vld.sshfl [vmem:[#allocation1 + $0x18] sm:$0xff pattern:$0x75316420]
  %v1412 = vld.sshfl [vmem:[#allocation1 + $0x20] sm:$0xff pattern:$0x75316420]
  %1413 = vrot.lane.b32.xlu0 %v1408, 17
  %v1414 = vpop.permute.xlu0 %1413
  %1415 = vrot.lane.b32.xlu0 %v1409, 17
  %v1416 = vpop.permute.xlu0 %1415
  %1417 = vrot.lane.b32.xlu0 %v1410, 17
  %v1418 = vpop.permute.xlu0 %1417
  %1419 = vrot.lane.b32.xlu0 %v1411, 17
  %v1420 = vpop.permute.xlu0 %1419
  %1421 = vrot.lane.b32.xlu0 %v1412, 17
  %v1422 = vpop.permute.xlu0 %1421
  %v1423 = vsel %vm180, %v1414, %v1416
  %v1424 = vsel %vm180, %v1416, %v1418
  %v1425 = vsel %vm180, %v1418, %v1420
  %v1426 = vsel %vm180, %v1420, %v1422
  %v1431 = vsel %vm134, %v1423, 0.0
  %v1432 = vsel %vm135, %v1424, 0.0
  %v1433 = vsel %vm136, %v1425, 0.0
  %v1434 = vsel %vm137, %v1426, 0.0
  %s1435 = scalar_lea.vmem %s1, 36
  %v1436 = vld [vmem:[%s1435] sm:$0xf]
  %v1437 = vld [vmem:[#allocation2] sm:$0xff]
  %v1438 = vld [vmem:[#allocation2 + $0x8] sm:$0xff]
  %v1439 = vld [vmem:[#allocation2 + $0x10] sm:$0xf]
  %1443 = vst [vmem:[#allocation1] ss:$2 sm:$0xff] %v1437
  %s1444 = scalar_lea.vmem [#allocation1], 16
  %1445 = vst [vmem:[%s1444] ss:$2 sm:$0xff] %v1438
  %s1446 = scalar_lea.vmem [#allocation1], 32
  %1447 = vst [vmem:[%s1446] ss:$2 sm:$0xff] %v1439
  %v1448 = vld.sshfl [vmem:[#allocation1] sm:$0xff pattern:$0x75316420]
  %v1449 = vld.sshfl [vmem:[#allocation1 + $0x8] sm:$0xff pattern:$0x75316420]
  %v1450 = vld.sshfl [vmem:[#allocation1 + $0x10] sm:$0xff pattern:$0x75316420]
  %v1451 = vld.sshfl [vmem:[#allocation1 + $0x18] sm:$0xff pattern:$0x75316420]
  %v1452 = vld.sshfl [vmem:[#allocation1 + $0x20] sm:$0xff pattern:$0x75316420]
  %1453 = vrot.lane.b32.xlu0 %v1448, 16
  %v1454 = vpop.permute.xlu0 %1453
  %1455 = vrot.lane.b32.xlu0 %v1449, 16
  %v1456 = vpop.permute.xlu0 %1455
  %1457 = vrot.lane.b32.xlu0 %v1450, 16
  %v1458 = vpop.permute.xlu0 %1457
  %1459 = vrot.lane.b32.xlu0 %v1451, 16
  %v1460 = vpop.permute.xlu0 %1459
  %1461 = vrot.lane.b32.xlu0 %v1452, 16
  %v1462 = vpop.permute.xlu0 %1461
  %v1463 = vsel %vm220, %v1454, %v1456
  %v1464 = vsel %vm220, %v1456, %v1458
  %v1465 = vsel %vm220, %v1458, %v1460
  %v1466 = vsel %vm220, %v1460, %v1462
  %v1471 = vsel %vm118, %v1463, 0.0
  %v1472 = vsel %vm119, %v1464, 0.0
  %v1473 = vsel %vm120, %v1465, 0.0
  %v1474 = vsel %vm121, %v1466, 0.0
  %s1475 = scalar_lea.vmem %s1, 40
  %v1476 = vld [vmem:[%s1475] sm:$0xf]
  %v1478 = vsel %vm235, %v1476, 0
  %v1481 = vsel %vm239, %v1471, 0
  %v1484 = vsel %vm239, %v1472, 0
  %v1487 = vsel %vm239, %v1473, 0
  %v1490 = vsel %vm239, %v1474, 0
  %1492 = vmatpush.msra.mxu0 0.0
  %1493 = vmatpush.msra.mxu0 0.0
  %1494 = vmatpush.msra.mxu0 0.0
  %1495 = vmatpush.msra.mxu0 0.0
  %1496 = vmatpush.msra.mxu0 0.0
  %1497 = vmatpush.msra.mxu0 0.0
  %1498 = vmatpush.msra.mxu0 0.0
  %1499 = vmatpush.msra.mxu0 0.0
  %1500 = vmatpush.msra.mxu0 0.0
  %1501 = vmatpush.msra.mxu0 0.0
  %1502 = vmatpush.msra.mxu0 0.0
  %1503 = vmatpush.msra.mxu0 0.0
  %1504 = vmatpush.msra.mxu0 0.0
  %1505 = vmatpush.msra.mxu0 0.0
  %1506 = vmatpush.msra.mxu0 0.0
  %1507 = vmatpush.msra.mxu0 %v1481
  %1508 = vmatmul.f32.gmra.mxu0 %v1478
  %v1509 = vpop.f32.mrf.mxu0
  %v1510 = vadd.f32 0.0, %v1509
  %1511 = vdwg.mxu0
  %1512 = vmatpush.msra.mxu0 0.0
  %1513 = vmatpush.msra.mxu0 0.0
  %1514 = vmatpush.msra.mxu0 0.0
  %1515 = vmatpush.msra.mxu0 0.0
  %1516 = vmatpush.msra.mxu0 0.0
  %1517 = vmatpush.msra.mxu0 0.0
  %1518 = vmatpush.msra.mxu0 0.0
  %1519 = vmatpush.msra.mxu0 0.0
  %1520 = vmatpush.msra.mxu0 0.0
  %1521 = vmatpush.msra.mxu0 0.0
  %1522 = vmatpush.msra.mxu0 0.0
  %1523 = vmatpush.msra.mxu0 0.0
  %1524 = vmatpush.msra.mxu0 0.0
  %1525 = vmatpush.msra.mxu0 0.0
  %1526 = vmatpush.msra.mxu0 0.0
  %1527 = vmatpush.msra.mxu0 %v1484
  %1528 = vmatmul.f32.gmra.mxu0 %v1478
  %v1529 = vpop.f32.mrf.mxu0
  %v1530 = vadd.f32 0.0, %v1529
  %1531 = vdwg.mxu0
  %1532 = vmatpush.msra.mxu0 0.0
  %1533 = vmatpush.msra.mxu0 0.0
  %1534 = vmatpush.msra.mxu0 0.0
  %1535 = vmatpush.msra.mxu0 0.0
  %1536 = vmatpush.msra.mxu0 0.0
  %1537 = vmatpush.msra.mxu0 0.0
  %1538 = vmatpush.msra.mxu0 0.0
  %1539 = vmatpush.msra.mxu0 0.0
  %1540 = vmatpush.msra.mxu0 0.0
  %1541 = vmatpush.msra.mxu0 0.0
  %1542 = vmatpush.msra.mxu0 0.0
  %1543 = vmatpush.msra.mxu0 0.0
  %1544 = vmatpush.msra.mxu0 0.0
  %1545 = vmatpush.msra.mxu0 0.0
  %1546 = vmatpush.msra.mxu0 0.0
  %1547 = vmatpush.msra.mxu0 %v1487
  %1548 = vmatmul.f32.gmra.mxu0 %v1478
  %v1549 = vpop.f32.mrf.mxu0
  %v1550 = vadd.f32 0.0, %v1549
  %1551 = vdwg.mxu0
  %1552 = vmatpush.msra.mxu0 0.0
  %1553 = vmatpush.msra.mxu0 0.0
  %1554 = vmatpush.msra.mxu0 0.0
  %1555 = vmatpush.msra.mxu0 0.0
  %1556 = vmatpush.msra.mxu0 0.0
  %1557 = vmatpush.msra.mxu0 0.0
  %1558 = vmatpush.msra.mxu0 0.0
  %1559 = vmatpush.msra.mxu0 0.0
  %1560 = vmatpush.msra.mxu0 0.0
  %1561 = vmatpush.msra.mxu0 0.0
  %1562 = vmatpush.msra.mxu0 0.0
  %1563 = vmatpush.msra.mxu0 0.0
  %1564 = vmatpush.msra.mxu0 0.0
  %1565 = vmatpush.msra.mxu0 0.0
  %1566 = vmatpush.msra.mxu0 0.0
  %1567 = vmatpush.msra.mxu0 %v1490
  %1568 = vmatmul.f32.gmra.mxu0 %v1478
  %v1569 = vpop.f32.mrf.mxu0
  %v1570 = vadd.f32 0.0, %v1569
  %1571 = vdwg.mxu0
  %v1573 = vsel %vm235, %v1436, 0
  %v1576 = vsel %vm239, %v1431, 0
  %v1579 = vsel %vm239, %v1432, 0
  %v1582 = vsel %vm239, %v1433, 0
  %v1585 = vsel %vm239, %v1434, 0
  %1587 = vmatpush.msra.mxu0 0.0
  %1588 = vmatpush.msra.mxu0 0.0
  %1589 = vmatpush.msra.mxu0 0.0
  %1590 = vmatpush.msra.mxu0 0.0
  %1591 = vmatpush.msra.mxu0 0.0
  %1592 = vmatpush.msra.mxu0 0.0
  %1593 = vmatpush.msra.mxu0 0.0
  %1594 = vmatpush.msra.mxu0 0.0
  %1595 = vmatpush.msra.mxu0 0.0
  %1596 = vmatpush.msra.mxu0 0.0
  %1597 = vmatpush.msra.mxu0 0.0
  %1598 = vmatpush.msra.mxu0 0.0
  %1599 = vmatpush.msra.mxu0 0.0
  %1600 = vmatpush.msra.mxu0 0.0
  %1601 = vmatpush.msra.mxu0 0.0
  %1602 = vmatpush.msra.mxu0 %v1576
  %1603 = vmatmul.f32.gmra.mxu0 %v1573
  %v1604 = vpop.f32.mrf.mxu0
  %v1605 = vadd.f32 %v1510, %v1604
  %1606 = vdwg.mxu0
  %1607 = vmatpush.msra.mxu0 0.0
  %1608 = vmatpush.msra.mxu0 0.0
  %1609 = vmatpush.msra.mxu0 0.0
  %1610 = vmatpush.msra.mxu0 0.0
  %1611 = vmatpush.msra.mxu0 0.0
  %1612 = vmatpush.msra.mxu0 0.0
  %1613 = vmatpush.msra.mxu0 0.0
  %1614 = vmatpush.msra.mxu0 0.0
  %1615 = vmatpush.msra.mxu0 0.0
  %1616 = vmatpush.msra.mxu0 0.0
  %1617 = vmatpush.msra.mxu0 0.0
  %1618 = vmatpush.msra.mxu0 0.0
  %1619 = vmatpush.msra.mxu0 0.0
  %1620 = vmatpush.msra.mxu0 0.0
  %1621 = vmatpush.msra.mxu0 0.0
  %1622 = vmatpush.msra.mxu0 %v1579
  %1623 = vmatmul.f32.gmra.mxu0 %v1573
  %v1624 = vpop.f32.mrf.mxu0
  %v1625 = vadd.f32 %v1530, %v1624
  %1626 = vdwg.mxu0
  %1627 = vmatpush.msra.mxu0 0.0
  %1628 = vmatpush.msra.mxu0 0.0
  %1629 = vmatpush.msra.mxu0 0.0
  %1630 = vmatpush.msra.mxu0 0.0
  %1631 = vmatpush.msra.mxu0 0.0
  %1632 = vmatpush.msra.mxu0 0.0
  %1633 = vmatpush.msra.mxu0 0.0
  %1634 = vmatpush.msra.mxu0 0.0
  %1635 = vmatpush.msra.mxu0 0.0
  %1636 = vmatpush.msra.mxu0 0.0
  %1637 = vmatpush.msra.mxu0 0.0
  %1638 = vmatpush.msra.mxu0 0.0
  %1639 = vmatpush.msra.mxu0 0.0
  %1640 = vmatpush.msra.mxu0 0.0
  %1641 = vmatpush.msra.mxu0 0.0
  %1642 = vmatpush.msra.mxu0 %v1582
  %1643 = vmatmul.f32.gmra.mxu0 %v1573
  %v1644 = vpop.f32.mrf.mxu0
  %v1645 = vadd.f32 %v1550, %v1644
  %1646 = vdwg.mxu0
  %1647 = vmatpush.msra.mxu0 0.0
  %1648 = vmatpush.msra.mxu0 0.0
  %1649 = vmatpush.msra.mxu0 0.0
  %1650 = vmatpush.msra.mxu0 0.0
  %1651 = vmatpush.msra.mxu0 0.0
  %1652 = vmatpush.msra.mxu0 0.0
  %1653 = vmatpush.msra.mxu0 0.0
  %1654 = vmatpush.msra.mxu0 0.0
  %1655 = vmatpush.msra.mxu0 0.0
  %1656 = vmatpush.msra.mxu0 0.0
  %1657 = vmatpush.msra.mxu0 0.0
  %1658 = vmatpush.msra.mxu0 0.0
  %1659 = vmatpush.msra.mxu0 0.0
  %1660 = vmatpush.msra.mxu0 0.0
  %1661 = vmatpush.msra.mxu0 0.0
  %1662 = vmatpush.msra.mxu0 %v1585
  %1663 = vmatmul.f32.gmra.mxu0 %v1573
  %v1664 = vpop.f32.mrf.mxu0
  %v1665 = vadd.f32 %v1570, %v1664
  %1666 = vdwg.mxu0
  %v1667 = vld [vmem:[#allocation2] sm:$0xff]
  %v1668 = vld [vmem:[#allocation2 + $0x8] sm:$0xff]
  %v1669 = vld [vmem:[#allocation2 + $0x10] sm:$0xf]
  %1673 = vst [vmem:[#allocation1] ss:$2 sm:$0xff] %v1667
  %s1674 = scalar_lea.vmem [#allocation1], 16
  %1675 = vst [vmem:[%s1674] ss:$2 sm:$0xff] %v1668
  %s1676 = scalar_lea.vmem [#allocation1], 32
  %1677 = vst [vmem:[%s1676] ss:$2 sm:$0xff] %v1669
  %v1678 = vld.sshfl [vmem:[#allocation1] sm:$0xff pattern:$0x75316420]
  %v1679 = vld.sshfl [vmem:[#allocation1 + $0x8] sm:$0xff pattern:$0x75316420]
  %v1680 = vld.sshfl [vmem:[#allocation1 + $0x10] sm:$0xff pattern:$0x75316420]
  %v1681 = vld.sshfl [vmem:[#allocation1 + $0x18] sm:$0xff pattern:$0x75316420]
  %v1682 = vld.sshfl [vmem:[#allocation1 + $0x20] sm:$0xff pattern:$0x75316420]
  %1683 = vrot.lane.b32.xlu0 %v1678, 15
  %v1684 = vpop.permute.xlu0 %1683
  %1685 = vrot.lane.b32.xlu0 %v1679, 15
  %v1686 = vpop.permute.xlu0 %1685
  %1687 = vrot.lane.b32.xlu0 %v1680, 15
  %v1688 = vpop.permute.xlu0 %1687
  %1689 = vrot.lane.b32.xlu0 %v1681, 15
  %v1690 = vpop.permute.xlu0 %1689
  %1691 = vrot.lane.b32.xlu0 %v1682, 15
  %v1692 = vpop.permute.xlu0 %1691
  %v1693 = vsel %vm453, %v1684, %v1686
  %v1694 = vsel %vm453, %v1686, %v1688
  %v1695 = vsel %vm453, %v1688, %v1690
  %v1696 = vsel %vm453, %v1690, %v1692
  %v1701 = vsel %vm138, %v1693, 0.0
  %v1702 = vsel %vm139, %v1694, 0.0
  %v1703 = vsel %vm140, %v1695, 0.0
  %v1704 = vsel %vm141, %v1696, 0.0
  %s1705 = scalar_lea.vmem %s1, 44
  %v1706 = vld [vmem:[%s1705] sm:$0xf]
  %v1708 = vsel %vm235, %v1706, 0
  %v1711 = vsel %vm239, %v1701, 0
  %v1714 = vsel %vm239, %v1702, 0
  %v1717 = vsel %vm239, %v1703, 0
  %v1720 = vsel %vm239, %v1704, 0
  %1722 = vmatpush.msra.mxu0 0.0
  %1723 = vmatpush.msra.mxu0 0.0
  %1724 = vmatpush.msra.mxu0 0.0
  %1725 = vmatpush.msra.mxu0 0.0
  %1726 = vmatpush.msra.mxu0 0.0
  %1727 = vmatpush.msra.mxu0 0.0
  %1728 = vmatpush.msra.mxu0 0.0
  %1729 = vmatpush.msra.mxu0 0.0
  %1730 = vmatpush.msra.mxu0 0.0
  %1731 = vmatpush.msra.mxu0 0.0
  %1732 = vmatpush.msra.mxu0 0.0
  %1733 = vmatpush.msra.mxu0 0.0
  %1734 = vmatpush.msra.mxu0 0.0
  %1735 = vmatpush.msra.mxu0 0.0
  %1736 = vmatpush.msra.mxu0 0.0
  %1737 = vmatpush.msra.mxu0 %v1711
  %1738 = vmatmul.f32.gmra.mxu0 %v1708
  %v1739 = vpop.f32.mrf.mxu0
  %v1740 = vadd.f32 0.0, %v1739
  %1741 = vdwg.mxu0
  %1742 = vmatpush.msra.mxu0 0.0
  %1743 = vmatpush.msra.mxu0 0.0
  %1744 = vmatpush.msra.mxu0 0.0
  %1745 = vmatpush.msra.mxu0 0.0
  %1746 = vmatpush.msra.mxu0 0.0
  %1747 = vmatpush.msra.mxu0 0.0
  %1748 = vmatpush.msra.mxu0 0.0
  %1749 = vmatpush.msra.mxu0 0.0
  %1750 = vmatpush.msra.mxu0 0.0
  %1751 = vmatpush.msra.mxu0 0.0
  %1752 = vmatpush.msra.mxu0 0.0
  %1753 = vmatpush.msra.mxu0 0.0
  %1754 = vmatpush.msra.mxu0 0.0
  %1755 = vmatpush.msra.mxu0 0.0
  %1756 = vmatpush.msra.mxu0 0.0
  %1757 = vmatpush.msra.mxu0 %v1714
  %1758 = vmatmul.f32.gmra.mxu0 %v1708
  %v1759 = vpop.f32.mrf.mxu0
  %v1760 = vadd.f32 0.0, %v1759
  %1761 = vdwg.mxu0
  %1762 = vmatpush.msra.mxu0 0.0
  %1763 = vmatpush.msra.mxu0 0.0
  %1764 = vmatpush.msra.mxu0 0.0
  %1765 = vmatpush.msra.mxu0 0.0
  %1766 = vmatpush.msra.mxu0 0.0
  %1767 = vmatpush.msra.mxu0 0.0
  %1768 = vmatpush.msra.mxu0 0.0
  %1769 = vmatpush.msra.mxu0 0.0
  %1770 = vmatpush.msra.mxu0 0.0
  %1771 = vmatpush.msra.mxu0 0.0
  %1772 = vmatpush.msra.mxu0 0.0
  %1773 = vmatpush.msra.mxu0 0.0
  %1774 = vmatpush.msra.mxu0 0.0
  %1775 = vmatpush.msra.mxu0 0.0
  %1776 = vmatpush.msra.mxu0 0.0
  %1777 = vmatpush.msra.mxu0 %v1717
  %1778 = vmatmul.f32.gmra.mxu0 %v1708
  %v1779 = vpop.f32.mrf.mxu0
  %v1780 = vadd.f32 0.0, %v1779
  %1781 = vdwg.mxu0
  %1782 = vmatpush.msra.mxu0 0.0
  %1783 = vmatpush.msra.mxu0 0.0
  %1784 = vmatpush.msra.mxu0 0.0
  %1785 = vmatpush.msra.mxu0 0.0
  %1786 = vmatpush.msra.mxu0 0.0
  %1787 = vmatpush.msra.mxu0 0.0
  %1788 = vmatpush.msra.mxu0 0.0
  %1789 = vmatpush.msra.mxu0 0.0
  %1790 = vmatpush.msra.mxu0 0.0
  %1791 = vmatpush.msra.mxu0 0.0
  %1792 = vmatpush.msra.mxu0 0.0
  %1793 = vmatpush.msra.mxu0 0.0
  %1794 = vmatpush.msra.mxu0 0.0
  %1795 = vmatpush.msra.mxu0 0.0
  %1796 = vmatpush.msra.mxu0 0.0
  %1797 = vmatpush.msra.mxu0 %v1720
  %1798 = vmatmul.f32.gmra.mxu0 %v1708
  %v1799 = vpop.f32.mrf.mxu0
  %v1800 = vadd.f32 0.0, %v1799
  %1801 = vdwg.mxu0
  %v1802 = vadd.f32 %v1605, %v1740
  %v1803 = vadd.f32 %v1625, %v1760
  %v1804 = vadd.f32 %v1645, %v1780
  %v1805 = vadd.f32 %v1665, %v1800
  %v1806 = vld [vmem:[#allocation2] sm:$0xff]
  %v1807 = vld [vmem:[#allocation2 + $0x8] sm:$0xff]
  %v1808 = vld [vmem:[#allocation2 + $0x10] sm:$0xf]
  %1812 = vst [vmem:[#allocation1] ss:$2 sm:$0xff] %v1806
  %s1813 = scalar_lea.vmem [#allocation1], 16
  %1814 = vst [vmem:[%s1813] ss:$2 sm:$0xff] %v1807
  %s1815 = scalar_lea.vmem [#allocation1], 32
  %1816 = vst [vmem:[%s1815] ss:$2 sm:$0xff] %v1808
  %v1817 = vld.sshfl [vmem:[#allocation1] sm:$0xff pattern:$0x75316420]
  %v1818 = vld.sshfl [vmem:[#allocation1 + $0x8] sm:$0xff pattern:$0x75316420]
  %v1819 = vld.sshfl [vmem:[#allocation1 + $0x10] sm:$0xff pattern:$0x75316420]
  %v1820 = vld.sshfl [vmem:[#allocation1 + $0x18] sm:$0xff pattern:$0x75316420]
  %v1821 = vld.sshfl [vmem:[#allocation1 + $0x20] sm:$0xff pattern:$0x75316420]
  %1822 = vrot.lane.b32.xlu0 %v1817, 1
  %v1823 = vpop.permute.xlu0 %1822
  %1824 = vrot.lane.b32.xlu0 %v1818, 1
  %v1825 = vpop.permute.xlu0 %1824
  %1826 = vrot.lane.b32.xlu0 %v1819, 1
  %v1827 = vpop.permute.xlu0 %1826
  %1828 = vrot.lane.b32.xlu0 %v1820, 1
  %v1829 = vpop.permute.xlu0 %1828
  %1830 = vrot.lane.b32.xlu0 %v1821, 1
  %v1831 = vpop.permute.xlu0 %1830
  %v1832 = vsel %vm593, %v1823, %v1825
  %v1833 = vsel %vm593, %v1825, %v1827
  %v1834 = vsel %vm593, %v1827, %v1829
  %v1835 = vsel %vm593, %v1829, %v1831
  %v1840 = vsel %vm126, %v1832, 0.0
  %v1841 = vsel %vm127, %v1833, 0.0
  %v1842 = vsel %vm128, %v1834, 0.0
  %v1843 = vsel %vm129, %v1835, 0.0
  %s1844 = scalar_lea.vmem %s1, 48
  %v1845 = vld [vmem:[%s1844] sm:$0xf]
  %v1847 = vsel %vm235, %v1845, 0
  %v1850 = vsel %vm239, %v1840, 0
  %v1853 = vsel %vm239, %v1841, 0
  %v1856 = vsel %vm239, %v1842, 0
  %v1859 = vsel %vm239, %v1843, 0
  %1861 = vmatpush.msra.mxu0 0.0
  %1862 = vmatpush.msra.mxu0 0.0
  %1863 = vmatpush.msra.mxu0 0.0
  %1864 = vmatpush.msra.mxu0 0.0
  %1865 = vmatpush.msra.mxu0 0.0
  %1866 = vmatpush.msra.mxu0 0.0
  %1867 = vmatpush.msra.mxu0 0.0
  %1868 = vmatpush.msra.mxu0 0.0
  %1869 = vmatpush.msra.mxu0 0.0
  %1870 = vmatpush.msra.mxu0 0.0
  %1871 = vmatpush.msra.mxu0 0.0
  %1872 = vmatpush.msra.mxu0 0.0
  %1873 = vmatpush.msra.mxu0 0.0
  %1874 = vmatpush.msra.mxu0 0.0
  %1875 = vmatpush.msra.mxu0 0.0
  %1876 = vmatpush.msra.mxu0 %v1850
  %1877 = vmatmul.f32.gmra.mxu0 %v1847
  %v1878 = vpop.f32.mrf.mxu0
  %v1879 = vadd.f32 0.0, %v1878
  %1880 = vdwg.mxu0
  %1881 = vmatpush.msra.mxu0 0.0
  %1882 = vmatpush.msra.mxu0 0.0
  %1883 = vmatpush.msra.mxu0 0.0
  %1884 = vmatpush.msra.mxu0 0.0
  %1885 = vmatpush.msra.mxu0 0.0
  %1886 = vmatpush.msra.mxu0 0.0
  %1887 = vmatpush.msra.mxu0 0.0
  %1888 = vmatpush.msra.mxu0 0.0
  %1889 = vmatpush.msra.mxu0 0.0
  %1890 = vmatpush.msra.mxu0 0.0
  %1891 = vmatpush.msra.mxu0 0.0
  %1892 = vmatpush.msra.mxu0 0.0
  %1893 = vmatpush.msra.mxu0 0.0
  %1894 = vmatpush.msra.mxu0 0.0
  %1895 = vmatpush.msra.mxu0 0.0
  %1896 = vmatpush.msra.mxu0 %v1853
  %1897 = vmatmul.f32.gmra.mxu0 %v1847
  %v1898 = vpop.f32.mrf.mxu0
  %v1899 = vadd.f32 0.0, %v1898
  %1900 = vdwg.mxu0
  %1901 = vmatpush.msra.mxu0 0.0
  %1902 = vmatpush.msra.mxu0 0.0
  %1903 = vmatpush.msra.mxu0 0.0
  %1904 = vmatpush.msra.mxu0 0.0
  %1905 = vmatpush.msra.mxu0 0.0
  %1906 = vmatpush.msra.mxu0 0.0
  %1907 = vmatpush.msra.mxu0 0.0
  %1908 = vmatpush.msra.mxu0 0.0
  %1909 = vmatpush.msra.mxu0 0.0
  %1910 = vmatpush.msra.mxu0 0.0
  %1911 = vmatpush.msra.mxu0 0.0
  %1912 = vmatpush.msra.mxu0 0.0
  %1913 = vmatpush.msra.mxu0 0.0
  %1914 = vmatpush.msra.mxu0 0.0
  %1915 = vmatpush.msra.mxu0 0.0
  %1916 = vmatpush.msra.mxu0 %v1856
  %1917 = vmatmul.f32.gmra.mxu0 %v1847
  %v1918 = vpop.f32.mrf.mxu0
  %v1919 = vadd.f32 0.0, %v1918
  %1920 = vdwg.mxu0
  %1921 = vmatpush.msra.mxu0 0.0
  %1922 = vmatpush.msra.mxu0 0.0
  %1923 = vmatpush.msra.mxu0 0.0
  %1924 = vmatpush.msra.mxu0 0.0
  %1925 = vmatpush.msra.mxu0 0.0
  %1926 = vmatpush.msra.mxu0 0.0
  %1927 = vmatpush.msra.mxu0 0.0
  %1928 = vmatpush.msra.mxu0 0.0
  %1929 = vmatpush.msra.mxu0 0.0
  %1930 = vmatpush.msra.mxu0 0.0
  %1931 = vmatpush.msra.mxu0 0.0
  %1932 = vmatpush.msra.mxu0 0.0
  %1933 = vmatpush.msra.mxu0 0.0
  %1934 = vmatpush.msra.mxu0 0.0
  %1935 = vmatpush.msra.mxu0 0.0
  %1936 = vmatpush.msra.mxu0 %v1859
  %1937 = vmatmul.f32.gmra.mxu0 %v1847
  %v1938 = vpop.f32.mrf.mxu0
  %v1939 = vadd.f32 0.0, %v1938
  %1940 = vdwg.mxu0
  %v1941 = vadd.f32 %v1802, %v1879
  %v1942 = vadd.f32 %v1803, %v1899
  %v1943 = vadd.f32 %v1804, %v1919
  %v1944 = vadd.f32 %v1805, %v1939
  %v1945 = vld [vmem:[#allocation2 + $0x4] sm:$0xff]
  %v1946 = vld [vmem:[#allocation2 + $0xc] sm:$0xff]
  %s1947 = scalar_lea.vmem %s1, 52
  %v1948 = vld [vmem:[%s1947] sm:$0xf]
  %1951 = vst [vmem:[#allocation1] ss:$2 sm:$0xff] %v1945
  %s1952 = scalar_lea.vmem [#allocation1], 16
  %1953 = vst [vmem:[%s1952] ss:$2 sm:$0xff] %v1946
  %v1954 = vld.sshfl [vmem:[#allocation1] sm:$0xff pattern:$0x75316420]
  %v1955 = vld.sshfl [vmem:[#allocation1 + $0x8] sm:$0xff pattern:$0x75316420]
  %v1956 = vld.sshfl [vmem:[#allocation1 + $0x10] sm:$0xff pattern:$0x75316420]
  %v1957 = vld.sshfl [vmem:[#allocation1 + $0x18] sm:$0xff pattern:$0x75316420]
  %v1959 = vsel %vm235, %v1948, 0
  %v1961 = vsel %vm239, %v1954, 0
  %v1963 = vsel %vm239, %v1955, 0
  %v1965 = vsel %vm239, %v1956, 0
  %v1967 = vsel %vm239, %v1957, 0
  %1969 = vmatpush.msra.mxu0 0.0
  %1970 = vmatpush.msra.mxu0 0.0
  %1971 = vmatpush.msra.mxu0 0.0
  %1972 = vmatpush.msra.mxu0 0.0
  %1973 = vmatpush.msra.mxu0 0.0
  %1974 = vmatpush.msra.mxu0 0.0
  %1975 = vmatpush.msra.mxu0 0.0
  %1976 = vmatpush.msra.mxu0 0.0
  %1977 = vmatpush.msra.mxu0 0.0
  %1978 = vmatpush.msra.mxu0 0.0
  %1979 = vmatpush.msra.mxu0 0.0
  %1980 = vmatpush.msra.mxu0 0.0
  %1981 = vmatpush.msra.mxu0 0.0
  %1982 = vmatpush.msra.mxu0 0.0
  %1983 = vmatpush.msra.mxu0 0.0
  %1984 = vmatpush.msra.mxu0 %v1961
  %1985 = vmatmul.f32.gmra.mxu0 %v1959
  %v1986 = vpop.f32.mrf.mxu0
  %v1987 = vadd.f32 0.0, %v1986
  %1988 = vdwg.mxu0
  %1989 = vmatpush.msra.mxu0 0.0
  %1990 = vmatpush.msra.mxu0 0.0
  %1991 = vmatpush.msra.mxu0 0.0
  %1992 = vmatpush.msra.mxu0 0.0
  %1993 = vmatpush.msra.mxu0 0.0
  %1994 = vmatpush.msra.mxu0 0.0
  %1995 = vmatpush.msra.mxu0 0.0
  %1996 = vmatpush.msra.mxu0 0.0
  %1997 = vmatpush.msra.mxu0 0.0
  %1998 = vmatpush.msra.mxu0 0.0
  %1999 = vmatpush.msra.mxu0 0.0
  %2000 = vmatpush.msra.mxu0 0.0
  %2001 = vmatpush.msra.mxu0 0.0
  %2002 = vmatpush.msra.mxu0 0.0
  %2003 = vmatpush.msra.mxu0 0.0
  %2004 = vmatpush.msra.mxu0 %v1963
  %2005 = vmatmul.f32.gmra.mxu0 %v1959
  %v2006 = vpop.f32.mrf.mxu0
  %v2007 = vadd.f32 0.0, %v2006
  %2008 = vdwg.mxu0
  %2009 = vmatpush.msra.mxu0 0.0
  %2010 = vmatpush.msra.mxu0 0.0
  %2011 = vmatpush.msra.mxu0 0.0
  %2012 = vmatpush.msra.mxu0 0.0
  %2013 = vmatpush.msra.mxu0 0.0
  %2014 = vmatpush.msra.mxu0 0.0
  %2015 = vmatpush.msra.mxu0 0.0
  %2016 = vmatpush.msra.mxu0 0.0
  %2017 = vmatpush.msra.mxu0 0.0
  %2018 = vmatpush.msra.mxu0 0.0
  %2019 = vmatpush.msra.mxu0 0.0
  %2020 = vmatpush.msra.mxu0 0.0
  %2021 = vmatpush.msra.mxu0 0.0
  %2022 = vmatpush.msra.mxu0 0.0
  %2023 = vmatpush.msra.mxu0 0.0
  %2024 = vmatpush.msra.mxu0 %v1965
  %2025 = vmatmul.f32.gmra.mxu0 %v1959
  %v2026 = vpop.f32.mrf.mxu0
  %v2027 = vadd.f32 0.0, %v2026
  %2028 = vdwg.mxu0
  %2029 = vmatpush.msra.mxu0 0.0
  %2030 = vmatpush.msra.mxu0 0.0
  %2031 = vmatpush.msra.mxu0 0.0
  %2032 = vmatpush.msra.mxu0 0.0
  %2033 = vmatpush.msra.mxu0 0.0
  %2034 = vmatpush.msra.mxu0 0.0
  %2035 = vmatpush.msra.mxu0 0.0
  %2036 = vmatpush.msra.mxu0 0.0
  %2037 = vmatpush.msra.mxu0 0.0
  %2038 = vmatpush.msra.mxu0 0.0
  %2039 = vmatpush.msra.mxu0 0.0
  %2040 = vmatpush.msra.mxu0 0.0
  %2041 = vmatpush.msra.mxu0 0.0
  %2042 = vmatpush.msra.mxu0 0.0
  %2043 = vmatpush.msra.mxu0 0.0
  %2044 = vmatpush.msra.mxu0 %v1967
  %2045 = vmatmul.f32.gmra.mxu0 %v1959
  %v2046 = vpop.f32.mrf.mxu0
  %v2047 = vadd.f32 0.0, %v2046
  %2048 = vdwg.mxu0
  %v2049 = vadd.f32 %v1941, %v1987
  %v2050 = vadd.f32 %v1942, %v2007
  %v2051 = vadd.f32 %v1943, %v2027
  %v2052 = vadd.f32 %v1944, %v2047
  %v2053 = vld [vmem:[#allocation2 + $0x4] sm:$0xff]
  %v2054 = vld [vmem:[#allocation2 + $0xc] sm:$0xff]
  %v2055 = vld [vmem:[#allocation2 + $0x14] sm:$0xf]
  %2059 = vst [vmem:[#allocation1] ss:$2 sm:$0xff] %v2053
  %s2060 = scalar_lea.vmem [#allocation1], 16
  %2061 = vst [vmem:[%s2060] ss:$2 sm:$0xff] %v2054
  %s2062 = scalar_lea.vmem [#allocation1], 32
  %2063 = vst [vmem:[%s2062] ss:$2 sm:$0xff] %v2055
  %v2064 = vld.sshfl [vmem:[#allocation1] sm:$0xff pattern:$0x75316420]
  %v2065 = vld.sshfl [vmem:[#allocation1 + $0x8] sm:$0xff pattern:$0x75316420]
  %v2066 = vld.sshfl [vmem:[#allocation1 + $0x10] sm:$0xff pattern:$0x75316420]
  %v2067 = vld.sshfl [vmem:[#allocation1 + $0x18] sm:$0xff pattern:$0x75316420]
  %v2068 = vld.sshfl [vmem:[#allocation1 + $0x20] sm:$0xff pattern:$0x75316420]
  %2069 = vrot.lane.b32.xlu0 %v2064, 127
  %v2070 = vpop.permute.xlu0 %2069
  %2071 = vrot.lane.b32.xlu0 %v2065, 127
  %v2072 = vpop.permute.xlu0 %2071
  %2073 = vrot.lane.b32.xlu0 %v2066, 127
  %v2074 = vpop.permute.xlu0 %2073
  %2075 = vrot.lane.b32.xlu0 %v2067, 127
  %v2076 = vpop.permute.xlu0 %2075
  %2077 = vrot.lane.b32.xlu0 %v2068, 127
  %v2078 = vpop.permute.xlu0 %2077
  %v2079 = vsel %vm841, %v2070, %v2072
  %v2080 = vsel %vm841, %v2072, %v2074
  %v2081 = vsel %vm841, %v2074, %v2076
  %v2082 = vsel %vm841, %v2076, %v2078
  %v2087 = vsel %vm130, %v2079, 0.0
  %v2088 = vsel %vm131, %v2080, 0.0
  %v2089 = vsel %vm132, %v2081, 0.0
  %v2090 = vsel %vm133, %v2082, 0.0
  %s2091 = scalar_lea.vmem %s1, 56
  %v2092 = vld [vmem:[%s2091] sm:$0xf]
  %v2094 = vsel %vm235, %v2092, 0
  %v2097 = vsel %vm239, %v2087, 0
  %v2100 = vsel %vm239, %v2088, 0
  %v2103 = vsel %vm239, %v2089, 0
  %v2106 = vsel %vm239, %v2090, 0
  %2108 = vmatpush.msra.mxu0 0.0
  %2109 = vmatpush.msra.mxu0 0.0
  %2110 = vmatpush.msra.mxu0 0.0
  %2111 = vmatpush.msra.mxu0 0.0
  %2112 = vmatpush.msra.mxu0 0.0
  %2113 = vmatpush.msra.mxu0 0.0
  %2114 = vmatpush.msra.mxu0 0.0
  %2115 = vmatpush.msra.mxu0 0.0
  %2116 = vmatpush.msra.mxu0 0.0
  %2117 = vmatpush.msra.mxu0 0.0
  %2118 = vmatpush.msra.mxu0 0.0
  %2119 = vmatpush.msra.mxu0 0.0
  %2120 = vmatpush.msra.mxu0 0.0
  %2121 = vmatpush.msra.mxu0 0.0
  %2122 = vmatpush.msra.mxu0 0.0
  %2123 = vmatpush.msra.mxu0 %v2097
  %2124 = vmatmul.f32.gmra.mxu0 %v2094
  %v2125 = vpop.f32.mrf.mxu0
  %v2126 = vadd.f32 0.0, %v2125
  %2127 = vdwg.mxu0
  %2128 = vmatpush.msra.mxu0 0.0
  %2129 = vmatpush.msra.mxu0 0.0
  %2130 = vmatpush.msra.mxu0 0.0
  %2131 = vmatpush.msra.mxu0 0.0
  %2132 = vmatpush.msra.mxu0 0.0
  %2133 = vmatpush.msra.mxu0 0.0
  %2134 = vmatpush.msra.mxu0 0.0
  %2135 = vmatpush.msra.mxu0 0.0
  %2136 = vmatpush.msra.mxu0 0.0
  %2137 = vmatpush.msra.mxu0 0.0
  %2138 = vmatpush.msra.mxu0 0.0
  %2139 = vmatpush.msra.mxu0 0.0
  %2140 = vmatpush.msra.mxu0 0.0
  %2141 = vmatpush.msra.mxu0 0.0
  %2142 = vmatpush.msra.mxu0 0.0
  %2143 = vmatpush.msra.mxu0 %v2100
  %2144 = vmatmul.f32.gmra.mxu0 %v2094
  %v2145 = vpop.f32.mrf.mxu0
  %v2146 = vadd.f32 0.0, %v2145
  %2147 = vdwg.mxu0
  %2148 = vmatpush.msra.mxu0 0.0
  %2149 = vmatpush.msra.mxu0 0.0
  %2150 = vmatpush.msra.mxu0 0.0
  %2151 = vmatpush.msra.mxu0 0.0
  %2152 = vmatpush.msra.mxu0 0.0
  %2153 = vmatpush.msra.mxu0 0.0
  %2154 = vmatpush.msra.mxu0 0.0
  %2155 = vmatpush.msra.mxu0 0.0
  %2156 = vmatpush.msra.mxu0 0.0
  %2157 = vmatpush.msra.mxu0 0.0
  %2158 = vmatpush.msra.mxu0 0.0
  %2159 = vmatpush.msra.mxu0 0.0
  %2160 = vmatpush.msra.mxu0 0.0
  %2161 = vmatpush.msra.mxu0 0.0
  %2162 = vmatpush.msra.mxu0 0.0
  %2163 = vmatpush.msra.mxu0 %v2103
  %2164 = vmatmul.f32.gmra.mxu0 %v2094
  %v2165 = vpop.f32.mrf.mxu0
  %v2166 = vadd.f32 0.0, %v2165
  %2167 = vdwg.mxu0
  %2168 = vmatpush.msra.mxu0 0.0
  %2169 = vmatpush.msra.mxu0 0.0
  %2170 = vmatpush.msra.mxu0 0.0
  %2171 = vmatpush.msra.mxu0 0.0
  %2172 = vmatpush.msra.mxu0 0.0
  %2173 = vmatpush.msra.mxu0 0.0
  %2174 = vmatpush.msra.mxu0 0.0
  %2175 = vmatpush.msra.mxu0 0.0
  %2176 = vmatpush.msra.mxu0 0.0
  %2177 = vmatpush.msra.mxu0 0.0
  %2178 = vmatpush.msra.mxu0 0.0
  %2179 = vmatpush.msra.mxu0 0.0
  %2180 = vmatpush.msra.mxu0 0.0
  %2181 = vmatpush.msra.mxu0 0.0
  %2182 = vmatpush.msra.mxu0 0.0
  %2183 = vmatpush.msra.mxu0 %v2106
  %2184 = vmatmul.f32.gmra.mxu0 %v2094
  %v2185 = vpop.f32.mrf.mxu0
  %v2186 = vadd.f32 0.0, %v2185
  %2187 = vdwg.mxu0
  %v2188 = vadd.f32 %v2049, %v2126
  %v2189 = vadd.f32 %v2050, %v2146
  %v2190 = vadd.f32 %v2051, %v2166
  %v2191 = vadd.f32 %v2052, %v2186
  %v2192 = vld [vmem:[#allocation2 + $0x4] sm:$0xff]
  %v2193 = vld [vmem:[#allocation2 + $0xc] sm:$0xff]
  %v2194 = vld [vmem:[#allocation2 + $0x14] sm:$0xf]
  %2198 = vst [vmem:[#allocation1] ss:$2 sm:$0xff] %v2192
  %s2199 = scalar_lea.vmem [#allocation1], 16
  %2200 = vst [vmem:[%s2199] ss:$2 sm:$0xff] %v2193
  %s2201 = scalar_lea.vmem [#allocation1], 32
  %2202 = vst [vmem:[%s2201] ss:$2 sm:$0xff] %v2194
  %v2203 = vld.sshfl [vmem:[#allocation1] sm:$0xff pattern:$0x75316420]
  %v2204 = vld.sshfl [vmem:[#allocation1 + $0x8] sm:$0xff pattern:$0x75316420]
  %v2205 = vld.sshfl [vmem:[#allocation1 + $0x10] sm:$0xff pattern:$0x75316420]
  %v2206 = vld.sshfl [vmem:[#allocation1 + $0x18] sm:$0xff pattern:$0x75316420]
  %v2207 = vld.sshfl [vmem:[#allocation1 + $0x20] sm:$0xff pattern:$0x75316420]
  %2208 = vrot.lane.b32.xlu0 %v2203, 113
  %v2209 = vpop.permute.xlu0 %2208
  %2210 = vrot.lane.b32.xlu0 %v2204, 113
  %v2211 = vpop.permute.xlu0 %2210
  %2212 = vrot.lane.b32.xlu0 %v2205, 113
  %v2213 = vpop.permute.xlu0 %2212
  %2214 = vrot.lane.b32.xlu0 %v2206, 113
  %v2215 = vpop.permute.xlu0 %2214
  %2216 = vrot.lane.b32.xlu0 %v2207, 113
  %v2217 = vpop.permute.xlu0 %2216
  %v2218 = vsel %vm981, %v2209, %v2211
  %v2219 = vsel %vm981, %v2211, %v2213
  %v2220 = vsel %vm981, %v2213, %v2215
  %v2221 = vsel %vm981, %v2215, %v2217
  %v2226 = vsel %vm142, %v2218, 0.0
  %v2227 = vsel %vm143, %v2219, 0.0
  %v2228 = vsel %vm144, %v2220, 0.0
  %v2229 = vsel %vm145, %v2221, 0.0
  %s2230 = scalar_lea.vmem %s1, 60
  %v2231 = vld [vmem:[%s2230] sm:$0xf]
  %v2233 = vsel %vm235, %v2231, 0
  %v2236 = vsel %vm239, %v2226, 0
  %v2239 = vsel %vm239, %v2227, 0
  %v2242 = vsel %vm239, %v2228, 0
  %v2245 = vsel %vm239, %v2229, 0
  %2247 = vmatpush.msra.mxu0 0.0
  %2248 = vmatpush.msra.mxu0 0.0
  %2249 = vmatpush.msra.mxu0 0.0
  %2250 = vmatpush.msra.mxu0 0.0
  %2251 = vmatpush.msra.mxu0 0.0
  %2252 = vmatpush.msra.mxu0 0.0
  %2253 = vmatpush.msra.mxu0 0.0
  %2254 = vmatpush.msra.mxu0 0.0
  %2255 = vmatpush.msra.mxu0 0.0
  %2256 = vmatpush.msra.mxu0 0.0
  %2257 = vmatpush.msra.mxu0 0.0
  %2258 = vmatpush.msra.mxu0 0.0
  %2259 = vmatpush.msra.mxu0 0.0
  %2260 = vmatpush.msra.mxu0 0.0
  %2261 = vmatpush.msra.mxu0 0.0
  %2262 = vmatpush.msra.mxu0 %v2236
  %2263 = vmatmul.f32.gmra.mxu0 %v2233
  %v2264 = vpop.f32.mrf.mxu0
  %v2265 = vadd.f32 0.0, %v2264
  %2266 = vdwg.mxu0
  %2267 = vmatpush.msra.mxu0 0.0
  %2268 = vmatpush.msra.mxu0 0.0
  %2269 = vmatpush.msra.mxu0 0.0
  %2270 = vmatpush.msra.mxu0 0.0
  %2271 = vmatpush.msra.mxu0 0.0
  %2272 = vmatpush.msra.mxu0 0.0
  %2273 = vmatpush.msra.mxu0 0.0
  %2274 = vmatpush.msra.mxu0 0.0
  %2275 = vmatpush.msra.mxu0 0.0
  %2276 = vmatpush.msra.mxu0 0.0
  %2277 = vmatpush.msra.mxu0 0.0
  %2278 = vmatpush.msra.mxu0 0.0
  %2279 = vmatpush.msra.mxu0 0.0
  %2280 = vmatpush.msra.mxu0 0.0
  %2281 = vmatpush.msra.mxu0 0.0
  %2282 = vmatpush.msra.mxu0 %v2239
  %2283 = vmatmul.f32.gmra.mxu0 %v2233
  %v2284 = vpop.f32.mrf.mxu0
  %v2285 = vadd.f32 0.0, %v2284
  %2286 = vdwg.mxu0
  %2287 = vmatpush.msra.mxu0 0.0
  %2288 = vmatpush.msra.mxu0 0.0
  %2289 = vmatpush.msra.mxu0 0.0
  %2290 = vmatpush.msra.mxu0 0.0
  %2291 = vmatpush.msra.mxu0 0.0
  %2292 = vmatpush.msra.mxu0 0.0
  %2293 = vmatpush.msra.mxu0 0.0
  %2294 = vmatpush.msra.mxu0 0.0
  %2295 = vmatpush.msra.mxu0 0.0
  %2296 = vmatpush.msra.mxu0 0.0
  %2297 = vmatpush.msra.mxu0 0.0
  %2298 = vmatpush.msra.mxu0 0.0
  %2299 = vmatpush.msra.mxu0 0.0
  %2300 = vmatpush.msra.mxu0 0.0
  %2301 = vmatpush.msra.mxu0 0.0
  %2302 = vmatpush.msra.mxu0 %v2242
  %2303 = vmatmul.f32.gmra.mxu0 %v2233
  %v2304 = vpop.f32.mrf.mxu0
  %v2305 = vadd.f32 0.0, %v2304
  %2306 = vdwg.mxu0
  %2307 = vmatpush.msra.mxu0 0.0
  %2308 = vmatpush.msra.mxu0 0.0
  %2309 = vmatpush.msra.mxu0 0.0
  %2310 = vmatpush.msra.mxu0 0.0
  %2311 = vmatpush.msra.mxu0 0.0
  %2312 = vmatpush.msra.mxu0 0.0
  %2313 = vmatpush.msra.mxu0 0.0
  %2314 = vmatpush.msra.mxu0 0.0
  %2315 = vmatpush.msra.mxu0 0.0
  %2316 = vmatpush.msra.mxu0 0.0
  %2317 = vmatpush.msra.mxu0 0.0
  %2318 = vmatpush.msra.mxu0 0.0
  %2319 = vmatpush.msra.mxu0 0.0
  %2320 = vmatpush.msra.mxu0 0.0
  %2321 = vmatpush.msra.mxu0 0.0
  %2322 = vmatpush.msra.mxu0 %v2245
  %2323 = vmatmul.f32.gmra.mxu0 %v2233
  %v2324 = vpop.f32.mrf.mxu0
  %v2325 = vadd.f32 0.0, %v2324
  %2326 = vdwg.mxu0
  %v2327 = vadd.f32 %v2188, %v2265
  %v2328 = vadd.f32 %v2189, %v2285
  %v2329 = vadd.f32 %v2190, %v2305
  %v2330 = vadd.f32 %v2191, %v2325
  %v2331 = vld [vmem:[#allocation2 + $0x4] sm:$0xff]
  %v2332 = vld [vmem:[#allocation2 + $0xc] sm:$0xff]
  %v2333 = vld [vmem:[#allocation2 + $0x14] sm:$0xf]
  %2337 = vst [vmem:[#allocation1] ss:$2 sm:$0xff] %v2331
  %s2338 = scalar_lea.vmem [#allocation1], 16
  %2339 = vst [vmem:[%s2338] ss:$2 sm:$0xff] %v2332
  %s2340 = scalar_lea.vmem [#allocation1], 32
  %2341 = vst [vmem:[%s2340] ss:$2 sm:$0xff] %v2333
  %v2342 = vld.sshfl [vmem:[#allocation1] sm:$0xff pattern:$0x75316420]
  %v2343 = vld.sshfl [vmem:[#allocation1 + $0x8] sm:$0xff pattern:$0x75316420]
  %v2344 = vld.sshfl [vmem:[#allocation1 + $0x10] sm:$0xff pattern:$0x75316420]
  %v2345 = vld.sshfl [vmem:[#allocation1 + $0x18] sm:$0xff pattern:$0x75316420]
  %v2346 = vld.sshfl [vmem:[#allocation1 + $0x20] sm:$0xff pattern:$0x75316420]
  %2347 = vrot.lane.b32.xlu0 %v2342, 112
  %v2348 = vpop.permute.xlu0 %2347
  %2349 = vrot.lane.b32.xlu0 %v2343, 112
  %v2350 = vpop.permute.xlu0 %2349
  %2351 = vrot.lane.b32.xlu0 %v2344, 112
  %v2352 = vpop.permute.xlu0 %2351
  %2353 = vrot.lane.b32.xlu0 %v2345, 112
  %v2354 = vpop.permute.xlu0 %2353
  %2355 = vrot.lane.b32.xlu0 %v2346, 112
  %v2356 = vpop.permute.xlu0 %2355
  %v2357 = vsel %vm1121, %v2348, %v2350
  %v2358 = vsel %vm1121, %v2350, %v2352
  %v2359 = vsel %vm1121, %v2352, %v2354
  %v2360 = vsel %vm1121, %v2354, %v2356
  %v2365 = vsel %vm122, %v2357, 0.0
  %v2366 = vsel %vm123, %v2358, 0.0
  %v2367 = vsel %vm124, %v2359, 0.0
  %v2368 = vsel %vm125, %v2360, 0.0
  %s2369 = scalar_lea.vmem %s1, 64
  %v2370 = vld [vmem:[%s2369] sm:$0xf]
  %v2372 = vsel %vm235, %v2370, 0
  %v2375 = vsel %vm239, %v2365, 0
  %v2378 = vsel %vm239, %v2366, 0
  %v2381 = vsel %vm239, %v2367, 0
  %v2384 = vsel %vm239, %v2368, 0
  %2386 = vmatpush.msra.mxu0 0.0
  %2387 = vmatpush.msra.mxu0 0.0
  %2388 = vmatpush.msra.mxu0 0.0
  %2389 = vmatpush.msra.mxu0 0.0
  %2390 = vmatpush.msra.mxu0 0.0
  %2391 = vmatpush.msra.mxu0 0.0
  %2392 = vmatpush.msra.mxu0 0.0
  %2393 = vmatpush.msra.mxu0 0.0
  %2394 = vmatpush.msra.mxu0 0.0
  %2395 = vmatpush.msra.mxu0 0.0
  %2396 = vmatpush.msra.mxu0 0.0
  %2397 = vmatpush.msra.mxu0 0.0
  %2398 = vmatpush.msra.mxu0 0.0
  %2399 = vmatpush.msra.mxu0 0.0
  %2400 = vmatpush.msra.mxu0 0.0
  %2401 = vmatpush.msra.mxu0 %v2375
  %2402 = vmatmul.f32.gmra.mxu0 %v2372
  %v2403 = vpop.f32.mrf.mxu0
  %v2404 = vadd.f32 0.0, %v2403
  %2405 = vdwg.mxu0
  %2406 = vmatpush.msra.mxu0 0.0
  %2407 = vmatpush.msra.mxu0 0.0
  %2408 = vmatpush.msra.mxu0 0.0
  %2409 = vmatpush.msra.mxu0 0.0
  %2410 = vmatpush.msra.mxu0 0.0
  %2411 = vmatpush.msra.mxu0 0.0
  %2412 = vmatpush.msra.mxu0 0.0
  %2413 = vmatpush.msra.mxu0 0.0
  %2414 = vmatpush.msra.mxu0 0.0
  %2415 = vmatpush.msra.mxu0 0.0
  %2416 = vmatpush.msra.mxu0 0.0
  %2417 = vmatpush.msra.mxu0 0.0
  %2418 = vmatpush.msra.mxu0 0.0
  %2419 = vmatpush.msra.mxu0 0.0
  %2420 = vmatpush.msra.mxu0 0.0
  %2421 = vmatpush.msra.mxu0 %v2378
  %2422 = vmatmul.f32.gmra.mxu0 %v2372
  %v2423 = vpop.f32.mrf.mxu0
  %v2424 = vadd.f32 0.0, %v2423
  %2425 = vdwg.mxu0
  %2426 = vmatpush.msra.mxu0 0.0
  %2427 = vmatpush.msra.mxu0 0.0
  %2428 = vmatpush.msra.mxu0 0.0
  %2429 = vmatpush.msra.mxu0 0.0
  %2430 = vmatpush.msra.mxu0 0.0
  %2431 = vmatpush.msra.mxu0 0.0
  %2432 = vmatpush.msra.mxu0 0.0
  %2433 = vmatpush.msra.mxu0 0.0
  %2434 = vmatpush.msra.mxu0 0.0
  %2435 = vmatpush.msra.mxu0 0.0
  %2436 = vmatpush.msra.mxu0 0.0
  %2437 = vmatpush.msra.mxu0 0.0
  %2438 = vmatpush.msra.mxu0 0.0
  %2439 = vmatpush.msra.mxu0 0.0
  %2440 = vmatpush.msra.mxu0 0.0
  %2441 = vmatpush.msra.mxu0 %v2381
  %2442 = vmatmul.f32.gmra.mxu0 %v2372
  %v2443 = vpop.f32.mrf.mxu0
  %v2444 = vadd.f32 0.0, %v2443
  %2445 = vdwg.mxu0
  %2446 = vmatpush.msra.mxu0 0.0
  %2447 = vmatpush.msra.mxu0 0.0
  %2448 = vmatpush.msra.mxu0 0.0
  %2449 = vmatpush.msra.mxu0 0.0
  %2450 = vmatpush.msra.mxu0 0.0
  %2451 = vmatpush.msra.mxu0 0.0
  %2452 = vmatpush.msra.mxu0 0.0
  %2453 = vmatpush.msra.mxu0 0.0
  %2454 = vmatpush.msra.mxu0 0.0
  %2455 = vmatpush.msra.mxu0 0.0
  %2456 = vmatpush.msra.mxu0 0.0
  %2457 = vmatpush.msra.mxu0 0.0
  %2458 = vmatpush.msra.mxu0 0.0
  %2459 = vmatpush.msra.mxu0 0.0
  %2460 = vmatpush.msra.mxu0 0.0
  %2461 = vmatpush.msra.mxu0 %v2384
  %2462 = vmatmul.f32.gmra.mxu0 %v2372
  %v2463 = vpop.f32.mrf.mxu0
  %v2464 = vadd.f32 0.0, %v2463
  %2465 = vdwg.mxu0
  %v2466 = vadd.f32 %v2327, %v2404
  %v2467 = vadd.f32 %v2328, %v2424
  %v2468 = vadd.f32 %v2329, %v2444
  %v2469 = vadd.f32 %v2330, %v2464
  %v2470 = vld [vmem:[#allocation2 + $0x4] sm:$0xff]
  %v2471 = vld [vmem:[#allocation2 + $0xc] sm:$0xff]
  %v2472 = vld [vmem:[#allocation2 + $0x14] sm:$0xf]
  %2476 = vst [vmem:[#allocation1] ss:$2 sm:$0xff] %v2470
  %s2477 = scalar_lea.vmem [#allocation1], 16
  %2478 = vst [vmem:[%s2477] ss:$2 sm:$0xff] %v2471
  %s2479 = scalar_lea.vmem [#allocation1], 32
  %2480 = vst [vmem:[%s2479] ss:$2 sm:$0xff] %v2472
  %v2481 = vld.sshfl [vmem:[#allocation1] sm:$0xff pattern:$0x75316420]
  %v2482 = vld.sshfl [vmem:[#allocation1 + $0x8] sm:$0xff pattern:$0x75316420]
  %v2483 = vld.sshfl [vmem:[#allocation1 + $0x10] sm:$0xff pattern:$0x75316420]
  %v2484 = vld.sshfl [vmem:[#allocation1 + $0x18] sm:$0xff pattern:$0x75316420]
  %v2485 = vld.sshfl [vmem:[#allocation1 + $0x20] sm:$0xff pattern:$0x75316420]
  %2486 = vrot.lane.b32.xlu0 %v2481, 111
  %v2487 = vpop.permute.xlu0 %2486
  %2488 = vrot.lane.b32.xlu0 %v2482, 111
  %v2489 = vpop.permute.xlu0 %2488
  %2490 = vrot.lane.b32.xlu0 %v2483, 111
  %v2491 = vpop.permute.xlu0 %2490
  %2492 = vrot.lane.b32.xlu0 %v2484, 111
  %v2493 = vpop.permute.xlu0 %2492
  %2494 = vrot.lane.b32.xlu0 %v2485, 111
  %v2495 = vpop.permute.xlu0 %2494
  %v2496 = vsel %vm1261, %v2487, %v2489
  %v2497 = vsel %vm1261, %v2489, %v2491
  %v2498 = vsel %vm1261, %v2491, %v2493
  %v2499 = vsel %vm1261, %v2493, %v2495
  %v2504 = vsel %vm146, %v2496, 0.0
  %v2505 = vsel %vm147, %v2497, 0.0
  %v2506 = vsel %vm148, %v2498, 0.0
  %v2507 = vsel %vm149, %v2499, 0.0
  %s2508 = scalar_lea.vmem %s1, 68
  %v2509 = vld [vmem:[%s2508] sm:$0xf]
  %v2511 = vsel %vm235, %v2509, 0
  %v2514 = vsel %vm239, %v2504, 0
  %v2517 = vsel %vm239, %v2505, 0
  %v2520 = vsel %vm239, %v2506, 0
  %v2523 = vsel %vm239, %v2507, 0
  %2525 = vmatpush.msra.mxu0 0.0
  %2526 = vmatpush.msra.mxu0 0.0
  %2527 = vmatpush.msra.mxu0 0.0
  %2528 = vmatpush.msra.mxu0 0.0
  %2529 = vmatpush.msra.mxu0 0.0
  %2530 = vmatpush.msra.mxu0 0.0
  %2531 = vmatpush.msra.mxu0 0.0
  %2532 = vmatpush.msra.mxu0 0.0
  %2533 = vmatpush.msra.mxu0 0.0
  %2534 = vmatpush.msra.mxu0 0.0
  %2535 = vmatpush.msra.mxu0 0.0
  %2536 = vmatpush.msra.mxu0 0.0
  %2537 = vmatpush.msra.mxu0 0.0
  %2538 = vmatpush.msra.mxu0 0.0
  %2539 = vmatpush.msra.mxu0 0.0
  %2540 = vmatpush.msra.mxu0 %v2514
  %2541 = vmatmul.f32.gmra.mxu0 %v2511
  %v2542 = vpop.f32.mrf.mxu0
  %v2543 = vadd.f32 0.0, %v2542
  %2544 = vdwg.mxu0
  %2545 = vmatpush.msra.mxu0 0.0
  %2546 = vmatpush.msra.mxu0 0.0
  %2547 = vmatpush.msra.mxu0 0.0
  %2548 = vmatpush.msra.mxu0 0.0
  %2549 = vmatpush.msra.mxu0 0.0
  %2550 = vmatpush.msra.mxu0 0.0
  %2551 = vmatpush.msra.mxu0 0.0
  %2552 = vmatpush.msra.mxu0 0.0
  %2553 = vmatpush.msra.mxu0 0.0
  %2554 = vmatpush.msra.mxu0 0.0
  %2555 = vmatpush.msra.mxu0 0.0
  %2556 = vmatpush.msra.mxu0 0.0
  %2557 = vmatpush.msra.mxu0 0.0
  %2558 = vmatpush.msra.mxu0 0.0
  %2559 = vmatpush.msra.mxu0 0.0
  %2560 = vmatpush.msra.mxu0 %v2517
  %2561 = vmatmul.f32.gmra.mxu0 %v2511
  %v2562 = vpop.f32.mrf.mxu0
  %v2563 = vadd.f32 0.0, %v2562
  %2564 = vdwg.mxu0
  %2565 = vmatpush.msra.mxu0 0.0
  %2566 = vmatpush.msra.mxu0 0.0
  %2567 = vmatpush.msra.mxu0 0.0
  %2568 = vmatpush.msra.mxu0 0.0
  %2569 = vmatpush.msra.mxu0 0.0
  %2570 = vmatpush.msra.mxu0 0.0
  %2571 = vmatpush.msra.mxu0 0.0
  %2572 = vmatpush.msra.mxu0 0.0
  %2573 = vmatpush.msra.mxu0 0.0
  %2574 = vmatpush.msra.mxu0 0.0
  %2575 = vmatpush.msra.mxu0 0.0
  %2576 = vmatpush.msra.mxu0 0.0
  %2577 = vmatpush.msra.mxu0 0.0
  %2578 = vmatpush.msra.mxu0 0.0
  %2579 = vmatpush.msra.mxu0 0.0
  %2580 = vmatpush.msra.mxu0 %v2520
  %2581 = vmatmul.f32.gmra.mxu0 %v2511
  %v2582 = vpop.f32.mrf.mxu0
  %v2583 = vadd.f32 0.0, %v2582
  %2584 = vdwg.mxu0
  %2585 = vmatpush.msra.mxu0 0.0
  %2586 = vmatpush.msra.mxu0 0.0
  %2587 = vmatpush.msra.mxu0 0.0
  %2588 = vmatpush.msra.mxu0 0.0
  %2589 = vmatpush.msra.mxu0 0.0
  %2590 = vmatpush.msra.mxu0 0.0
  %2591 = vmatpush.msra.mxu0 0.0
  %2592 = vmatpush.msra.mxu0 0.0
  %2593 = vmatpush.msra.mxu0 0.0
  %2594 = vmatpush.msra.mxu0 0.0
  %2595 = vmatpush.msra.mxu0 0.0
  %2596 = vmatpush.msra.mxu0 0.0
  %2597 = vmatpush.msra.mxu0 0.0
  %2598 = vmatpush.msra.mxu0 0.0
  %2599 = vmatpush.msra.mxu0 0.0
  %2600 = vmatpush.msra.mxu0 %v2523
  %2601 = vmatmul.f32.gmra.mxu0 %v2511
  %v2602 = vpop.f32.mrf.mxu0
  %v2603 = vadd.f32 0.0, %v2602
  %2604 = vdwg.mxu0
  %v2605 = vadd.f32 %v2466, %v2543
  %v2606 = vadd.f32 %v2467, %v2563
  %v2607 = vadd.f32 %v2468, %v2583
  %v2608 = vadd.f32 %v2469, %v2603
  %s2609 = scalar_lea.vmem %s2, 4
  %v2610 = vld [vmem:[%s2609] sm:$0xf]
  %2612 = vset.pattern.permute.xlu0 0
  %2613 = vperm.xlu0 %2612, %v2610
  %v2614 = vpop.permute.xlu0 %2613
  %v2616 = vadd.f32 %v2605, %v2614
  %v2617 = vadd.f32 %v2606, %v2614
  %v2618 = vadd.f32 %v2607, %v2614
  %v2619 = vadd.f32 %v2608, %v2614
  %v2620 = vmax.f32 %v2616, 0.0
  %v2621 = vmax.f32 %v2617, 0.0
  %v2622 = vmax.f32 %v2618, 0.0
  %v2623 = vmax.f32 %v2619, 0.0
  %v2628 = vrot.slane %v2621, 4
  %v2629 = vrot.slane %v2623, 4
  %v2630 = vsel %vm239, %v2620, %v2628
  %v2631 = vsel %vm239, %v2622, %v2629
  %2634 = vst [vmem:[#allocation2 + $0x4] sm:$0xff] %v2630
  %2635 = vst [vmem:[#allocation2 + $0xc] sm:$0xff] %v2631
  %v2636 = vld [vmem:[#allocation2] sm:$0xff]
  %v2637 = vld [vmem:[#allocation2 + $0x8] sm:$0xff]
  %v2638 = vld [vmem:[#allocation2 + $0x10] sm:$0xf]
  %2642 = vst [vmem:[#allocation1] ss:$2 sm:$0xff] %v2636
  %s2643 = scalar_lea.vmem [#allocation1], 16
  %2644 = vst [vmem:[%s2643] ss:$2 sm:$0xff] %v2637
  %s2645 = scalar_lea.vmem [#allocation1], 32
  %2646 = vst [vmem:[%s2645] ss:$2 sm:$0xff] %v2638
  %v2647 = vld.sshfl [vmem:[#allocation1] sm:$0xff pattern:$0x75316420]
  %v2648 = vld.sshfl [vmem:[#allocation1 + $0x8] sm:$0xff pattern:$0x75316420]
  %v2649 = vld.sshfl [vmem:[#allocation1 + $0x10] sm:$0xff pattern:$0x75316420]
  %v2650 = vld.sshfl [vmem:[#allocation1 + $0x18] sm:$0xff pattern:$0x75316420]
  %v2651 = vld.sshfl [vmem:[#allocation1 + $0x20] sm:$0xff pattern:$0x75316420]
  %2652 = vrot.lane.b32.xlu0 %v2647, 17
  %v2653 = vpop.permute.xlu0 %2652
  %2654 = vrot.lane.b32.xlu0 %v2648, 17
  %v2655 = vpop.permute.xlu0 %2654
  %2656 = vrot.lane.b32.xlu0 %v2649, 17
  %v2657 = vpop.permute.xlu0 %2656
  %2658 = vrot.lane.b32.xlu0 %v2650, 17
  %v2659 = vpop.permute.xlu0 %2658
  %2660 = vrot.lane.b32.xlu0 %v2651, 17
  %v2661 = vpop.permute.xlu0 %2660
  %v2662 = vsel %vm180, %v2653, %v2655
  %v2663 = vsel %vm180, %v2655, %v2657
  %v2664 = vsel %vm180, %v2657, %v2659
  %v2665 = vsel %vm180, %v2659, %v2661
  %v2670 = vsel %vm134, %v2662, 0.0
  %v2671 = vsel %vm135, %v2663, 0.0
  %v2672 = vsel %vm136, %v2664, 0.0
  %v2673 = vsel %vm137, %v2665, 0.0
  %s2674 = scalar_lea.vmem %s1, 72
  %v2675 = vld [vmem:[%s2674] sm:$0xf]
  %v2676 = vld [vmem:[#allocation2] sm:$0xff]
  %v2677 = vld [vmem:[#allocation2 + $0x8] sm:$0xff]
  %v2678 = vld [vmem:[#allocation2 + $0x10] sm:$0xf]
  %2682 = vst [vmem:[#allocation1] ss:$2 sm:$0xff] %v2676
  %s2683 = scalar_lea.vmem [#allocation1], 16
  %2684 = vst [vmem:[%s2683] ss:$2 sm:$0xff] %v2677
  %s2685 = scalar_lea.vmem [#allocation1], 32
  %2686 = vst [vmem:[%s2685] ss:$2 sm:$0xff] %v2678
  %v2687 = vld.sshfl [vmem:[#allocation1] sm:$0xff pattern:$0x75316420]
  %v2688 = vld.sshfl [vmem:[#allocation1 + $0x8] sm:$0xff pattern:$0x75316420]
  %v2689 = vld.sshfl [vmem:[#allocation1 + $0x10] sm:$0xff pattern:$0x75316420]
  %v2690 = vld.sshfl [vmem:[#allocation1 + $0x18] sm:$0xff pattern:$0x75316420]
  %v2691 = vld.sshfl [vmem:[#allocation1 + $0x20] sm:$0xff pattern:$0x75316420]
  %2692 = vrot.lane.b32.xlu0 %v2687, 16
  %v2693 = vpop.permute.xlu0 %2692
  %2694 = vrot.lane.b32.xlu0 %v2688, 16
  %v2695 = vpop.permute.xlu0 %2694
  %2696 = vrot.lane.b32.xlu0 %v2689, 16
  %v2697 = vpop.permute.xlu0 %2696
  %2698 = vrot.lane.b32.xlu0 %v2690, 16
  %v2699 = vpop.permute.xlu0 %2698
  %2700 = vrot.lane.b32.xlu0 %v2691, 16
  %v2701 = vpop.permute.xlu0 %2700
  %v2702 = vsel %vm220, %v2693, %v2695
  %v2703 = vsel %vm220, %v2695, %v2697
  %v2704 = vsel %vm220, %v2697, %v2699
  %v2705 = vsel %vm220, %v2699, %v2701
  %v2710 = vsel %vm118, %v2702, 0.0
  %v2711 = vsel %vm119, %v2703, 0.0
  %v2712 = vsel %vm120, %v2704, 0.0
  %v2713 = vsel %vm121, %v2705, 0.0
  %s2714 = scalar_lea.vmem %s1, 76
  %v2715 = vld [vmem:[%s2714] sm:$0xf]
  %v2717 = vsel %vm235, %v2715, 0
  %v2720 = vsel %vm239, %v2710, 0
  %v2723 = vsel %vm239, %v2711, 0
  %v2726 = vsel %vm239, %v2712, 0
  %v2729 = vsel %vm239, %v2713, 0
  %2731 = vmatpush.msra.mxu0 0.0
  %2732 = vmatpush.msra.mxu0 0.0
  %2733 = vmatpush.msra.mxu0 0.0
  %2734 = vmatpush.msra.mxu0 0.0
  %2735 = vmatpush.msra.mxu0 0.0
  %2736 = vmatpush.msra.mxu0 0.0
  %2737 = vmatpush.msra.mxu0 0.0
  %2738 = vmatpush.msra.mxu0 0.0
  %2739 = vmatpush.msra.mxu0 0.0
  %2740 = vmatpush.msra.mxu0 0.0
  %2741 = vmatpush.msra.mxu0 0.0
  %2742 = vmatpush.msra.mxu0 0.0
  %2743 = vmatpush.msra.mxu0 0.0
  %2744 = vmatpush.msra.mxu0 0.0
  %2745 = vmatpush.msra.mxu0 0.0
  %2746 = vmatpush.msra.mxu0 %v2720
  %2747 = vmatmul.f32.gmra.mxu0 %v2717
  %v2748 = vpop.f32.mrf.mxu0
  %v2749 = vadd.f32 0.0, %v2748
  %2750 = vdwg.mxu0
  %2751 = vmatpush.msra.mxu0 0.0
  %2752 = vmatpush.msra.mxu0 0.0
  %2753 = vmatpush.msra.mxu0 0.0
  %2754 = vmatpush.msra.mxu0 0.0
  %2755 = vmatpush.msra.mxu0 0.0
  %2756 = vmatpush.msra.mxu0 0.0
  %2757 = vmatpush.msra.mxu0 0.0
  %2758 = vmatpush.msra.mxu0 0.0
  %2759 = vmatpush.msra.mxu0 0.0
  %2760 = vmatpush.msra.mxu0 0.0
  %2761 = vmatpush.msra.mxu0 0.0
  %2762 = vmatpush.msra.mxu0 0.0
  %2763 = vmatpush.msra.mxu0 0.0
  %2764 = vmatpush.msra.mxu0 0.0
  %2765 = vmatpush.msra.mxu0 0.0
  %2766 = vmatpush.msra.mxu0 %v2723
  %2767 = vmatmul.f32.gmra.mxu0 %v2717
  %v2768 = vpop.f32.mrf.mxu0
  %v2769 = vadd.f32 0.0, %v2768
  %2770 = vdwg.mxu0
  %2771 = vmatpush.msra.mxu0 0.0
  %2772 = vmatpush.msra.mxu0 0.0
  %2773 = vmatpush.msra.mxu0 0.0
  %2774 = vmatpush.msra.mxu0 0.0
  %2775 = vmatpush.msra.mxu0 0.0
  %2776 = vmatpush.msra.mxu0 0.0
  %2777 = vmatpush.msra.mxu0 0.0
  %2778 = vmatpush.msra.mxu0 0.0
  %2779 = vmatpush.msra.mxu0 0.0
  %2780 = vmatpush.msra.mxu0 0.0
  %2781 = vmatpush.msra.mxu0 0.0
  %2782 = vmatpush.msra.mxu0 0.0
  %2783 = vmatpush.msra.mxu0 0.0
  %2784 = vmatpush.msra.mxu0 0.0
  %2785 = vmatpush.msra.mxu0 0.0
  %2786 = vmatpush.msra.mxu0 %v2726
  %2787 = vmatmul.f32.gmra.mxu0 %v2717
  %v2788 = vpop.f32.mrf.mxu0
  %v2789 = vadd.f32 0.0, %v2788
  %2790 = vdwg.mxu0
  %2791 = vmatpush.msra.mxu0 0.0
  %2792 = vmatpush.msra.mxu0 0.0
  %2793 = vmatpush.msra.mxu0 0.0
  %2794 = vmatpush.msra.mxu0 0.0
  %2795 = vmatpush.msra.mxu0 0.0
  %2796 = vmatpush.msra.mxu0 0.0
  %2797 = vmatpush.msra.mxu0 0.0
  %2798 = vmatpush.msra.mxu0 0.0
  %2799 = vmatpush.msra.mxu0 0.0
  %2800 = vmatpush.msra.mxu0 0.0
  %2801 = vmatpush.msra.mxu0 0.0
  %2802 = vmatpush.msra.mxu0 0.0
  %2803 = vmatpush.msra.mxu0 0.0
  %2804 = vmatpush.msra.mxu0 0.0
  %2805 = vmatpush.msra.mxu0 0.0
  %2806 = vmatpush.msra.mxu0 %v2729
  %2807 = vmatmul.f32.gmra.mxu0 %v2717
  %v2808 = vpop.f32.mrf.mxu0
  %v2809 = vadd.f32 0.0, %v2808
  %2810 = vdwg.mxu0
  %v2812 = vsel %vm235, %v2675, 0
  %v2815 = vsel %vm239, %v2670, 0
  %v2818 = vsel %vm239, %v2671, 0
  %v2821 = vsel %vm239, %v2672, 0
  %v2824 = vsel %vm239, %v2673, 0
  %2826 = vmatpush.msra.mxu0 0.0
  %2827 = vmatpush.msra.mxu0 0.0
  %2828 = vmatpush.msra.mxu0 0.0
  %2829 = vmatpush.msra.mxu0 0.0
  %2830 = vmatpush.msra.mxu0 0.0
  %2831 = vmatpush.msra.mxu0 0.0
  %2832 = vmatpush.msra.mxu0 0.0
  %2833 = vmatpush.msra.mxu0 0.0
  %2834 = vmatpush.msra.mxu0 0.0
  %2835 = vmatpush.msra.mxu0 0.0
  %2836 = vmatpush.msra.mxu0 0.0
  %2837 = vmatpush.msra.mxu0 0.0
  %2838 = vmatpush.msra.mxu0 0.0
  %2839 = vmatpush.msra.mxu0 0.0
  %2840 = vmatpush.msra.mxu0 0.0
  %2841 = vmatpush.msra.mxu0 %v2815
  %2842 = vmatmul.f32.gmra.mxu0 %v2812
  %v2843 = vpop.f32.mrf.mxu0
  %v2844 = vadd.f32 %v2749, %v2843
  %2845 = vdwg.mxu0
  %2846 = vmatpush.msra.mxu0 0.0
  %2847 = vmatpush.msra.mxu0 0.0
  %2848 = vmatpush.msra.mxu0 0.0
  %2849 = vmatpush.msra.mxu0 0.0
  %2850 = vmatpush.msra.mxu0 0.0
  %2851 = vmatpush.msra.mxu0 0.0
  %2852 = vmatpush.msra.mxu0 0.0
  %2853 = vmatpush.msra.mxu0 0.0
  %2854 = vmatpush.msra.mxu0 0.0
  %2855 = vmatpush.msra.mxu0 0.0
  %2856 = vmatpush.msra.mxu0 0.0
  %2857 = vmatpush.msra.mxu0 0.0
  %2858 = vmatpush.msra.mxu0 0.0
  %2859 = vmatpush.msra.mxu0 0.0
  %2860 = vmatpush.msra.mxu0 0.0
  %2861 = vmatpush.msra.mxu0 %v2818
  %2862 = vmatmul.f32.gmra.mxu0 %v2812
  %v2863 = vpop.f32.mrf.mxu0
  %v2864 = vadd.f32 %v2769, %v2863
  %2865 = vdwg.mxu0
  %2866 = vmatpush.msra.mxu0 0.0
  %2867 = vmatpush.msra.mxu0 0.0
  %2868 = vmatpush.msra.mxu0 0.0
  %2869 = vmatpush.msra.mxu0 0.0
  %2870 = vmatpush.msra.mxu0 0.0
  %2871 = vmatpush.msra.mxu0 0.0
  %2872 = vmatpush.msra.mxu0 0.0
  %2873 = vmatpush.msra.mxu0 0.0
  %2874 = vmatpush.msra.mxu0 0.0
  %2875 = vmatpush.msra.mxu0 0.0
  %2876 = vmatpush.msra.mxu0 0.0
  %2877 = vmatpush.msra.mxu0 0.0
  %2878 = vmatpush.msra.mxu0 0.0
  %2879 = vmatpush.msra.mxu0 0.0
  %2880 = vmatpush.msra.mxu0 0.0
  %2881 = vmatpush.msra.mxu0 %v2821
  %2882 = vmatmul.f32.gmra.mxu0 %v2812
  %v2883 = vpop.f32.mrf.mxu0
  %v2884 = vadd.f32 %v2789, %v2883
  %2885 = vdwg.mxu0
  %2886 = vmatpush.msra.mxu0 0.0
  %2887 = vmatpush.msra.mxu0 0.0
  %2888 = vmatpush.msra.mxu0 0.0
  %2889 = vmatpush.msra.mxu0 0.0
  %2890 = vmatpush.msra.mxu0 0.0
  %2891 = vmatpush.msra.mxu0 0.0
  %2892 = vmatpush.msra.mxu0 0.0
  %2893 = vmatpush.msra.mxu0 0.0
  %2894 = vmatpush.msra.mxu0 0.0
  %2895 = vmatpush.msra.mxu0 0.0
  %2896 = vmatpush.msra.mxu0 0.0
  %2897 = vmatpush.msra.mxu0 0.0
  %2898 = vmatpush.msra.mxu0 0.0
  %2899 = vmatpush.msra.mxu0 0.0
  %2900 = vmatpush.msra.mxu0 0.0
  %2901 = vmatpush.msra.mxu0 %v2824
  %2902 = vmatmul.f32.gmra.mxu0 %v2812
  %v2903 = vpop.f32.mrf.mxu0
  %v2904 = vadd.f32 %v2809, %v2903
  %2905 = vdwg.mxu0
  %v2906 = vld [vmem:[#allocation2] sm:$0xff]
  %v2907 = vld [vmem:[#allocation2 + $0x8] sm:$0xff]
  %v2908 = vld [vmem:[#allocation2 + $0x10] sm:$0xf]
  %2912 = vst [vmem:[#allocation1] ss:$2 sm:$0xff] %v2906
  %s2913 = scalar_lea.vmem [#allocation1], 16
  %2914 = vst [vmem:[%s2913] ss:$2 sm:$0xff] %v2907
  %s2915 = scalar_lea.vmem [#allocation1], 32
  %2916 = vst [vmem:[%s2915] ss:$2 sm:$0xff] %v2908
  %v2917 = vld.sshfl [vmem:[#allocation1] sm:$0xff pattern:$0x75316420]
  %v2918 = vld.sshfl [vmem:[#allocation1 + $0x8] sm:$0xff pattern:$0x75316420]
  %v2919 = vld.sshfl [vmem:[#allocation1 + $0x10] sm:$0xff pattern:$0x75316420]
  %v2920 = vld.sshfl [vmem:[#allocation1 + $0x18] sm:$0xff pattern:$0x75316420]
  %v2921 = vld.sshfl [vmem:[#allocation1 + $0x20] sm:$0xff pattern:$0x75316420]
  %2922 = vrot.lane.b32.xlu0 %v2917, 15
  %v2923 = vpop.permute.xlu0 %2922
  %2924 = vrot.lane.b32.xlu0 %v2918, 15
  %v2925 = vpop.permute.xlu0 %2924
  %2926 = vrot.lane.b32.xlu0 %v2919, 15
  %v2927 = vpop.permute.xlu0 %2926
  %2928 = vrot.lane.b32.xlu0 %v2920, 15
  %v2929 = vpop.permute.xlu0 %2928
  %2930 = vrot.lane.b32.xlu0 %v2921, 15
  %v2931 = vpop.permute.xlu0 %2930
  %v2932 = vsel %vm453, %v2923, %v2925
  %v2933 = vsel %vm453, %v2925, %v2927
  %v2934 = vsel %vm453, %v2927, %v2929
  %v2935 = vsel %vm453, %v2929, %v2931
  %v2940 = vsel %vm138, %v2932, 0.0
  %v2941 = vsel %vm139, %v2933, 0.0
  %v2942 = vsel %vm140, %v2934, 0.0
  %v2943 = vsel %vm141, %v2935, 0.0
  %s2944 = scalar_lea.vmem %s1, 80
  %v2945 = vld [vmem:[%s2944] sm:$0xf]
  %v2947 = vsel %vm235, %v2945, 0
  %v2950 = vsel %vm239, %v2940, 0
  %v2953 = vsel %vm239, %v2941, 0
  %v2956 = vsel %vm239, %v2942, 0
  %v2959 = vsel %vm239, %v2943, 0
  %2961 = vmatpush.msra.mxu0 0.0
  %2962 = vmatpush.msra.mxu0 0.0
  %2963 = vmatpush.msra.mxu0 0.0
  %2964 = vmatpush.msra.mxu0 0.0
  %2965 = vmatpush.msra.mxu0 0.0
  %2966 = vmatpush.msra.mxu0 0.0
  %2967 = vmatpush.msra.mxu0 0.0
  %2968 = vmatpush.msra.mxu0 0.0
  %2969 = vmatpush.msra.mxu0 0.0
  %2970 = vmatpush.msra.mxu0 0.0
  %2971 = vmatpush.msra.mxu0 0.0
  %2972 = vmatpush.msra.mxu0 0.0
  %2973 = vmatpush.msra.mxu0 0.0
  %2974 = vmatpush.msra.mxu0 0.0
  %2975 = vmatpush.msra.mxu0 0.0
  %2976 = vmatpush.msra.mxu0 %v2950
  %2977 = vmatmul.f32.gmra.mxu0 %v2947
  %v2978 = vpop.f32.mrf.mxu0
  %v2979 = vadd.f32 0.0, %v2978
  %2980 = vdwg.mxu0
  %2981 = vmatpush.msra.mxu0 0.0
  %2982 = vmatpush.msra.mxu0 0.0
  %2983 = vmatpush.msra.mxu0 0.0
  %2984 = vmatpush.msra.mxu0 0.0
  %2985 = vmatpush.msra.mxu0 0.0
  %2986 = vmatpush.msra.mxu0 0.0
  %2987 = vmatpush.msra.mxu0 0.0
  %2988 = vmatpush.msra.mxu0 0.0
  %2989 = vmatpush.msra.mxu0 0.0
  %2990 = vmatpush.msra.mxu0 0.0
  %2991 = vmatpush.msra.mxu0 0.0
  %2992 = vmatpush.msra.mxu0 0.0
  %2993 = vmatpush.msra.mxu0 0.0
  %2994 = vmatpush.msra.mxu0 0.0
  %2995 = vmatpush.msra.mxu0 0.0
  %2996 = vmatpush.msra.mxu0 %v2953
  %2997 = vmatmul.f32.gmra.mxu0 %v2947
  %v2998 = vpop.f32.mrf.mxu0
  %v2999 = vadd.f32 0.0, %v2998
  %3000 = vdwg.mxu0
  %3001 = vmatpush.msra.mxu0 0.0
  %3002 = vmatpush.msra.mxu0 0.0
  %3003 = vmatpush.msra.mxu0 0.0
  %3004 = vmatpush.msra.mxu0 0.0
  %3005 = vmatpush.msra.mxu0 0.0
  %3006 = vmatpush.msra.mxu0 0.0
  %3007 = vmatpush.msra.mxu0 0.0
  %3008 = vmatpush.msra.mxu0 0.0
  %3009 = vmatpush.msra.mxu0 0.0
  %3010 = vmatpush.msra.mxu0 0.0
  %3011 = vmatpush.msra.mxu0 0.0
  %3012 = vmatpush.msra.mxu0 0.0
  %3013 = vmatpush.msra.mxu0 0.0
  %3014 = vmatpush.msra.mxu0 0.0
  %3015 = vmatpush.msra.mxu0 0.0
  %3016 = vmatpush.msra.mxu0 %v2956
  %3017 = vmatmul.f32.gmra.mxu0 %v2947
  %v3018 = vpop.f32.mrf.mxu0
  %v3019 = vadd.f32 0.0, %v3018
  %3020 = vdwg.mxu0
  %3021 = vmatpush.msra.mxu0 0.0
  %3022 = vmatpush.msra.mxu0 0.0
  %3023 = vmatpush.msra.mxu0 0.0
  %3024 = vmatpush.msra.mxu0 0.0
  %3025 = vmatpush.msra.mxu0 0.0
  %3026 = vmatpush.msra.mxu0 0.0
  %3027 = vmatpush.msra.mxu0 0.0
  %3028 = vmatpush.msra.mxu0 0.0
  %3029 = vmatpush.msra.mxu0 0.0
  %3030 = vmatpush.msra.mxu0 0.0
  %3031 = vmatpush.msra.mxu0 0.0
  %3032 = vmatpush.msra.mxu0 0.0
  %3033 = vmatpush.msra.mxu0 0.0
  %3034 = vmatpush.msra.mxu0 0.0
  %3035 = vmatpush.msra.mxu0 0.0
  %3036 = vmatpush.msra.mxu0 %v2959
  %3037 = vmatmul.f32.gmra.mxu0 %v2947
  %v3038 = vpop.f32.mrf.mxu0
  %v3039 = vadd.f32 0.0, %v3038
  %3040 = vdwg.mxu0
  %v3041 = vadd.f32 %v2844, %v2979
  %v3042 = vadd.f32 %v2864, %v2999
  %v3043 = vadd.f32 %v2884, %v3019
  %v3044 = vadd.f32 %v2904, %v3039
  %v3045 = vld [vmem:[#allocation2] sm:$0xff]
  %v3046 = vld [vmem:[#allocation2 + $0x8] sm:$0xff]
  %v3047 = vld [vmem:[#allocation2 + $0x10] sm:$0xf]
  %3051 = vst [vmem:[#allocation1] ss:$2 sm:$0xff] %v3045
  %s3052 = scalar_lea.vmem [#allocation1], 16
  %3053 = vst [vmem:[%s3052] ss:$2 sm:$0xff] %v3046
  %s3054 = scalar_lea.vmem [#allocation1], 32
  %3055 = vst [vmem:[%s3054] ss:$2 sm:$0xff] %v3047
  %v3056 = vld.sshfl [vmem:[#allocation1] sm:$0xff pattern:$0x75316420]
  %v3057 = vld.sshfl [vmem:[#allocation1 + $0x8] sm:$0xff pattern:$0x75316420]
  %v3058 = vld.sshfl [vmem:[#allocation1 + $0x10] sm:$0xff pattern:$0x75316420]
  %v3059 = vld.sshfl [vmem:[#allocation1 + $0x18] sm:$0xff pattern:$0x75316420]
  %v3060 = vld.sshfl [vmem:[#allocation1 + $0x20] sm:$0xff pattern:$0x75316420]
  %3061 = vrot.lane.b32.xlu0 %v3056, 1
  %v3062 = vpop.permute.xlu0 %3061
  %3063 = vrot.lane.b32.xlu0 %v3057, 1
  %v3064 = vpop.permute.xlu0 %3063
  %3065 = vrot.lane.b32.xlu0 %v3058, 1
  %v3066 = vpop.permute.xlu0 %3065
  %3067 = vrot.lane.b32.xlu0 %v3059, 1
  %v3068 = vpop.permute.xlu0 %3067
  %3069 = vrot.lane.b32.xlu0 %v3060, 1
  %v3070 = vpop.permute.xlu0 %3069
  %v3071 = vsel %vm593, %v3062, %v3064
  %v3072 = vsel %vm593, %v3064, %v3066
  %v3073 = vsel %vm593, %v3066, %v3068
  %v3074 = vsel %vm593, %v3068, %v3070
  %v3079 = vsel %vm126, %v3071, 0.0
  %v3080 = vsel %vm127, %v3072, 0.0
  %v3081 = vsel %vm128, %v3073, 0.0
  %v3082 = vsel %vm129, %v3074, 0.0
  %s3083 = scalar_lea.vmem %s1, 84
  %v3084 = vld [vmem:[%s3083] sm:$0xf]
  %v3086 = vsel %vm235, %v3084, 0
  %v3089 = vsel %vm239, %v3079, 0
  %v3092 = vsel %vm239, %v3080, 0
  %v3095 = vsel %vm239, %v3081, 0
  %v3098 = vsel %vm239, %v3082, 0
  %3100 = vmatpush.msra.mxu0 0.0
  %3101 = vmatpush.msra.mxu0 0.0
  %3102 = vmatpush.msra.mxu0 0.0
  %3103 = vmatpush.msra.mxu0 0.0
  %3104 = vmatpush.msra.mxu0 0.0
  %3105 = vmatpush.msra.mxu0 0.0
  %3106 = vmatpush.msra.mxu0 0.0
  %3107 = vmatpush.msra.mxu0 0.0
  %3108 = vmatpush.msra.mxu0 0.0
  %3109 = vmatpush.msra.mxu0 0.0
  %3110 = vmatpush.msra.mxu0 0.0
  %3111 = vmatpush.msra.mxu0 0.0
  %3112 = vmatpush.msra.mxu0 0.0
  %3113 = vmatpush.msra.mxu0 0.0
  %3114 = vmatpush.msra.mxu0 0.0
  %3115 = vmatpush.msra.mxu0 %v3089
  %3116 = vmatmul.f32.gmra.mxu0 %v3086
  %v3117 = vpop.f32.mrf.mxu0
  %v3118 = vadd.f32 0.0, %v3117
  %3119 = vdwg.mxu0
  %3120 = vmatpush.msra.mxu0 0.0
  %3121 = vmatpush.msra.mxu0 0.0
  %3122 = vmatpush.msra.mxu0 0.0
  %3123 = vmatpush.msra.mxu0 0.0
  %3124 = vmatpush.msra.mxu0 0.0
  %3125 = vmatpush.msra.mxu0 0.0
  %3126 = vmatpush.msra.mxu0 0.0
  %3127 = vmatpush.msra.mxu0 0.0
  %3128 = vmatpush.msra.mxu0 0.0
  %3129 = vmatpush.msra.mxu0 0.0
  %3130 = vmatpush.msra.mxu0 0.0
  %3131 = vmatpush.msra.mxu0 0.0
  %3132 = vmatpush.msra.mxu0 0.0
  %3133 = vmatpush.msra.mxu0 0.0
  %3134 = vmatpush.msra.mxu0 0.0
  %3135 = vmatpush.msra.mxu0 %v3092
  %3136 = vmatmul.f32.gmra.mxu0 %v3086
  %v3137 = vpop.f32.mrf.mxu0
  %v3138 = vadd.f32 0.0, %v3137
  %3139 = vdwg.mxu0
  %3140 = vmatpush.msra.mxu0 0.0
  %3141 = vmatpush.msra.mxu0 0.0
  %3142 = vmatpush.msra.mxu0 0.0
  %3143 = vmatpush.msra.mxu0 0.0
  %3144 = vmatpush.msra.mxu0 0.0
  %3145 = vmatpush.msra.mxu0 0.0
  %3146 = vmatpush.msra.mxu0 0.0
  %3147 = vmatpush.msra.mxu0 0.0
  %3148 = vmatpush.msra.mxu0 0.0
  %3149 = vmatpush.msra.mxu0 0.0
  %3150 = vmatpush.msra.mxu0 0.0
  %3151 = vmatpush.msra.mxu0 0.0
  %3152 = vmatpush.msra.mxu0 0.0
  %3153 = vmatpush.msra.mxu0 0.0
  %3154 = vmatpush.msra.mxu0 0.0
  %3155 = vmatpush.msra.mxu0 %v3095
  %3156 = vmatmul.f32.gmra.mxu0 %v3086
  %v3157 = vpop.f32.mrf.mxu0
  %v3158 = vadd.f32 0.0, %v3157
  %3159 = vdwg.mxu0
  %3160 = vmatpush.msra.mxu0 0.0
  %3161 = vmatpush.msra.mxu0 0.0
  %3162 = vmatpush.msra.mxu0 0.0
  %3163 = vmatpush.msra.mxu0 0.0
  %3164 = vmatpush.msra.mxu0 0.0
  %3165 = vmatpush.msra.mxu0 0.0
  %3166 = vmatpush.msra.mxu0 0.0
  %3167 = vmatpush.msra.mxu0 0.0
  %3168 = vmatpush.msra.mxu0 0.0
  %3169 = vmatpush.msra.mxu0 0.0
  %3170 = vmatpush.msra.mxu0 0.0
  %3171 = vmatpush.msra.mxu0 0.0
  %3172 = vmatpush.msra.mxu0 0.0
  %3173 = vmatpush.msra.mxu0 0.0
  %3174 = vmatpush.msra.mxu0 0.0
  %3175 = vmatpush.msra.mxu0 %v3098
  %3176 = vmatmul.f32.gmra.mxu0 %v3086
  %v3177 = vpop.f32.mrf.mxu0
  %v3178 = vadd.f32 0.0, %v3177
  %3179 = vdwg.mxu0
  %v3180 = vadd.f32 %v3041, %v3118
  %v3181 = vadd.f32 %v3042, %v3138
  %v3182 = vadd.f32 %v3043, %v3158
  %v3183 = vadd.f32 %v3044, %v3178
  %v3184 = vld [vmem:[#allocation2 + $0x4] sm:$0xff]
  %v3185 = vld [vmem:[#allocation2 + $0xc] sm:$0xff]
  %s3186 = scalar_lea.vmem %s1, 88
  %v3187 = vld [vmem:[%s3186] sm:$0xf]
  %3190 = vst [vmem:[#allocation1] ss:$2 sm:$0xff] %v3184
  %s3191 = scalar_lea.vmem [#allocation1], 16
  %3192 = vst [vmem:[%s3191] ss:$2 sm:$0xff] %v3185
  %v3193 = vld.sshfl [vmem:[#allocation1] sm:$0xff pattern:$0x75316420]
  %v3194 = vld.sshfl [vmem:[#allocation1 + $0x8] sm:$0xff pattern:$0x75316420]
  %v3195 = vld.sshfl [vmem:[#allocation1 + $0x10] sm:$0xff pattern:$0x75316420]
  %v3196 = vld.sshfl [vmem:[#allocation1 + $0x18] sm:$0xff pattern:$0x75316420]
  %v3198 = vsel %vm235, %v3187, 0
  %v3200 = vsel %vm239, %v3193, 0
  %v3202 = vsel %vm239, %v3194, 0
  %v3204 = vsel %vm239, %v3195, 0
  %v3206 = vsel %vm239, %v3196, 0
  %3208 = vmatpush.msra.mxu0 0.0
  %3209 = vmatpush.msra.mxu0 0.0
  %3210 = vmatpush.msra.mxu0 0.0
  %3211 = vmatpush.msra.mxu0 0.0
  %3212 = vmatpush.msra.mxu0 0.0
  %3213 = vmatpush.msra.mxu0 0.0
  %3214 = vmatpush.msra.mxu0 0.0
  %3215 = vmatpush.msra.mxu0 0.0
  %3216 = vmatpush.msra.mxu0 0.0
  %3217 = vmatpush.msra.mxu0 0.0
  %3218 = vmatpush.msra.mxu0 0.0
  %3219 = vmatpush.msra.mxu0 0.0
  %3220 = vmatpush.msra.mxu0 0.0
  %3221 = vmatpush.msra.mxu0 0.0
  %3222 = vmatpush.msra.mxu0 0.0
  %3223 = vmatpush.msra.mxu0 %v3200
  %3224 = vmatmul.f32.gmra.mxu0 %v3198
  %v3225 = vpop.f32.mrf.mxu0
  %v3226 = vadd.f32 0.0, %v3225
  %3227 = vdwg.mxu0
  %3228 = vmatpush.msra.mxu0 0.0
  %3229 = vmatpush.msra.mxu0 0.0
  %3230 = vmatpush.msra.mxu0 0.0
  %3231 = vmatpush.msra.mxu0 0.0
  %3232 = vmatpush.msra.mxu0 0.0
  %3233 = vmatpush.msra.mxu0 0.0
  %3234 = vmatpush.msra.mxu0 0.0
  %3235 = vmatpush.msra.mxu0 0.0
  %3236 = vmatpush.msra.mxu0 0.0
  %3237 = vmatpush.msra.mxu0 0.0
  %3238 = vmatpush.msra.mxu0 0.0
  %3239 = vmatpush.msra.mxu0 0.0
  %3240 = vmatpush.msra.mxu0 0.0
  %3241 = vmatpush.msra.mxu0 0.0
  %3242 = vmatpush.msra.mxu0 0.0
  %3243 = vmatpush.msra.mxu0 %v3202
  %3244 = vmatmul.f32.gmra.mxu0 %v3198
  %v3245 = vpop.f32.mrf.mxu0
  %v3246 = vadd.f32 0.0, %v3245
  %3247 = vdwg.mxu0
  %3248 = vmatpush.msra.mxu0 0.0
  %3249 = vmatpush.msra.mxu0 0.0
  %3250 = vmatpush.msra.mxu0 0.0
  %3251 = vmatpush.msra.mxu0 0.0
  %3252 = vmatpush.msra.mxu0 0.0
  %3253 = vmatpush.msra.mxu0 0.0
  %3254 = vmatpush.msra.mxu0 0.0
  %3255 = vmatpush.msra.mxu0 0.0
  %3256 = vmatpush.msra.mxu0 0.0
  %3257 = vmatpush.msra.mxu0 0.0
  %3258 = vmatpush.msra.mxu0 0.0
  %3259 = vmatpush.msra.mxu0 0.0
  %3260 = vmatpush.msra.mxu0 0.0
  %3261 = vmatpush.msra.mxu0 0.0
  %3262 = vmatpush.msra.mxu0 0.0
  %3263 = vmatpush.msra.mxu0 %v3204
  %3264 = vmatmul.f32.gmra.mxu0 %v3198
  %v3265 = vpop.f32.mrf.mxu0
  %v3266 = vadd.f32 0.0, %v3265
  %3267 = vdwg.mxu0
  %3268 = vmatpush.msra.mxu0 0.0
  %3269 = vmatpush.msra.mxu0 0.0
  %3270 = vmatpush.msra.mxu0 0.0
  %3271 = vmatpush.msra.mxu0 0.0
  %3272 = vmatpush.msra.mxu0 0.0
  %3273 = vmatpush.msra.mxu0 0.0
  %3274 = vmatpush.msra.mxu0 0.0
  %3275 = vmatpush.msra.mxu0 0.0
  %3276 = vmatpush.msra.mxu0 0.0
  %3277 = vmatpush.msra.mxu0 0.0
  %3278 = vmatpush.msra.mxu0 0.0
  %3279 = vmatpush.msra.mxu0 0.0
  %3280 = vmatpush.msra.mxu0 0.0
  %3281 = vmatpush.msra.mxu0 0.0
  %3282 = vmatpush.msra.mxu0 0.0
  %3283 = vmatpush.msra.mxu0 %v3206
  %3284 = vmatmul.f32.gmra.mxu0 %v3198
  %v3285 = vpop.f32.mrf.mxu0
  %v3286 = vadd.f32 0.0, %v3285
  %3287 = vdwg.mxu0
  %v3288 = vadd.f32 %v3180, %v3226
  %v3289 = vadd.f32 %v3181, %v3246
  %v3290 = vadd.f32 %v3182, %v3266
  %v3291 = vadd.f32 %v3183, %v3286
  %v3292 = vld [vmem:[#allocation2 + $0x4] sm:$0xff]
  %v3293 = vld [vmem:[#allocation2 + $0xc] sm:$0xff]
  %v3294 = vld [vmem:[#allocation2 + $0x14] sm:$0xf]
  %3298 = vst [vmem:[#allocation1] ss:$2 sm:$0xff] %v3292
  %s3299 = scalar_lea.vmem [#allocation1], 16
  %3300 = vst [vmem:[%s3299] ss:$2 sm:$0xff] %v3293
  %s3301 = scalar_lea.vmem [#allocation1], 32
  %3302 = vst [vmem:[%s3301] ss:$2 sm:$0xff] %v3294
  %v3303 = vld.sshfl [vmem:[#allocation1] sm:$0xff pattern:$0x75316420]
  %v3304 = vld.sshfl [vmem:[#allocation1 + $0x8] sm:$0xff pattern:$0x75316420]
  %v3305 = vld.sshfl [vmem:[#allocation1 + $0x10] sm:$0xff pattern:$0x75316420]
  %v3306 = vld.sshfl [vmem:[#allocation1 + $0x18] sm:$0xff pattern:$0x75316420]
  %v3307 = vld.sshfl [vmem:[#allocation1 + $0x20] sm:$0xff pattern:$0x75316420]
  %3308 = vrot.lane.b32.xlu0 %v3303, 127
  %v3309 = vpop.permute.xlu0 %3308
  %3310 = vrot.lane.b32.xlu0 %v3304, 127
  %v3311 = vpop.permute.xlu0 %3310
  %3312 = vrot.lane.b32.xlu0 %v3305, 127
  %v3313 = vpop.permute.xlu0 %3312
  %3314 = vrot.lane.b32.xlu0 %v3306, 127
  %v3315 = vpop.permute.xlu0 %3314
  %3316 = vrot.lane.b32.xlu0 %v3307, 127
  %v3317 = vpop.permute.xlu0 %3316
  %v3318 = vsel %vm841, %v3309, %v3311
  %v3319 = vsel %vm841, %v3311, %v3313
  %v3320 = vsel %vm841, %v3313, %v3315
  %v3321 = vsel %vm841, %v3315, %v3317
  %v3326 = vsel %vm130, %v3318, 0.0
  %v3327 = vsel %vm131, %v3319, 0.0
  %v3328 = vsel %vm132, %v3320, 0.0
  %v3329 = vsel %vm133, %v3321, 0.0
  %s3330 = scalar_lea.vmem %s1, 92
  %v3331 = vld [vmem:[%s3330] sm:$0xf]
  %v3333 = vsel %vm235, %v3331, 0
  %v3336 = vsel %vm239, %v3326, 0
  %v3339 = vsel %vm239, %v3327, 0
  %v3342 = vsel %vm239, %v3328, 0
  %v3345 = vsel %vm239, %v3329, 0
  %3347 = vmatpush.msra.mxu0 0.0
  %3348 = vmatpush.msra.mxu0 0.0
  %3349 = vmatpush.msra.mxu0 0.0
  %3350 = vmatpush.msra.mxu0 0.0
  %3351 = vmatpush.msra.mxu0 0.0
  %3352 = vmatpush.msra.mxu0 0.0
  %3353 = vmatpush.msra.mxu0 0.0
  %3354 = vmatpush.msra.mxu0 0.0
  %3355 = vmatpush.msra.mxu0 0.0
  %3356 = vmatpush.msra.mxu0 0.0
  %3357 = vmatpush.msra.mxu0 0.0
  %3358 = vmatpush.msra.mxu0 0.0
  %3359 = vmatpush.msra.mxu0 0.0
  %3360 = vmatpush.msra.mxu0 0.0
  %3361 = vmatpush.msra.mxu0 0.0
  %3362 = vmatpush.msra.mxu0 %v3336
  %3363 = vmatmul.f32.gmra.mxu0 %v3333
  %v3364 = vpop.f32.mrf.mxu0
  %v3365 = vadd.f32 0.0, %v3364
  %3366 = vdwg.mxu0
  %3367 = vmatpush.msra.mxu0 0.0
  %3368 = vmatpush.msra.mxu0 0.0
  %3369 = vmatpush.msra.mxu0 0.0
  %3370 = vmatpush.msra.mxu0 0.0
  %3371 = vmatpush.msra.mxu0 0.0
  %3372 = vmatpush.msra.mxu0 0.0
  %3373 = vmatpush.msra.mxu0 0.0
  %3374 = vmatpush.msra.mxu0 0.0
  %3375 = vmatpush.msra.mxu0 0.0
  %3376 = vmatpush.msra.mxu0 0.0
  %3377 = vmatpush.msra.mxu0 0.0
  %3378 = vmatpush.msra.mxu0 0.0
  %3379 = vmatpush.msra.mxu0 0.0
  %3380 = vmatpush.msra.mxu0 0.0
  %3381 = vmatpush.msra.mxu0 0.0
  %3382 = vmatpush.msra.mxu0 %v3339
  %3383 = vmatmul.f32.gmra.mxu0 %v3333
  %v3384 = vpop.f32.mrf.mxu0
  %v3385 = vadd.f32 0.0, %v3384
  %3386 = vdwg.mxu0
  %3387 = vmatpush.msra.mxu0 0.0
  %3388 = vmatpush.msra.mxu0 0.0
  %3389 = vmatpush.msra.mxu0 0.0
  %3390 = vmatpush.msra.mxu0 0.0
  %3391 = vmatpush.msra.mxu0 0.0
  %3392 = vmatpush.msra.mxu0 0.0
  %3393 = vmatpush.msra.mxu0 0.0
  %3394 = vmatpush.msra.mxu0 0.0
  %3395 = vmatpush.msra.mxu0 0.0
  %3396 = vmatpush.msra.mxu0 0.0
  %3397 = vmatpush.msra.mxu0 0.0
  %3398 = vmatpush.msra.mxu0 0.0
  %3399 = vmatpush.msra.mxu0 0.0
  %3400 = vmatpush.msra.mxu0 0.0
  %3401 = vmatpush.msra.mxu0 0.0
  %3402 = vmatpush.msra.mxu0 %v3342
  %3403 = vmatmul.f32.gmra.mxu0 %v3333
  %v3404 = vpop.f32.mrf.mxu0
  %v3405 = vadd.f32 0.0, %v3404
  %3406 = vdwg.mxu0
  %3407 = vmatpush.msra.mxu0 0.0
  %3408 = vmatpush.msra.mxu0 0.0
  %3409 = vmatpush.msra.mxu0 0.0
  %3410 = vmatpush.msra.mxu0 0.0
  %3411 = vmatpush.msra.mxu0 0.0
  %3412 = vmatpush.msra.mxu0 0.0
  %3413 = vmatpush.msra.mxu0 0.0
  %3414 = vmatpush.msra.mxu0 0.0
  %3415 = vmatpush.msra.mxu0 0.0
  %3416 = vmatpush.msra.mxu0 0.0
  %3417 = vmatpush.msra.mxu0 0.0
  %3418 = vmatpush.msra.mxu0 0.0
  %3419 = vmatpush.msra.mxu0 0.0
  %3420 = vmatpush.msra.mxu0 0.0
  %3421 = vmatpush.msra.mxu0 0.0
  %3422 = vmatpush.msra.mxu0 %v3345
  %3423 = vmatmul.f32.gmra.mxu0 %v3333
  %v3424 = vpop.f32.mrf.mxu0
  %v3425 = vadd.f32 0.0, %v3424
  %3426 = vdwg.mxu0
  %v3427 = vadd.f32 %v3288, %v3365
  %v3428 = vadd.f32 %v3289, %v3385
  %v3429 = vadd.f32 %v3290, %v3405
  %v3430 = vadd.f32 %v3291, %v3425
  %v3431 = vld [vmem:[#allocation2 + $0x4] sm:$0xff]
  %v3432 = vld [vmem:[#allocation2 + $0xc] sm:$0xff]
  %v3433 = vld [vmem:[#allocation2 + $0x14] sm:$0xf]
  %3437 = vst [vmem:[#allocation1] ss:$2 sm:$0xff] %v3431
  %s3438 = scalar_lea.vmem [#allocation1], 16
  %3439 = vst [vmem:[%s3438] ss:$2 sm:$0xff] %v3432
  %s3440 = scalar_lea.vmem [#allocation1], 32
  %3441 = vst [vmem:[%s3440] ss:$2 sm:$0xff] %v3433
  %v3442 = vld.sshfl [vmem:[#allocation1] sm:$0xff pattern:$0x75316420]
  %v3443 = vld.sshfl [vmem:[#allocation1 + $0x8] sm:$0xff pattern:$0x75316420]
  %v3444 = vld.sshfl [vmem:[#allocation1 + $0x10] sm:$0xff pattern:$0x75316420]
  %v3445 = vld.sshfl [vmem:[#allocation1 + $0x18] sm:$0xff pattern:$0x75316420]
  %v3446 = vld.sshfl [vmem:[#allocation1 + $0x20] sm:$0xff pattern:$0x75316420]
  %3447 = vrot.lane.b32.xlu0 %v3442, 113
  %v3448 = vpop.permute.xlu0 %3447
  %3449 = vrot.lane.b32.xlu0 %v3443, 113
  %v3450 = vpop.permute.xlu0 %3449
  %3451 = vrot.lane.b32.xlu0 %v3444, 113
  %v3452 = vpop.permute.xlu0 %3451
  %3453 = vrot.lane.b32.xlu0 %v3445, 113
  %v3454 = vpop.permute.xlu0 %3453
  %3455 = vrot.lane.b32.xlu0 %v3446, 113
  %v3456 = vpop.permute.xlu0 %3455
  %v3457 = vsel %vm981, %v3448, %v3450
  %v3458 = vsel %vm981, %v3450, %v3452
  %v3459 = vsel %vm981, %v3452, %v3454
  %v3460 = vsel %vm981, %v3454, %v3456
  %v3465 = vsel %vm142, %v3457, 0.0
  %v3466 = vsel %vm143, %v3458, 0.0
  %v3467 = vsel %vm144, %v3459, 0.0
  %v3468 = vsel %vm145, %v3460, 0.0
  %s3469 = scalar_lea.vmem %s1, 96
  %v3470 = vld [vmem:[%s3469] sm:$0xf]
  %v3472 = vsel %vm235, %v3470, 0
  %v3475 = vsel %vm239, %v3465, 0
  %v3478 = vsel %vm239, %v3466, 0
  %v3481 = vsel %vm239, %v3467, 0
  %v3484 = vsel %vm239, %v3468, 0
  %3486 = vmatpush.msra.mxu0 0.0
  %3487 = vmatpush.msra.mxu0 0.0
  %3488 = vmatpush.msra.mxu0 0.0
  %3489 = vmatpush.msra.mxu0 0.0
  %3490 = vmatpush.msra.mxu0 0.0
  %3491 = vmatpush.msra.mxu0 0.0
  %3492 = vmatpush.msra.mxu0 0.0
  %3493 = vmatpush.msra.mxu0 0.0
  %3494 = vmatpush.msra.mxu0 0.0
  %3495 = vmatpush.msra.mxu0 0.0
  %3496 = vmatpush.msra.mxu0 0.0
  %3497 = vmatpush.msra.mxu0 0.0
  %3498 = vmatpush.msra.mxu0 0.0
  %3499 = vmatpush.msra.mxu0 0.0
  %3500 = vmatpush.msra.mxu0 0.0
  %3501 = vmatpush.msra.mxu0 %v3475
  %3502 = vmatmul.f32.gmra.mxu0 %v3472
  %v3503 = vpop.f32.mrf.mxu0
  %v3504 = vadd.f32 0.0, %v3503
  %3505 = vdwg.mxu0
  %3506 = vmatpush.msra.mxu0 0.0
  %3507 = vmatpush.msra.mxu0 0.0
  %3508 = vmatpush.msra.mxu0 0.0
  %3509 = vmatpush.msra.mxu0 0.0
  %3510 = vmatpush.msra.mxu0 0.0
  %3511 = vmatpush.msra.mxu0 0.0
  %3512 = vmatpush.msra.mxu0 0.0
  %3513 = vmatpush.msra.mxu0 0.0
  %3514 = vmatpush.msra.mxu0 0.0
  %3515 = vmatpush.msra.mxu0 0.0
  %3516 = vmatpush.msra.mxu0 0.0
  %3517 = vmatpush.msra.mxu0 0.0
  %3518 = vmatpush.msra.mxu0 0.0
  %3519 = vmatpush.msra.mxu0 0.0
  %3520 = vmatpush.msra.mxu0 0.0
  %3521 = vmatpush.msra.mxu0 %v3478
  %3522 = vmatmul.f32.gmra.mxu0 %v3472
  %v3523 = vpop.f32.mrf.mxu0
  %v3524 = vadd.f32 0.0, %v3523
  %3525 = vdwg.mxu0
  %3526 = vmatpush.msra.mxu0 0.0
  %3527 = vmatpush.msra.mxu0 0.0
  %3528 = vmatpush.msra.mxu0 0.0
  %3529 = vmatpush.msra.mxu0 0.0
  %3530 = vmatpush.msra.mxu0 0.0
  %3531 = vmatpush.msra.mxu0 0.0
  %3532 = vmatpush.msra.mxu0 0.0
  %3533 = vmatpush.msra.mxu0 0.0
  %3534 = vmatpush.msra.mxu0 0.0
  %3535 = vmatpush.msra.mxu0 0.0
  %3536 = vmatpush.msra.mxu0 0.0
  %3537 = vmatpush.msra.mxu0 0.0
  %3538 = vmatpush.msra.mxu0 0.0
  %3539 = vmatpush.msra.mxu0 0.0
  %3540 = vmatpush.msra.mxu0 0.0
  %3541 = vmatpush.msra.mxu0 %v3481
  %3542 = vmatmul.f32.gmra.mxu0 %v3472
  %v3543 = vpop.f32.mrf.mxu0
  %v3544 = vadd.f32 0.0, %v3543
  %3545 = vdwg.mxu0
  %3546 = vmatpush.msra.mxu0 0.0
  %3547 = vmatpush.msra.mxu0 0.0
  %3548 = vmatpush.msra.mxu0 0.0
  %3549 = vmatpush.msra.mxu0 0.0
  %3550 = vmatpush.msra.mxu0 0.0
  %3551 = vmatpush.msra.mxu0 0.0
  %3552 = vmatpush.msra.mxu0 0.0
  %3553 = vmatpush.msra.mxu0 0.0
  %3554 = vmatpush.msra.mxu0 0.0
  %3555 = vmatpush.msra.mxu0 0.0
  %3556 = vmatpush.msra.mxu0 0.0
  %3557 = vmatpush.msra.mxu0 0.0
  %3558 = vmatpush.msra.mxu0 0.0
  %3559 = vmatpush.msra.mxu0 0.0
  %3560 = vmatpush.msra.mxu0 0.0
  %3561 = vmatpush.msra.mxu0 %v3484
  %3562 = vmatmul.f32.gmra.mxu0 %v3472
  %v3563 = vpop.f32.mrf.mxu0
  %v3564 = vadd.f32 0.0, %v3563
  %3565 = vdwg.mxu0
  %v3566 = vadd.f32 %v3427, %v3504
  %v3567 = vadd.f32 %v3428, %v3524
  %v3568 = vadd.f32 %v3429, %v3544
  %v3569 = vadd.f32 %v3430, %v3564
  %v3570 = vld [vmem:[#allocation2 + $0x4] sm:$0xff]
  %v3571 = vld [vmem:[#allocation2 + $0xc] sm:$0xff]
  %v3572 = vld [vmem:[#allocation2 + $0x14] sm:$0xf]
  %3576 = vst [vmem:[#allocation1] ss:$2 sm:$0xff] %v3570
  %s3577 = scalar_lea.vmem [#allocation1], 16
  %3578 = vst [vmem:[%s3577] ss:$2 sm:$0xff] %v3571
  %s3579 = scalar_lea.vmem [#allocation1], 32
  %3580 = vst [vmem:[%s3579] ss:$2 sm:$0xff] %v3572
  %v3581 = vld.sshfl [vmem:[#allocation1] sm:$0xff pattern:$0x75316420]
  %v3582 = vld.sshfl [vmem:[#allocation1 + $0x8] sm:$0xff pattern:$0x75316420]
  %v3583 = vld.sshfl [vmem:[#allocation1 + $0x10] sm:$0xff pattern:$0x75316420]
  %v3584 = vld.sshfl [vmem:[#allocation1 + $0x18] sm:$0xff pattern:$0x75316420]
  %v3585 = vld.sshfl [vmem:[#allocation1 + $0x20] sm:$0xff pattern:$0x75316420]
  %3586 = vrot.lane.b32.xlu0 %v3581, 112
  %v3587 = vpop.permute.xlu0 %3586
  %3588 = vrot.lane.b32.xlu0 %v3582, 112
  %v3589 = vpop.permute.xlu0 %3588
  %3590 = vrot.lane.b32.xlu0 %v3583, 112
  %v3591 = vpop.permute.xlu0 %3590
  %3592 = vrot.lane.b32.xlu0 %v3584, 112
  %v3593 = vpop.permute.xlu0 %3592
  %3594 = vrot.lane.b32.xlu0 %v3585, 112
  %v3595 = vpop.permute.xlu0 %3594
  %v3596 = vsel %vm1121, %v3587, %v3589
  %v3597 = vsel %vm1121, %v3589, %v3591
  %v3598 = vsel %vm1121, %v3591, %v3593
  %v3599 = vsel %vm1121, %v3593, %v3595
  %v3604 = vsel %vm122, %v3596, 0.0
  %v3605 = vsel %vm123, %v3597, 0.0
  %v3606 = vsel %vm124, %v3598, 0.0
  %v3607 = vsel %vm125, %v3599, 0.0
  %s3608 = scalar_lea.vmem %s1, 100
  %v3609 = vld [vmem:[%s3608] sm:$0xf]
  %v3611 = vsel %vm235, %v3609, 0
  %v3614 = vsel %vm239, %v3604, 0
  %v3617 = vsel %vm239, %v3605, 0
  %v3620 = vsel %vm239, %v3606, 0
  %v3623 = vsel %vm239, %v3607, 0
  %3625 = vmatpush.msra.mxu0 0.0
  %3626 = vmatpush.msra.mxu0 0.0
  %3627 = vmatpush.msra.mxu0 0.0
  %3628 = vmatpush.msra.mxu0 0.0
  %3629 = vmatpush.msra.mxu0 0.0
  %3630 = vmatpush.msra.mxu0 0.0
  %3631 = vmatpush.msra.mxu0 0.0
  %3632 = vmatpush.msra.mxu0 0.0
  %3633 = vmatpush.msra.mxu0 0.0
  %3634 = vmatpush.msra.mxu0 0.0
  %3635 = vmatpush.msra.mxu0 0.0
  %3636 = vmatpush.msra.mxu0 0.0
  %3637 = vmatpush.msra.mxu0 0.0
  %3638 = vmatpush.msra.mxu0 0.0
  %3639 = vmatpush.msra.mxu0 0.0
  %3640 = vmatpush.msra.mxu0 %v3614
  %3641 = vmatmul.f32.gmra.mxu0 %v3611
  %v3642 = vpop.f32.mrf.mxu0
  %v3643 = vadd.f32 0.0, %v3642
  %3644 = vdwg.mxu0
  %3645 = vmatpush.msra.mxu0 0.0
  %3646 = vmatpush.msra.mxu0 0.0
  %3647 = vmatpush.msra.mxu0 0.0
  %3648 = vmatpush.msra.mxu0 0.0
  %3649 = vmatpush.msra.mxu0 0.0
  %3650 = vmatpush.msra.mxu0 0.0
  %3651 = vmatpush.msra.mxu0 0.0
  %3652 = vmatpush.msra.mxu0 0.0
  %3653 = vmatpush.msra.mxu0 0.0
  %3654 = vmatpush.msra.mxu0 0.0
  %3655 = vmatpush.msra.mxu0 0.0
  %3656 = vmatpush.msra.mxu0 0.0
  %3657 = vmatpush.msra.mxu0 0.0
  %3658 = vmatpush.msra.mxu0 0.0
  %3659 = vmatpush.msra.mxu0 0.0
  %3660 = vmatpush.msra.mxu0 %v3617
  %3661 = vmatmul.f32.gmra.mxu0 %v3611
  %v3662 = vpop.f32.mrf.mxu0
  %v3663 = vadd.f32 0.0, %v3662
  %3664 = vdwg.mxu0
  %3665 = vmatpush.msra.mxu0 0.0
  %3666 = vmatpush.msra.mxu0 0.0
  %3667 = vmatpush.msra.mxu0 0.0
  %3668 = vmatpush.msra.mxu0 0.0
  %3669 = vmatpush.msra.mxu0 0.0
  %3670 = vmatpush.msra.mxu0 0.0
  %3671 = vmatpush.msra.mxu0 0.0
  %3672 = vmatpush.msra.mxu0 0.0
  %3673 = vmatpush.msra.mxu0 0.0
  %3674 = vmatpush.msra.mxu0 0.0
  %3675 = vmatpush.msra.mxu0 0.0
  %3676 = vmatpush.msra.mxu0 0.0
  %3677 = vmatpush.msra.mxu0 0.0
  %3678 = vmatpush.msra.mxu0 0.0
  %3679 = vmatpush.msra.mxu0 0.0
  %3680 = vmatpush.msra.mxu0 %v3620
  %3681 = vmatmul.f32.gmra.mxu0 %v3611
  %v3682 = vpop.f32.mrf.mxu0
  %v3683 = vadd.f32 0.0, %v3682
  %3684 = vdwg.mxu0
  %3685 = vmatpush.msra.mxu0 0.0
  %3686 = vmatpush.msra.mxu0 0.0
  %3687 = vmatpush.msra.mxu0 0.0
  %3688 = vmatpush.msra.mxu0 0.0
  %3689 = vmatpush.msra.mxu0 0.0
  %3690 = vmatpush.msra.mxu0 0.0
  %3691 = vmatpush.msra.mxu0 0.0
  %3692 = vmatpush.msra.mxu0 0.0
  %3693 = vmatpush.msra.mxu0 0.0
  %3694 = vmatpush.msra.mxu0 0.0
  %3695 = vmatpush.msra.mxu0 0.0
  %3696 = vmatpush.msra.mxu0 0.0
  %3697 = vmatpush.msra.mxu0 0.0
  %3698 = vmatpush.msra.mxu0 0.0
  %3699 = vmatpush.msra.mxu0 0.0
  %3700 = vmatpush.msra.mxu0 %v3623
  %3701 = vmatmul.f32.gmra.mxu0 %v3611
  %v3702 = vpop.f32.mrf.mxu0
  %v3703 = vadd.f32 0.0, %v3702
  %3704 = vdwg.mxu0
  %v3705 = vadd.f32 %v3566, %v3643
  %v3706 = vadd.f32 %v3567, %v3663
  %v3707 = vadd.f32 %v3568, %v3683
  %v3708 = vadd.f32 %v3569, %v3703
  %v3709 = vld [vmem:[#allocation2 + $0x4] sm:$0xff]
  %v3710 = vld [vmem:[#allocation2 + $0xc] sm:$0xff]
  %v3711 = vld [vmem:[#allocation2 + $0x14] sm:$0xf]
  %3715 = vst [vmem:[#allocation1] ss:$2 sm:$0xff] %v3709
  %s3716 = scalar_lea.vmem [#allocation1], 16
  %3717 = vst [vmem:[%s3716] ss:$2 sm:$0xff] %v3710
  %s3718 = scalar_lea.vmem [#allocation1], 32
  %3719 = vst [vmem:[%s3718] ss:$2 sm:$0xff] %v3711
  %v3720 = vld.sshfl [vmem:[#allocation1] sm:$0xff pattern:$0x75316420]
  %v3721 = vld.sshfl [vmem:[#allocation1 + $0x8] sm:$0xff pattern:$0x75316420]
  %v3722 = vld.sshfl [vmem:[#allocation1 + $0x10] sm:$0xff pattern:$0x75316420]
  %v3723 = vld.sshfl [vmem:[#allocation1 + $0x18] sm:$0xff pattern:$0x75316420]
  %v3724 = vld.sshfl [vmem:[#allocation1 + $0x20] sm:$0xff pattern:$0x75316420]
  %3725 = vrot.lane.b32.xlu0 %v3720, 111
  %v3726 = vpop.permute.xlu0 %3725
  %3727 = vrot.lane.b32.xlu0 %v3721, 111
  %v3728 = vpop.permute.xlu0 %3727
  %3729 = vrot.lane.b32.xlu0 %v3722, 111
  %v3730 = vpop.permute.xlu0 %3729
  %3731 = vrot.lane.b32.xlu0 %v3723, 111
  %v3732 = vpop.permute.xlu0 %3731
  %3733 = vrot.lane.b32.xlu0 %v3724, 111
  %v3734 = vpop.permute.xlu0 %3733
  %v3735 = vsel %vm1261, %v3726, %v3728
  %v3736 = vsel %vm1261, %v3728, %v3730
  %v3737 = vsel %vm1261, %v3730, %v3732
  %v3738 = vsel %vm1261, %v3732, %v3734
  %v3743 = vsel %vm146, %v3735, 0.0
  %v3744 = vsel %vm147, %v3736, 0.0
  %v3745 = vsel %vm148, %v3737, 0.0
  %v3746 = vsel %vm149, %v3738, 0.0
  %s3747 = scalar_lea.vmem %s1, 104
  %v3748 = vld [vmem:[%s3747] sm:$0xf]
  %v3750 = vsel %vm235, %v3748, 0
  %v3753 = vsel %vm239, %v3743, 0
  %v3756 = vsel %vm239, %v3744, 0
  %v3759 = vsel %vm239, %v3745, 0
  %v3762 = vsel %vm239, %v3746, 0
  %3764 = vmatpush.msra.mxu0 0.0
  %3765 = vmatpush.msra.mxu0 0.0
  %3766 = vmatpush.msra.mxu0 0.0
  %3767 = vmatpush.msra.mxu0 0.0
  %3768 = vmatpush.msra.mxu0 0.0
  %3769 = vmatpush.msra.mxu0 0.0
  %3770 = vmatpush.msra.mxu0 0.0
  %3771 = vmatpush.msra.mxu0 0.0
  %3772 = vmatpush.msra.mxu0 0.0
  %3773 = vmatpush.msra.mxu0 0.0
  %3774 = vmatpush.msra.mxu0 0.0
  %3775 = vmatpush.msra.mxu0 0.0
  %3776 = vmatpush.msra.mxu0 0.0
  %3777 = vmatpush.msra.mxu0 0.0
  %3778 = vmatpush.msra.mxu0 0.0
  %3779 = vmatpush.msra.mxu0 %v3753
  %3780 = vmatmul.f32.gmra.mxu0 %v3750
  %v3781 = vpop.f32.mrf.mxu0
  %v3782 = vadd.f32 0.0, %v3781
  %3783 = vdwg.mxu0
  %3784 = vmatpush.msra.mxu0 0.0
  %3785 = vmatpush.msra.mxu0 0.0
  %3786 = vmatpush.msra.mxu0 0.0
  %3787 = vmatpush.msra.mxu0 0.0
  %3788 = vmatpush.msra.mxu0 0.0
  %3789 = vmatpush.msra.mxu0 0.0
  %3790 = vmatpush.msra.mxu0 0.0
  %3791 = vmatpush.msra.mxu0 0.0
  %3792 = vmatpush.msra.mxu0 0.0
  %3793 = vmatpush.msra.mxu0 0.0
  %3794 = vmatpush.msra.mxu0 0.0
  %3795 = vmatpush.msra.mxu0 0.0
  %3796 = vmatpush.msra.mxu0 0.0
  %3797 = vmatpush.msra.mxu0 0.0
  %3798 = vmatpush.msra.mxu0 0.0
  %3799 = vmatpush.msra.mxu0 %v3756
  %3800 = vmatmul.f32.gmra.mxu0 %v3750
  %v3801 = vpop.f32.mrf.mxu0
  %v3802 = vadd.f32 0.0, %v3801
  %3803 = vdwg.mxu0
  %3804 = vmatpush.msra.mxu0 0.0
  %3805 = vmatpush.msra.mxu0 0.0
  %3806 = vmatpush.msra.mxu0 0.0
  %3807 = vmatpush.msra.mxu0 0.0
  %3808 = vmatpush.msra.mxu0 0.0
  %3809 = vmatpush.msra.mxu0 0.0
  %3810 = vmatpush.msra.mxu0 0.0
  %3811 = vmatpush.msra.mxu0 0.0
  %3812 = vmatpush.msra.mxu0 0.0
  %3813 = vmatpush.msra.mxu0 0.0
  %3814 = vmatpush.msra.mxu0 0.0
  %3815 = vmatpush.msra.mxu0 0.0
  %3816 = vmatpush.msra.mxu0 0.0
  %3817 = vmatpush.msra.mxu0 0.0
  %3818 = vmatpush.msra.mxu0 0.0
  %3819 = vmatpush.msra.mxu0 %v3759
  %3820 = vmatmul.f32.gmra.mxu0 %v3750
  %v3821 = vpop.f32.mrf.mxu0
  %v3822 = vadd.f32 0.0, %v3821
  %3823 = vdwg.mxu0
  %3824 = vmatpush.msra.mxu0 0.0
  %3825 = vmatpush.msra.mxu0 0.0
  %3826 = vmatpush.msra.mxu0 0.0
  %3827 = vmatpush.msra.mxu0 0.0
  %3828 = vmatpush.msra.mxu0 0.0
  %3829 = vmatpush.msra.mxu0 0.0
  %3830 = vmatpush.msra.mxu0 0.0
  %3831 = vmatpush.msra.mxu0 0.0
  %3832 = vmatpush.msra.mxu0 0.0
  %3833 = vmatpush.msra.mxu0 0.0
  %3834 = vmatpush.msra.mxu0 0.0
  %3835 = vmatpush.msra.mxu0 0.0
  %3836 = vmatpush.msra.mxu0 0.0
  %3837 = vmatpush.msra.mxu0 0.0
  %3838 = vmatpush.msra.mxu0 0.0
  %3839 = vmatpush.msra.mxu0 %v3762
  %3840 = vmatmul.f32.gmra.mxu0 %v3750
  %v3841 = vpop.f32.mrf.mxu0
  %v3842 = vadd.f32 0.0, %v3841
  %3843 = vdwg.mxu0
  %v3844 = vadd.f32 %v3705, %v3782
  %v3845 = vadd.f32 %v3706, %v3802
  %v3846 = vadd.f32 %v3707, %v3822
  %v3847 = vadd.f32 %v3708, %v3842
  %s3848 = scalar_lea.vmem %s2, 8
  %v3849 = vld [vmem:[%s3848] sm:$0xf]
  %3851 = vset.pattern.permute.xlu0 0
  %3852 = vperm.xlu0 %3851, %v3849
  %v3853 = vpop.permute.xlu0 %3852
  %v3855 = vadd.f32 %v3844, %v3853
  %v3856 = vadd.f32 %v3845, %v3853
  %v3857 = vadd.f32 %v3846, %v3853
  %v3858 = vadd.f32 %v3847, %v3853
  %v3859 = vmax.f32 %v3855, 0.0
  %v3860 = vmax.f32 %v3856, 0.0
  %v3861 = vmax.f32 %v3857, 0.0
  %v3862 = vmax.f32 %v3858, 0.0
  %v3867 = vrot.slane %v3860, 4
  %v3868 = vrot.slane %v3862, 4
  %v3869 = vsel %vm239, %v3859, %v3867
  %v3870 = vsel %vm239, %v3861, %v3868
  %3873 = vst [vmem:[%s3] sm:$0xff] %v3869
  %3874 = vst [vmem:[%s3 + $0x8] sm:$0xff] %v3870
  // Predicated region
  $region14: #{model_forward.1} parent=0 // pred_check
    _
  $region15: #{model_forward.1} parent=0 // pred_check_branch
    %3876 = sbr.rel (0) target = $region17
  $region16: #{model_forward.1} parent=0 // pred_region
    _
  $region17: #{model_forward.1} parent=0 // pred_fallthru
    _
  // Predicated region
  $region18: #{model_forward.1} parent=0 // pred_check
    _
  $region19: #{model_forward.1} parent=0 // pred_check_branch
    %3878 = sbr.rel (0) target = $region21
  $region20: #{model_forward.1} parent=0 // pred_region
    _
  $region21: #{model_forward.1} parent=0 // pred_fallthru
    _

</llo_original>
